<compile_context>
chip_gen: v6e
topology: v6e:2x2x1
jax: 0.10.0
libtpu: 0.0.40
codegen_flags: <defaults>
</compile_context>

<pallas_src>
import jax
import jax.numpy as jnp
import numpy as np
from jax import lax
from jax.experimental import pallas as pl
from jax.experimental.pallas import tpu as pltpu


MATMUL_DTYPE = jnp.bfloat16   # MXU-native operand dtype (accumulation stays f32)


# ----------------------------------------------------------------------------
# Fused Pallas kernel
# ----------------------------------------------------------------------------
def make_emotion_rnn_kernel(num_layers, T, Bc, H, unroll):
    G2 = 8 * H   # packed gate columns (both directions)

    def kernel(*refs):
        emb_ref = refs[0]                                   # (T, Bc, E)
        layer_refs = refs[1:1 + 3 * num_layers]             # per layer: wih, whh, b
        fcw_ref = refs[1 + 3 * num_layers]                  # (2H, O) f32
        fcb_ref = refs[2 + 3 * num_layers]                  # (1, O)  f32
        out_ref = refs[3 + 3 * num_layers]                  # (Bc, O) f32
        xp_ref, of_ref, ob_ref = refs[4 + 3 * num_layers:]  # VMEM scratch

        # Packed column j is a FWD column iff (j % 2H) < H (ordering
        # [iF,iB,fF,fB,oF,oB,gF,gB]).  Hoisted out of the recurrence loop
        # (JAX does not CSE broadcasts).
        fwd_mask = (lax.broadcasted_iota(jnp.int32, (1, G2), 1) % (2 * H)) < H

        h = jnp.zeros((Bc, 2 * H), jnp.float32)
        for l in range(num_layers):
            wih_ref, whh_ref, b_ref = layer_refs[3 * l:3 * l + 3]

            # ---- hoisted non-recurrent projection: one big bf16 matmul per layer ----
            if l == 0:
                x2d = emb_ref[...].reshape(T * Bc, -1).astype(MATMUL_DTYPE)
                xp = jnp.dot(x2d, wih_ref[...],
                             preferred_element_type=jnp.float32)          # (T*Bc, 8H)
            else:
                # x = [fwd_seq | bwd_seq] along features -> split-K, no concat copy.
                w = wih_ref[...]                                          # (2H, 8H) bf16
                xp = (jnp.dot(of_ref[...].reshape(T * Bc, H).astype(MATMUL_DTYPE),
                              w[:H, :], preferred_element_type=jnp.float32)
                      + jnp.dot(ob_ref[...].reshape(T * Bc, H).astype(MATMUL_DTYPE),
                                w[H:, :], preferred_element_type=jnp.float32))
            xp_ref[...] = (xp + b_ref[...]).reshape(T, Bc, G2)            # bias folded

            whh = whh_ref[...]                   # (2H, 8H) bf16, block-diagonal packed
            write_seq = l < num_layers - 1       # last layer: only final hiddens needed
            # TODO(synk): on v7x, keep whh resident in MXU weight regs across the loop
            # via pltpu.matmul_push_rhs/matmul_acc_lhs/matmul_pop.

            def step(t, carry, whh=whh, write_seq=write_seq):
                h, c = carry                                  # (Bc, 2H) f32 each
                # Only matmul on the serial critical path: (Bc,2H)@(2H,8H), bf16 MXU.
                hh = jnp.dot(h.astype(MATMUL_DTYPE), whh,
                             preferred_element_type=jnp.float32)          # (Bc, 8H)
                # fwd gate columns take x_t, bwd gate columns take x_{T-1-t}.
                xpt = jnp.where(fwd_mask, xp_ref[t], xp_ref[T - 1 - t])
                pre = hh + xpt
                sig = jax.nn.sigmoid(pre[:, :6 * H])          # [iF,iB,fF,fB,oF,oB]
                g = jnp.tanh(pre[:, 6 * H:])                  # [gF,gB]
                i_g = sig[:, 0:2 * H]
                f_g = sig[:, 2 * H:4 * H]
                o_g = sig[:, 4 * H:6 * H]
                c = f_g * c + i_g * g                          # combined (Bc, 2H)
                h = o_g * jnp.tanh(c)
                if write_seq:
                    of_ref[t] = h[:, :H]                       # fwd hidden at time t
                    ob_ref[T - 1 - t] = h[:, H:]               # bwd hidden, final slot
                return h, c

            z = jnp.zeros((Bc, 2 * H), jnp.float32)
            h, _ = lax.fori_loop(0, T, step, (z, z), unroll=unroll)

        # FC epilogue fused into the same kernel.
        # h == [h_f_final | h_b_final] == torch.cat((hidden[-2], hidden[-1]), dim=1).
        out_ref[...] = (jnp.dot(h, fcw_ref[...],
                                preferred_element_type=jnp.float32) + fcb_ref[...])

    return kernel


def emotion_rnn_forward(text, params, *, batch_chunks=None, unroll=None):
    """text: (B, T) int32 token ids -> logits (B, output_dim)."""
    # Embedding gather stays in JAX glue (data-dependent gather).  Indexing the
    # (tiny) transposed id matrix yields time-major output directly, so the large
    # (B,T,E) activation is never transposed / round-tripped through HBM.
    # TODO(synk): dropout is identity (inference mode); no RNG mask applied.
    emb = params["embedding"][text.T]                        # (T, B, E) f32
    T, B, E = emb.shape
    num_layers = len(params["lstm"])
    H = params["lstm"][0]["whh"].shape[0] // 2
    O = params["fc_w"].shape[1]

    # Batch-chunk grid axis ("parallel"): v7x shards chunks across its 2 TensorCores.
    # Chunks only when each chunk keeps a sublane-aligned batch (multiple of 8).
    if batch_chunks is None:
        batch_chunks = 2 if (B % 2 == 0 and (B // 2) % 8 == 0) else 1
    assert B % batch_chunks == 0
    Bc = B // batch_chunks

    if unroll is None:
        unroll = T if T <= 16 else 4      # small static T -> fully unroll recurrence

    inputs = [emb]
    in_specs = [pl.BlockSpec((T, Bc, E), lambda i: (0, i, 0))]
    for layer in params["lstm"]:
        for name in ("wih", "whh", "b"):
            w = layer[name]
            inputs.append(w)
            in_specs.append(pl.BlockSpec(w.shape, lambda i: (0, 0)))
    for name in ("fc_w", "fc_b"):
        w = params[name]
        inputs.append(w)
        in_specs.append(pl.BlockSpec(w.shape, lambda i: (0, 0)))

    scratch_shapes = [
        pltpu.VMEM((T, Bc, 8 * H), jnp.float32),   # hoisted gate pre-activations
        pltpu.VMEM((T, Bc, H), jnp.float32),       # fwd hidden sequence
        pltpu.VMEM((T, Bc, H), jnp.float32),       # bwd hidden sequence (un-flipped)
    ]

    # Explicit VMEM budget (defaults are 16/32 MiB scoped; v7x physical is 64 MiB).
    est = sum(a.size * a.dtype.itemsize for a in inputs)
    est += (T * Bc * 8 * H + 2 * T * Bc * H) * 4 + B * O * 4
    vmem_limit = int(min(max(4 * est, 16 * 2**20), 64 * 2**20))
    # TODO(synk): for production shapes (e.g. T=256, B=32, H=512) the resident xp/emb
    # buffers must be time-chunked (pltpu.emit_pipeline / pl.Buffered) to fit v7x VMEM.

    kernel = make_emotion_rnn_kernel(num_layers, T, Bc, H, unroll)
    return pl.pallas_call(
        kernel,
        grid=(batch_chunks,),
        out_shape=jax.ShapeDtypeStruct((B, O), jnp.float32),
        in_specs=in_specs,
        out_specs=pl.BlockSpec((Bc, O), lambda i: (i, 0)),
        scratch_shapes=scratch_shapes,
        compiler_params=pltpu.CompilerParams(
            dimension_semantics=("parallel",),
            vmem_limit_bytes=vmem_limit,
        ),
    )(*inputs)


# ----------------------------------------------------------------------------
# Parameter init: raw per-direction weights (reference) + packed kernel weights
# ----------------------------------------------------------------------------
def _split_gates(w, H):
    return w[..., 0:H], w[..., H:2 * H], w[..., 2 * H:3 * H], w[..., 3 * H:4 * H]


def _pack_layer(raw_fwd, raw_bwd, H):
    """Pack fwd/bwd weights once at init.

    Packed gate-column order (8H): [iF, iB, fF, fB, oF, oB, gF, gB]
      * sigmoid gates contiguous (first 6H), tanh gates contiguous (last 2H)
      * fwd/bwd interleave per gate -> combined (B,2H) c/h updates are contiguous.
    whh is block-diagonal (2H, 8H): [h_f|h_b] @ whh yields exactly the needed
    products (no wasted cross-direction half).  Matmul weights stored in bf16.
    """
    wih_f, whh_f, b_f = raw_fwd
    wih_b, whh_b, b_b = raw_bwd

    iF, fF, gF, oF = _split_gates(wih_f, H)
    iB, fB, gB, oB = _split_gates(wih_b, H)
    wih = jnp.concatenate([iF, iB, fF, fB, oF, oB, gF, gB], axis=1)       # (D, 8H)

    hiF, hfF, hgF, hoF = _split_gates(whh_f, H)
    hiB, hfB, hgB, hoB = _split_gates(whh_b, H)
    z = jnp.zeros((H, H), jnp.float32)
    top = jnp.concatenate([hiF, z, hfF, z, hoF, z, hgF, z], axis=1)       # h_f rows
    bot = jnp.concatenate([z, hiB, z, hfB, z, hoB, z, hgB], axis=1)       # h_b rows
    whh = jnp.concatenate([top, bot], axis=0)                             # (2H, 8H)

    biF, bfF, bgF, boF = _split_gates(b_f, H)
    biB, bfB, bgB, boB = _split_gates(b_b, H)
    b = jnp.concatenate([biF, biB, bfF, bfB, boF, boB, bgF, bgB], axis=1)  # (1, 8H)

    return {"wih": wih.astype(MATMUL_DTYPE),
            "whh": whh.astype(MATMUL_DTYPE),
            "b": b.astype(jnp.float32)}


def init_params(key, vocab_size, embedding_dim, hidden_dim, output_dim, num_layers):
    keys = jax.random.split(key, 3 + num_layers * 8)   # 1 emb + 8/layer + 2 fc
    k_iter = iter(keys)
    params = {"embedding": jax.random.normal(
        next(k_iter), (vocab_size, embedding_dim), jnp.float32)}

    bound = 1.0 / np.sqrt(hidden_dim)
    raw_layers, packed_layers = [], []
    for l in range(num_layers):
        in_dim = embedding_dim if l == 0 else 2 * hidden_dim
        raw = {}
        for direction in ("fwd", "bwd"):
            wih = jax.random.uniform(next(k_iter), (in_dim, 4 * hidden_dim),
                                     jnp.float32, -bound, bound)
            whh = jax.random.uniform(next(k_iter), (hidden_dim, 4 * hidden_dim),
                                     jnp.float32, -bound, bound)
            b_ih = jax.random.uniform(next(k_iter), (4 * hidden_dim,),
                                      jnp.float32, -bound, bound)
            b_hh = jax.random.uniform(next(k_iter), (4 * hidden_dim,),
                                      jnp.float32, -bound, bound)
            raw[direction] = (wih, whh, (b_ih + b_hh).reshape(1, -1))
        raw_layers.append(raw)
        packed_layers.append(_pack_layer(raw["fwd"], raw["bwd"], hidden_dim))
    params["lstm_raw"] = raw_layers
    params["lstm"] = packed_layers

    fc_bound = 1.0 / np.sqrt(2 * hidden_dim)
    params["fc_w"] = jax.random.uniform(next(k_iter), (2 * hidden_dim, output_dim),
                                        jnp.float32, -fc_bound, fc_bound)
    params["fc_b"] = jax.random.uniform(next(k_iter), (1, output_dim),
                                        jnp.float32, -fc_bound, fc_bound)
    return params


# ----------------------------------------------------------------------------
# Pure-JAX f32 reference (for numerical validation)
# ----------------------------------------------------------------------------
def _lstm_dir_ref(x, wih, whh, b):
    H = whh.shape[0]
    B = x.shape[1]

    def step(carry, xt):
        h, c = carry
        gates = xt @ wih + h @ whh + b
        i = jax.nn.sigmoid(gates[:, :H])
        f = jax.nn.sigmoid(gates[:, H:2 * H])
        g = jnp.tanh(gates[:, 2 * H:3 * H])
        o = jax.nn.sigmoid(gates[:, 3 * H:])
        c = f * c + i * g
        h = o * jnp.tanh(c)
        return (h, c), h

    (h, _), ys = lax.scan(step, (jnp.zeros((B, H)), jnp.zeros((B, H))), x)
    return ys, h


def emotion_rnn_ref(text, params):
    emb = params["embedding"][text]
    x = jnp.transpose(emb, (1, 0, 2))
    h_f = h_b = None
    for layer in params["lstm_raw"]:
        wih_f, whh_f, b_f = layer["fwd"]
        wih_b, whh_b, b_b = layer["bwd"]
        out_f, h_f = _lstm_dir_ref(x, wih_f, whh_f, b_f)
        out_b_rev, h_b = _lstm_dir_ref(jnp.flip(x, axis=0), wih_b, whh_b, b_b)
        x = jnp.concatenate([out_f, jnp.flip(out_b_rev, axis=0)], axis=-1)
    hidden = jnp.concatenate([h_f, h_b], axis=-1)
    return hidden @ params["fc_w"] + params["fc_b"]


# ----------------------------------------------------------------------------
if __name__ == "__main__":
    vocab_size, embedding_dim, hidden_dim, output_dim = 100, 16, 32, 6
    num_layers = 2            # dropout unused at inference
    batch, seq_len = 2, 8

    key = jax.random.PRNGKey(0)
    k_params, k_text = jax.random.split(key)
    params = init_params(k_params, vocab_size, embedding_dim, hidden_dim,
                         output_dim, num_layers)
    text = jax.random.randint(k_text, (batch, seq_len), 0, vocab_size,
                              dtype=jnp.int32)

    logits = jax.block_until_ready(emotion_rnn_forward(text, params))
    ref = jax.block_until_ready(emotion_rnn_ref(text, params))

    # bf16 MXU operands (f32 accumulation) -> relaxed tolerance vs the f32 reference.
    np.testing.assert_allclose(np.asarray(logits), np.asarray(ref),
                               rtol=5e-2, atol=5e-2)
    assert logits.shape == (batch, output_dim)

    print("KERNEL_OK")
</pallas_src>

<mosaic_0001>
module attributes {stable_mosaic.version = 11 : i64} {
  func.func @kernel(%arg0: i32, %arg1: memref<8x2x16xf32, #tpu.memory_space<vmem>>, %arg2: memref<16x256xbf16, #tpu.memory_space<vmem>>, %arg3: memref<64x256xbf16, #tpu.memory_space<vmem>>, %arg4: memref<1x256xf32, #tpu.memory_space<vmem>>, %arg5: memref<64x256xbf16, #tpu.memory_space<vmem>>, %arg6: memref<64x256xbf16, #tpu.memory_space<vmem>>, %arg7: memref<1x256xf32, #tpu.memory_space<vmem>>, %arg8: memref<64x6xf32, #tpu.memory_space<vmem>>, %arg9: memref<1x6xf32, #tpu.memory_space<vmem>>, %arg10: memref<2x6xf32, #tpu.memory_space<vmem>>, %arg11: memref<8x2x256xf32, #tpu.memory_space<vmem>>, %arg12: memref<8x2x32xf32, #tpu.memory_space<vmem>>, %arg13: memref<8x2x32xf32, #tpu.memory_space<vmem>>) attributes {dimension_semantics = [#tpu.dimension_semantics<parallel>], iteration_bounds = array<i64: 1>, scalar_prefetch = 0 : i64, scratch_operands = 3 : i64, tpu.core_type = #tpu.core_type<tc>, window_params = [{transform_indices = @transform_0, window_bounds = array<i64: 8, 2, 16>}, {pipeline_mode = #tpu.pipeline_mode<synchronous>, transform_indices = @transform_1, window_bounds = array<i64: 16, 256>}, {pipeline_mode = #tpu.pipeline_mode<synchronous>, transform_indices = @transform_2, window_bounds = array<i64: 64, 256>}, {pipeline_mode = #tpu.pipeline_mode<synchronous>, transform_indices = @transform_3, window_bounds = array<i64: 1, 256>}, {pipeline_mode = #tpu.pipeline_mode<synchronous>, transform_indices = @transform_4, window_bounds = array<i64: 64, 256>}, {pipeline_mode = #tpu.pipeline_mode<synchronous>, transform_indices = @transform_5, window_bounds = array<i64: 64, 256>}, {pipeline_mode = #tpu.pipeline_mode<synchronous>, transform_indices = @transform_6, window_bounds = array<i64: 1, 256>}, {pipeline_mode = #tpu.pipeline_mode<synchronous>, transform_indices = @transform_7, window_bounds = array<i64: 64, 6>}, {pipeline_mode = #tpu.pipeline_mode<synchronous>, transform_indices = @transform_8, window_bounds = array<i64: 1, 6>}, {transform_indices = @transform_9, window_bounds = array<i64: 2, 6>}]} {
    %0 = tpu.iota {dimensions = array<i32: 1>} : vector<1x256xi32>
    %c64_i32 = arith.constant 64 : i32
    %c0_i32 = arith.constant 0 : i32
    %1 = arith.cmpi eq, %c64_i32, %c0_i32 : i32
    %c1_i32 = arith.constant 1 : i32
    %2 = arith.select %1, %c1_i32, %c64_i32 : i32
    %3 = vector.broadcast %2 : i32 to vector<1x256xi32>
    %4 = arith.remsi %0, %3 : vector<1x256xi32>
    %c0_i32_0 = arith.constant 0 : i32
    %5 = vector.broadcast %c0_i32_0 : i32 to vector<1x256xi32>
    %6 = arith.cmpi ne, %4, %5 : vector<1x256xi32>
    %c0_i32_1 = arith.constant 0 : i32
    %7 = vector.broadcast %c0_i32_1 : i32 to vector<1x256xi32>
    %8 = arith.cmpi slt, %4, %7 : vector<1x256xi32>
    %c0_i32_2 = arith.constant 0 : i32
    %9 = arith.cmpi slt, %2, %c0_i32_2 : i32
    %10 = vector.broadcast %9 : i1 to vector<1x256xi1>
    %11 = vector.broadcast %10 : vector<1x256xi1> to vector<1x256xi1>
    %12 = arith.xori %8, %11 : vector<1x256xi1>
    %13 = arith.andi %12, %6 : vector<1x256xi1>
    %14 = vector.broadcast %2 : i32 to vector<1x256xi32>
    %15 = arith.addi %4, %14 : vector<1x256xi32>
    %16 = arith.select %13, %15, %4 : vector<1x256xi1>, vector<1x256xi32>
    %c32_i32 = arith.constant 32 : i32
    %17 = vector.broadcast %c32_i32 : i32 to vector<1x256xi32>
    %18 = arith.cmpi slt, %16, %17 : vector<1x256xi32>
    %c0 = arith.constant 0 : index
    %c0_3 = arith.constant 0 : index
    %c0_4 = arith.constant 0 : index
    %19 = vector.load %arg1[%c0, %c0_3, %c0_4] : memref<8x2x16xf32, #tpu.memory_space<vmem>>, vector<8x2x16xf32>
    %20 = vector.shape_cast %19 : vector<8x2x16xf32> to vector<16x16xf32>
    %21 = arith.truncf %20 : vector<16x16xf32> to vector<16x16xbf16>
    %c0_5 = arith.constant 0 : index
    %c0_6 = arith.constant 0 : index
    %22 = vector.load %arg2[%c0_5, %c0_6] : memref<16x256xbf16, #tpu.memory_space<vmem>>, vector<16x256xbf16>
    %cst = arith.constant dense<0.000000e+00> : vector<16x256xf32>
    %23 = tpu.matmul %21, %22, %cst {dimension_numbers = #tpu.dot_dimension_numbers<[1], [0], [0], [1], [0, 0, 1, 1], [], []>} : vector<16x16xbf16>, vector<16x256xbf16>, vector<16x256xf32> -> vector<16x256xf32>
    %c0_7 = arith.constant 0 : index
    %c0_8 = arith.constant 0 : index
    %24 = vector.load %arg4[%c0_7, %c0_8] : memref<1x256xf32, #tpu.memory_space<vmem>>, vector<1x256xf32>
    %25 = vector.broadcast %24 : vector<1x256xf32> to vector<16x256xf32>
    %26 = arith.addf %23, %25 : vector<16x256xf32>
    %27 = vector.shape_cast %26 : vector<16x256xf32> to vector<8x2x256xf32>
    %c0_9 = arith.constant 0 : index
    %c0_10 = arith.constant 0 : index
    %c0_11 = arith.constant 0 : index
    %28 = vector.load %arg11[%c0_9, %c0_10, %c0_11] : memref<8x2x256xf32, #tpu.memory_space<vmem>>, vector<8x2x256xf32>
    tpu.vector_store %arg11[%c0_9, %c0_10, %c0_11], %27 {strides = array<i32>} : memref<8x2x256xf32, #tpu.memory_space<vmem>>, vector<8x2x256xf32>,
    %c0_12 = arith.constant 0 : index
    %c0_13 = arith.constant 0 : index
    %29 = vector.load %arg3[%c0_12, %c0_13] : memref<64x256xbf16, #tpu.memory_space<vmem>>, vector<64x256xbf16>
    %cst_14 = arith.constant 0.000000e+00 : f32
    %30 = vector.broadcast %cst_14 : f32 to vector<2x64xf32>
    %c0_i32_15 = arith.constant 0 : i32
    %31 = arith.truncf %30 : vector<2x64xf32> to vector<2x64xbf16>
    %cst_16 = arith.constant dense<0.000000e+00> : vector<2x256xf32>
    %32 = tpu.matmul %31, %29, %cst_16 {dimension_numbers = #tpu.dot_dimension_numbers<[1], [0], [0], [1], [0, 0, 1, 1], [], []>} : vector<2x64xbf16>, vector<64x256xbf16>, vector<2x256xf32> -> vector<2x256xf32>
    %33 = arith.index_cast %c0_i32_15 : i32 to index
    %c0_17 = arith.constant 0 : index
    %c0_18 = arith.constant 0 : index
    %34 = vector.load %arg11[%33, %c0_17, %c0_18] : memref<8x2x256xf32, #tpu.memory_space<vmem>>, vector<1x2x256xf32>
    %35 = vector.shape_cast %34 : vector<1x2x256xf32> to vector<2x256xf32>
    %c7_i32 = arith.constant 7 : i32
    %36 = arith.subi %c7_i32, %c0_i32_15 : i32
    %37 = arith.index_cast %36 : i32 to index
    %c0_19 = arith.constant 0 : index
    %c0_20 = arith.constant 0 : index
    %38 = vector.load %arg11[%37, %c0_19, %c0_20] : memref<8x2x256xf32, #tpu.memory_space<vmem>>, vector<1x2x256xf32>
    %39 = vector.shape_cast %38 : vector<1x2x256xf32> to vector<2x256xf32>
    %40 = vector.shape_cast %18 : vector<1x256xi1> to vector<1x256xi1>
    %41 = vector.broadcast %40 : vector<1x256xi1> to vector<2x256xi1>
    %42 = arith.select %41, %35, %39 : vector<2x256xi1>, vector<2x256xf32>
    %43 = arith.addf %32, %42 : vector<2x256xf32>
    %44 = vector.extract_strided_slice %43 {offsets = [0, 0], sizes = [2, 192], strides = [1, 1]} : vector<2x256xf32> to vector<2x192xf32>
    %45 = arith.negf %44 : vector<2x192xf32>
    %46 = math.exp %45 : vector<2x192xf32>
    %cst_21 = arith.constant 1.000000e+00 : f32
    %47 = vector.broadcast %cst_21 : f32 to vector<2x192xf32>
    %48 = arith.addf %47, %46 : vector<2x192xf32>
    %49 = arith.divf %47, %48 : vector<2x192xf32>
    %50 = vector.extract_strided_slice %43 {offsets = [0, 192], sizes = [2, 64], strides = [1, 1]} : vector<2x256xf32> to vector<2x64xf32>
    %51 = math.tanh %50 : vector<2x64xf32>
    %52 = vector.extract_strided_slice %49 {offsets = [0, 0], sizes = [2, 64], strides = [1, 1]} : vector<2x192xf32> to vector<2x64xf32>
    %53 = vector.extract_strided_slice %49 {offsets = [0, 64], sizes = [2, 64], strides = [1, 1]} : vector<2x192xf32> to vector<2x64xf32>
    %54 = vector.extract_strided_slice %49 {offsets = [0, 128], sizes = [2, 64], strides = [1, 1]} : vector<2x192xf32> to vector<2x64xf32>
    %55 = arith.mulf %53, %30 : vector<2x64xf32>
    %56 = arith.mulf %52, %51 : vector<2x64xf32>
    %57 = arith.addf %55, %56 : vector<2x64xf32>
    %58 = math.tanh %57 : vector<2x64xf32>
    %59 = arith.mulf %54, %58 : vector<2x64xf32>
    %60 = vector.extract_strided_slice %59 {offsets = [0, 0], sizes = [2, 32], strides = [1, 1]} : vector<2x64xf32> to vector<2x32xf32>
    %61 = arith.index_cast %c0_i32_15 : i32 to index
    %c0_22 = arith.constant 0 : index
    %c0_23 = arith.constant 0 : index
    %62 = vector.load %arg12[%61, %c0_22, %c0_23] : memref<8x2x32xf32, #tpu.memory_space<vmem>>, vector<1x2x32xf32>
    %63 = vector.shape_cast %62 : vector<1x2x32xf32> to vector<2x32xf32>
    %64 = vector.shape_cast %60 : vector<2x32xf32> to vector<1x2x32xf32>
    tpu.vector_store %arg12[%61, %c0_22, %c0_23], %64 {strides = array<i32>} : memref<8x2x32xf32, #tpu.memory_space<vmem>>, vector<1x2x32xf32>,
    %65 = vector.extract_strided_slice %59 {offsets = [0, 32], sizes = [2, 32], strides = [1, 1]} : vector<2x64xf32> to vector<2x32xf32>
    %c7_i32_24 = arith.constant 7 : i32
    %66 = arith.subi %c7_i32_24, %c0_i32_15 : i32
    %67 = arith.index_cast %66 : i32 to index
    %c0_25 = arith.constant 0 : index
    %c0_26 = arith.constant 0 : index
    %68 = vector.load %arg13[%67, %c0_25, %c0_26] : memref<8x2x32xf32, #tpu.memory_space<vmem>>, vector<1x2x32xf32>
    %69 = vector.shape_cast %68 : vector<1x2x32xf32> to vector<2x32xf32>
    %70 = vector.shape_cast %65 : vector<2x32xf32> to vector<1x2x32xf32>
    tpu.vector_store %arg13[%67, %c0_25, %c0_26], %70 {strides = array<i32>} : memref<8x2x32xf32, #tpu.memory_space<vmem>>, vector<1x2x32xf32>,
    %c1_i32_27 = arith.constant 1 : i32
    %71 = arith.truncf %59 : vector<2x64xf32> to vector<2x64xbf16>
    %cst_28 = arith.constant dense<0.000000e+00> : vector<2x256xf32>
    %72 = tpu.matmul %71, %29, %cst_28 {dimension_numbers = #tpu.dot_dimension_numbers<[1], [0], [0], [1], [0, 0, 1, 1], [], []>} : vector<2x64xbf16>, vector<64x256xbf16>, vector<2x256xf32> -> vector<2x256xf32>
    %73 = arith.index_cast %c1_i32_27 : i32 to index
    %c0_29 = arith.constant 0 : index
    %c0_30 = arith.constant 0 : index
    %74 = vector.load %arg11[%73, %c0_29, %c0_30] : memref<8x2x256xf32, #tpu.memory_space<vmem>>, vector<1x2x256xf32>
    %75 = vector.shape_cast %74 : vector<1x2x256xf32> to vector<2x256xf32>
    %c7_i32_31 = arith.constant 7 : i32
    %76 = arith.subi %c7_i32_31, %c1_i32_27 : i32
    %77 = arith.index_cast %76 : i32 to index
    %c0_32 = arith.constant 0 : index
    %c0_33 = arith.constant 0 : index
    %78 = vector.load %arg11[%77, %c0_32, %c0_33] : memref<8x2x256xf32, #tpu.memory_space<vmem>>, vector<1x2x256xf32>
    %79 = vector.shape_cast %78 : vector<1x2x256xf32> to vector<2x256xf32>
    %80 = vector.shape_cast %18 : vector<1x256xi1> to vector<1x256xi1>
    %81 = vector.broadcast %80 : vector<1x256xi1> to vector<2x256xi1>
    %82 = arith.select %81, %75, %79 : vector<2x256xi1>, vector<2x256xf32>
    %83 = arith.addf %72, %82 : vector<2x256xf32>
    %84 = vector.extract_strided_slice %83 {offsets = [0, 0], sizes = [2, 192], strides = [1, 1]} : vector<2x256xf32> to vector<2x192xf32>
    %85 = arith.negf %84 : vector<2x192xf32>
    %86 = math.exp %85 : vector<2x192xf32>
    %cst_34 = arith.constant 1.000000e+00 : f32
    %87 = vector.broadcast %cst_34 : f32 to vector<2x192xf32>
    %88 = arith.addf %87, %86 : vector<2x192xf32>
    %89 = arith.divf %87, %88 : vector<2x192xf32>
    %90 = vector.extract_strided_slice %83 {offsets = [0, 192], sizes = [2, 64], strides = [1, 1]} : vector<2x256xf32> to vector<2x64xf32>
    %91 = math.tanh %90 : vector<2x64xf32>
    %92 = vector.extract_strided_slice %89 {offsets = [0, 0], sizes = [2, 64], strides = [1, 1]} : vector<2x192xf32> to vector<2x64xf32>
    %93 = vector.extract_strided_slice %89 {offsets = [0, 64], sizes = [2, 64], strides = [1, 1]} : vector<2x192xf32> to vector<2x64xf32>
    %94 = vector.extract_strided_slice %89 {offsets = [0, 128], sizes = [2, 64], strides = [1, 1]} : vector<2x192xf32> to vector<2x64xf32>
    %95 = arith.mulf %93, %57 : vector<2x64xf32>
    %96 = arith.mulf %92, %91 : vector<2x64xf32>
    %97 = arith.addf %95, %96 : vector<2x64xf32>
    %98 = math.tanh %97 : vector<2x64xf32>
    %99 = arith.mulf %94, %98 : vector<2x64xf32>
    %100 = vector.extract_strided_slice %99 {offsets = [0, 0], sizes = [2, 32], strides = [1, 1]} : vector<2x64xf32> to vector<2x32xf32>
    %101 = arith.index_cast %c1_i32_27 : i32 to index
    %c0_35 = arith.constant 0 : index
    %c0_36 = arith.constant 0 : index
    %102 = vector.load %arg12[%101, %c0_35, %c0_36] : memref<8x2x32xf32, #tpu.memory_space<vmem>>, vector<1x2x32xf32>
    %103 = vector.shape_cast %102 : vector<1x2x32xf32> to vector<2x32xf32>
    %104 = vector.shape_cast %100 : vector<2x32xf32> to vector<1x2x32xf32>
    tpu.vector_store %arg12[%101, %c0_35, %c0_36], %104 {strides = array<i32>} : memref<8x2x32xf32, #tpu.memory_space<vmem>>, vector<1x2x32xf32>,
    %105 = vector.extract_strided_slice %99 {offsets = [0, 32], sizes = [2, 32], strides = [1, 1]} : vector<2x64xf32> to vector<2x32xf32>
    %c7_i32_37 = arith.constant 7 : i32
    %106 = arith.subi %c7_i32_37, %c1_i32_27 : i32
    %107 = arith.index_cast %106 : i32 to index
    %c0_38 = arith.constant 0 : index
    %c0_39 = arith.constant 0 : index
    %108 = vector.load %arg13[%107, %c0_38, %c0_39] : memref<8x2x32xf32, #tpu.memory_space<vmem>>, vector<1x2x32xf32>
    %109 = vector.shape_cast %108 : vector<1x2x32xf32> to vector<2x32xf32>
    %110 = vector.shape_cast %105 : vector<2x32xf32> to vector<1x2x32xf32>
    tpu.vector_store %arg13[%107, %c0_38, %c0_39], %110 {strides = array<i32>} : memref<8x2x32xf32, #tpu.memory_space<vmem>>, vector<1x2x32xf32>,
    %c2_i32 = arith.constant 2 : i32
    %111 = arith.truncf %99 : vector<2x64xf32> to vector<2x64xbf16>
    %cst_40 = arith.constant dense<0.000000e+00> : vector<2x256xf32>
    %112 = tpu.matmul %111, %29, %cst_40 {dimension_numbers = #tpu.dot_dimension_numbers<[1], [0], [0], [1], [0, 0, 1, 1], [], []>} : vector<2x64xbf16>, vector<64x256xbf16>, vector<2x256xf32> -> vector<2x256xf32>
    %113 = arith.index_cast %c2_i32 : i32 to index
    %c0_41 = arith.constant 0 : index
    %c0_42 = arith.constant 0 : index
    %114 = vector.load %arg11[%113, %c0_41, %c0_42] : memref<8x2x256xf32, #tpu.memory_space<vmem>>, vector<1x2x256xf32>
    %115 = vector.shape_cast %114 : vector<1x2x256xf32> to vector<2x256xf32>
    %c7_i32_43 = arith.constant 7 : i32
    %116 = arith.subi %c7_i32_43, %c2_i32 : i32
    %117 = arith.index_cast %116 : i32 to index
    %c0_44 = arith.constant 0 : index
    %c0_45 = arith.constant 0 : index
    %118 = vector.load %arg11[%117, %c0_44, %c0_45] : memref<8x2x256xf32, #tpu.memory_space<vmem>>, vector<1x2x256xf32>
    %119 = vector.shape_cast %118 : vector<1x2x256xf32> to vector<2x256xf32>
    %120 = vector.shape_cast %18 : vector<1x256xi1> to vector<1x256xi1>
    %121 = vector.broadcast %120 : vector<1x256xi1> to vector<2x256xi1>
    %122 = arith.select %121, %115, %119 : vector<2x256xi1>, vector<2x256xf32>
    %123 = arith.addf %112, %122 : vector<2x256xf32>
    %124 = vector.extract_strided_slice %123 {offsets = [0, 0], sizes = [2, 192], strides = [1, 1]} : vector<2x256xf32> to vector<2x192xf32>
    %125 = arith.negf %124 : vector<2x192xf32>
    %126 = math.exp %125 : vector<2x192xf32>
    %cst_46 = arith.constant 1.000000e+00 : f32
    %127 = vector.broadcast %cst_46 : f32 to vector<2x192xf32>
    %128 = arith.addf %127, %126 : vector<2x192xf32>
    %129 = arith.divf %127, %128 : vector<2x192xf32>
    %130 = vector.extract_strided_slice %123 {offsets = [0, 192], sizes = [2, 64], strides = [1, 1]} : vector<2x256xf32> to vector<2x64xf32>
    %131 = math.tanh %130 : vector<2x64xf32>
    %132 = vector.extract_strided_slice %129 {offsets = [0, 0], sizes = [2, 64], strides = [1, 1]} : vector<2x192xf32> to vector<2x64xf32>
    %133 = vector.extract_strided_slice %129 {offsets = [0, 64], sizes = [2, 64], strides = [1, 1]} : vector<2x192xf32> to vector<2x64xf32>
    %134 = vector.extract_strided_slice %129 {offsets = [0, 128], sizes = [2, 64], strides = [1, 1]} : vector<2x192xf32> to vector<2x64xf32>
    %135 = arith.mulf %133, %97 : vector<2x64xf32>
    %136 = arith.mulf %132, %131 : vector<2x64xf32>
    %137 = arith.addf %135, %136 : vector<2x64xf32>
    %138 = math.tanh %137 : vector<2x64xf32>
    %139 = arith.mulf %134, %138 : vector<2x64xf32>
    %140 = vector.extract_strided_slice %139 {offsets = [0, 0], sizes = [2, 32], strides = [1, 1]} : vector<2x64xf32> to vector<2x32xf32>
    %141 = arith.index_cast %c2_i32 : i32 to index
    %c0_47 = arith.constant 0 : index
    %c0_48 = arith.constant 0 : index
    %142 = vector.load %arg12[%141, %c0_47, %c0_48] : memref<8x2x32xf32, #tpu.memory_space<vmem>>, vector<1x2x32xf32>
    %143 = vector.shape_cast %142 : vector<1x2x32xf32> to vector<2x32xf32>
    %144 = vector.shape_cast %140 : vector<2x32xf32> to vector<1x2x32xf32>
    tpu.vector_store %arg12[%141, %c0_47, %c0_48], %144 {strides = array<i32>} : memref<8x2x32xf32, #tpu.memory_space<vmem>>, vector<1x2x32xf32>,
    %145 = vector.extract_strided_slice %139 {offsets = [0, 32], sizes = [2, 32], strides = [1, 1]} : vector<2x64xf32> to vector<2x32xf32>
    %c7_i32_49 = arith.constant 7 : i32
    %146 = arith.subi %c7_i32_49, %c2_i32 : i32
    %147 = arith.index_cast %146 : i32 to index
    %c0_50 = arith.constant 0 : index
    %c0_51 = arith.constant 0 : index
    %148 = vector.load %arg13[%147, %c0_50, %c0_51] : memref<8x2x32xf32, #tpu.memory_space<vmem>>, vector<1x2x32xf32>
    %149 = vector.shape_cast %148 : vector<1x2x32xf32> to vector<2x32xf32>
    %150 = vector.shape_cast %145 : vector<2x32xf32> to vector<1x2x32xf32>
    tpu.vector_store %arg13[%147, %c0_50, %c0_51], %150 {strides = array<i32>} : memref<8x2x32xf32, #tpu.memory_space<vmem>>, vector<1x2x32xf32>,
    %c3_i32 = arith.constant 3 : i32
    %151 = arith.truncf %139 : vector<2x64xf32> to vector<2x64xbf16>
    %cst_52 = arith.constant dense<0.000000e+00> : vector<2x256xf32>
    %152 = tpu.matmul %151, %29, %cst_52 {dimension_numbers = #tpu.dot_dimension_numbers<[1], [0], [0], [1], [0, 0, 1, 1], [], []>} : vector<2x64xbf16>, vector<64x256xbf16>, vector<2x256xf32> -> vector<2x256xf32>
    %153 = arith.index_cast %c3_i32 : i32 to index
    %c0_53 = arith.constant 0 : index
    %c0_54 = arith.constant 0 : index
    %154 = vector.load %arg11[%153, %c0_53, %c0_54] : memref<8x2x256xf32, #tpu.memory_space<vmem>>, vector<1x2x256xf32>
    %155 = vector.shape_cast %154 : vector<1x2x256xf32> to vector<2x256xf32>
    %c7_i32_55 = arith.constant 7 : i32
    %156 = arith.subi %c7_i32_55, %c3_i32 : i32
    %157 = arith.index_cast %156 : i32 to index
    %c0_56 = arith.constant 0 : index
    %c0_57 = arith.constant 0 : index
    %158 = vector.load %arg11[%157, %c0_56, %c0_57] : memref<8x2x256xf32, #tpu.memory_space<vmem>>, vector<1x2x256xf32>
    %159 = vector.shape_cast %158 : vector<1x2x256xf32> to vector<2x256xf32>
    %160 = vector.shape_cast %18 : vector<1x256xi1> to vector<1x256xi1>
    %161 = vector.broadcast %160 : vector<1x256xi1> to vector<2x256xi1>
    %162 = arith.select %161, %155, %159 : vector<2x256xi1>, vector<2x256xf32>
    %163 = arith.addf %152, %162 : vector<2x256xf32>
    %164 = vector.extract_strided_slice %163 {offsets = [0, 0], sizes = [2, 192], strides = [1, 1]} : vector<2x256xf32> to vector<2x192xf32>
    %165 = arith.negf %164 : vector<2x192xf32>
    %166 = math.exp %165 : vector<2x192xf32>
    %cst_58 = arith.constant 1.000000e+00 : f32
    %167 = vector.broadcast %cst_58 : f32 to vector<2x192xf32>
    %168 = arith.addf %167, %166 : vector<2x192xf32>
    %169 = arith.divf %167, %168 : vector<2x192xf32>
    %170 = vector.extract_strided_slice %163 {offsets = [0, 192], sizes = [2, 64], strides = [1, 1]} : vector<2x256xf32> to vector<2x64xf32>
    %171 = math.tanh %170 : vector<2x64xf32>
    %172 = vector.extract_strided_slice %169 {offsets = [0, 0], sizes = [2, 64], strides = [1, 1]} : vector<2x192xf32> to vector<2x64xf32>
    %173 = vector.extract_strided_slice %169 {offsets = [0, 64], sizes = [2, 64], strides = [1, 1]} : vector<2x192xf32> to vector<2x64xf32>
    %174 = vector.extract_strided_slice %169 {offsets = [0, 128], sizes = [2, 64], strides = [1, 1]} : vector<2x192xf32> to vector<2x64xf32>
    %175 = arith.mulf %173, %137 : vector<2x64xf32>
    %176 = arith.mulf %172, %171 : vector<2x64xf32>
    %177 = arith.addf %175, %176 : vector<2x64xf32>
    %178 = math.tanh %177 : vector<2x64xf32>
    %179 = arith.mulf %174, %178 : vector<2x64xf32>
    %180 = vector.extract_strided_slice %179 {offsets = [0, 0], sizes = [2, 32], strides = [1, 1]} : vector<2x64xf32> to vector<2x32xf32>
    %181 = arith.index_cast %c3_i32 : i32 to index
    %c0_59 = arith.constant 0 : index
    %c0_60 = arith.constant 0 : index
    %182 = vector.load %arg12[%181, %c0_59, %c0_60] : memref<8x2x32xf32, #tpu.memory_space<vmem>>, vector<1x2x32xf32>
    %183 = vector.shape_cast %182 : vector<1x2x32xf32> to vector<2x32xf32>
    %184 = vector.shape_cast %180 : vector<2x32xf32> to vector<1x2x32xf32>
    tpu.vector_store %arg12[%181, %c0_59, %c0_60], %184 {strides = array<i32>} : memref<8x2x32xf32, #tpu.memory_space<vmem>>, vector<1x2x32xf32>,
    %185 = vector.extract_strided_slice %179 {offsets = [0, 32], sizes = [2, 32], strides = [1, 1]} : vector<2x64xf32> to vector<2x32xf32>
    %c7_i32_61 = arith.constant 7 : i32
    %186 = arith.subi %c7_i32_61, %c3_i32 : i32
    %187 = arith.index_cast %186 : i32 to index
    %c0_62 = arith.constant 0 : index
    %c0_63 = arith.constant 0 : index
    %188 = vector.load %arg13[%187, %c0_62, %c0_63] : memref<8x2x32xf32, #tpu.memory_space<vmem>>, vector<1x2x32xf32>
    %189 = vector.shape_cast %188 : vector<1x2x32xf32> to vector<2x32xf32>
    %190 = vector.shape_cast %185 : vector<2x32xf32> to vector<1x2x32xf32>
    tpu.vector_store %arg13[%187, %c0_62, %c0_63], %190 {strides = array<i32>} : memref<8x2x32xf32, #tpu.memory_space<vmem>>, vector<1x2x32xf32>,
    %c4_i32 = arith.constant 4 : i32
    %191 = arith.truncf %179 : vector<2x64xf32> to vector<2x64xbf16>
    %cst_64 = arith.constant dense<0.000000e+00> : vector<2x256xf32>
    %192 = tpu.matmul %191, %29, %cst_64 {dimension_numbers = #tpu.dot_dimension_numbers<[1], [0], [0], [1], [0, 0, 1, 1], [], []>} : vector<2x64xbf16>, vector<64x256xbf16>, vector<2x256xf32> -> vector<2x256xf32>
    %193 = arith.index_cast %c4_i32 : i32 to index
    %c0_65 = arith.constant 0 : index
    %c0_66 = arith.constant 0 : index
    %194 = vector.load %arg11[%193, %c0_65, %c0_66] : memref<8x2x256xf32, #tpu.memory_space<vmem>>, vector<1x2x256xf32>
    %195 = vector.shape_cast %194 : vector<1x2x256xf32> to vector<2x256xf32>
    %c7_i32_67 = arith.constant 7 : i32
    %196 = arith.subi %c7_i32_67, %c4_i32 : i32
    %197 = arith.index_cast %196 : i32 to index
    %c0_68 = arith.constant 0 : index
    %c0_69 = arith.constant 0 : index
    %198 = vector.load %arg11[%197, %c0_68, %c0_69] : memref<8x2x256xf32, #tpu.memory_space<vmem>>, vector<1x2x256xf32>
    %199 = vector.shape_cast %198 : vector<1x2x256xf32> to vector<2x256xf32>
    %200 = vector.shape_cast %18 : vector<1x256xi1> to vector<1x256xi1>
    %201 = vector.broadcast %200 : vector<1x256xi1> to vector<2x256xi1>
    %202 = arith.select %201, %195, %199 : vector<2x256xi1>, vector<2x256xf32>
    %203 = arith.addf %192, %202 : vector<2x256xf32>
    %204 = vector.extract_strided_slice %203 {offsets = [0, 0], sizes = [2, 192], strides = [1, 1]} : vector<2x256xf32> to vector<2x192xf32>
    %205 = arith.negf %204 : vector<2x192xf32>
    %206 = math.exp %205 : vector<2x192xf32>
    %cst_70 = arith.constant 1.000000e+00 : f32
    %207 = vector.broadcast %cst_70 : f32 to vector<2x192xf32>
    %208 = arith.addf %207, %206 : vector<2x192xf32>
    %209 = arith.divf %207, %208 : vector<2x192xf32>
    %210 = vector.extract_strided_slice %203 {offsets = [0, 192], sizes = [2, 64], strides = [1, 1]} : vector<2x256xf32> to vector<2x64xf32>
    %211 = math.tanh %210 : vector<2x64xf32>
    %212 = vector.extract_strided_slice %209 {offsets = [0, 0], sizes = [2, 64], strides = [1, 1]} : vector<2x192xf32> to vector<2x64xf32>
    %213 = vector.extract_strided_slice %209 {offsets = [0, 64], sizes = [2, 64], strides = [1, 1]} : vector<2x192xf32> to vector<2x64xf32>
    %214 = vector.extract_strided_slice %209 {offsets = [0, 128], sizes = [2, 64], strides = [1, 1]} : vector<2x192xf32> to vector<2x64xf32>
    %215 = arith.mulf %213, %177 : vector<2x64xf32>
    %216 = arith.mulf %212, %211 : vector<2x64xf32>
    %217 = arith.addf %215, %216 : vector<2x64xf32>
    %218 = math.tanh %217 : vector<2x64xf32>
    %219 = arith.mulf %214, %218 : vector<2x64xf32>
    %220 = vector.extract_strided_slice %219 {offsets = [0, 0], sizes = [2, 32], strides = [1, 1]} : vector<2x64xf32> to vector<2x32xf32>
    %221 = arith.index_cast %c4_i32 : i32 to index
    %c0_71 = arith.constant 0 : index
    %c0_72 = arith.constant 0 : index
    %222 = vector.load %arg12[%221, %c0_71, %c0_72] : memref<8x2x32xf32, #tpu.memory_space<vmem>>, vector<1x2x32xf32>
    %223 = vector.shape_cast %222 : vector<1x2x32xf32> to vector<2x32xf32>
    %224 = vector.shape_cast %220 : vector<2x32xf32> to vector<1x2x32xf32>
    tpu.vector_store %arg12[%221, %c0_71, %c0_72], %224 {strides = array<i32>} : memref<8x2x32xf32, #tpu.memory_space<vmem>>, vector<1x2x32xf32>,
    %225 = vector.extract_strided_slice %219 {offsets = [0, 32], sizes = [2, 32], strides = [1, 1]} : vector<2x64xf32> to vector<2x32xf32>
    %c7_i32_73 = arith.constant 7 : i32
    %226 = arith.subi %c7_i32_73, %c4_i32 : i32
    %227 = arith.index_cast %226 : i32 to index
    %c0_74 = arith.constant 0 : index
    %c0_75 = arith.constant 0 : index
    %228 = vector.load %arg13[%227, %c0_74, %c0_75] : memref<8x2x32xf32, #tpu.memory_space<vmem>>, vector<1x2x32xf32>
    %229 = vector.shape_cast %228 : vector<1x2x32xf32> to vector<2x32xf32>
    %230 = vector.shape_cast %225 : vector<2x32xf32> to vector<1x2x32xf32>
    tpu.vector_store %arg13[%227, %c0_74, %c0_75], %230 {strides = array<i32>} : memref<8x2x32xf32, #tpu.memory_space<vmem>>, vector<1x2x32xf32>,
    %c5_i32 = arith.constant 5 : i32
    %231 = arith.truncf %219 : vector<2x64xf32> to vector<2x64xbf16>
    %cst_76 = arith.constant dense<0.000000e+00> : vector<2x256xf32>
    %232 = tpu.matmul %231, %29, %cst_76 {dimension_numbers = #tpu.dot_dimension_numbers<[1], [0], [0], [1], [0, 0, 1, 1], [], []>} : vector<2x64xbf16>, vector<64x256xbf16>, vector<2x256xf32> -> vector<2x256xf32>
    %233 = arith.index_cast %c5_i32 : i32 to index
    %c0_77 = arith.constant 0 : index
    %c0_78 = arith.constant 0 : index
    %234 = vector.load %arg11[%233, %c0_77, %c0_78] : memref<8x2x256xf32, #tpu.memory_space<vmem>>, vector<1x2x256xf32>
    %235 = vector.shape_cast %234 : vector<1x2x256xf32> to vector<2x256xf32>
    %c7_i32_79 = arith.constant 7 : i32
    %236 = arith.subi %c7_i32_79, %c5_i32 : i32
    %237 = arith.index_cast %236 : i32 to index
    %c0_80 = arith.constant 0 : index
    %c0_81 = arith.constant 0 : index
    %238 = vector.load %arg11[%237, %c0_80, %c0_81] : memref<8x2x256xf32, #tpu.memory_space<vmem>>, vector<1x2x256xf32>
    %239 = vector.shape_cast %238 : vector<1x2x256xf32> to vector<2x256xf32>
    %240 = vector.shape_cast %18 : vector<1x256xi1> to vector<1x256xi1>
    %241 = vector.broadcast %240 : vector<1x256xi1> to vector<2x256xi1>
    %242 = arith.select %241, %235, %239 : vector<2x256xi1>, vector<2x256xf32>
    %243 = arith.addf %232, %242 : vector<2x256xf32>
    %244 = vector.extract_strided_slice %243 {offsets = [0, 0], sizes = [2, 192], strides = [1, 1]} : vector<2x256xf32> to vector<2x192xf32>
    %245 = arith.negf %244 : vector<2x192xf32>
    %246 = math.exp %245 : vector<2x192xf32>
    %cst_82 = arith.constant 1.000000e+00 : f32
    %247 = vector.broadcast %cst_82 : f32 to vector<2x192xf32>
    %248 = arith.addf %247, %246 : vector<2x192xf32>
    %249 = arith.divf %247, %248 : vector<2x192xf32>
    %250 = vector.extract_strided_slice %243 {offsets = [0, 192], sizes = [2, 64], strides = [1, 1]} : vector<2x256xf32> to vector<2x64xf32>
    %251 = math.tanh %250 : vector<2x64xf32>
    %252 = vector.extract_strided_slice %249 {offsets = [0, 0], sizes = [2, 64], strides = [1, 1]} : vector<2x192xf32> to vector<2x64xf32>
    %253 = vector.extract_strided_slice %249 {offsets = [0, 64], sizes = [2, 64], strides = [1, 1]} : vector<2x192xf32> to vector<2x64xf32>
    %254 = vector.extract_strided_slice %249 {offsets = [0, 128], sizes = [2, 64], strides = [1, 1]} : vector<2x192xf32> to vector<2x64xf32>
    %255 = arith.mulf %253, %217 : vector<2x64xf32>
    %256 = arith.mulf %252, %251 : vector<2x64xf32>
    %257 = arith.addf %255, %256 : vector<2x64xf32>
    %258 = math.tanh %257 : vector<2x64xf32>
    %259 = arith.mulf %254, %258 : vector<2x64xf32>
    %260 = vector.extract_strided_slice %259 {offsets = [0, 0], sizes = [2, 32], strides = [1, 1]} : vector<2x64xf32> to vector<2x32xf32>
    %261 = arith.index_cast %c5_i32 : i32 to index
    %c0_83 = arith.constant 0 : index
    %c0_84 = arith.constant 0 : index
    %262 = vector.load %arg12[%261, %c0_83, %c0_84] : memref<8x2x32xf32, #tpu.memory_space<vmem>>, vector<1x2x32xf32>
    %263 = vector.shape_cast %262 : vector<1x2x32xf32> to vector<2x32xf32>
    %264 = vector.shape_cast %260 : vector<2x32xf32> to vector<1x2x32xf32>
    tpu.vector_store %arg12[%261, %c0_83, %c0_84], %264 {strides = array<i32>} : memref<8x2x32xf32, #tpu.memory_space<vmem>>, vector<1x2x32xf32>,
    %265 = vector.extract_strided_slice %259 {offsets = [0, 32], sizes = [2, 32], strides = [1, 1]} : vector<2x64xf32> to vector<2x32xf32>
    %c7_i32_85 = arith.constant 7 : i32
    %266 = arith.subi %c7_i32_85, %c5_i32 : i32
    %267 = arith.index_cast %266 : i32 to index
    %c0_86 = arith.constant 0 : index
    %c0_87 = arith.constant 0 : index
    %268 = vector.load %arg13[%267, %c0_86, %c0_87] : memref<8x2x32xf32, #tpu.memory_space<vmem>>, vector<1x2x32xf32>
    %269 = vector.shape_cast %268 : vector<1x2x32xf32> to vector<2x32xf32>
    %270 = vector.shape_cast %265 : vector<2x32xf32> to vector<1x2x32xf32>
    tpu.vector_store %arg13[%267, %c0_86, %c0_87], %270 {strides = array<i32>} : memref<8x2x32xf32, #tpu.memory_space<vmem>>, vector<1x2x32xf32>,
    %c6_i32 = arith.constant 6 : i32
    %271 = arith.truncf %259 : vector<2x64xf32> to vector<2x64xbf16>
    %cst_88 = arith.constant dense<0.000000e+00> : vector<2x256xf32>
    %272 = tpu.matmul %271, %29, %cst_88 {dimension_numbers = #tpu.dot_dimension_numbers<[1], [0], [0], [1], [0, 0, 1, 1], [], []>} : vector<2x64xbf16>, vector<64x256xbf16>, vector<2x256xf32> -> vector<2x256xf32>
    %273 = arith.index_cast %c6_i32 : i32 to index
    %c0_89 = arith.constant 0 : index
    %c0_90 = arith.constant 0 : index
    %274 = vector.load %arg11[%273, %c0_89, %c0_90] : memref<8x2x256xf32, #tpu.memory_space<vmem>>, vector<1x2x256xf32>
    %275 = vector.shape_cast %274 : vector<1x2x256xf32> to vector<2x256xf32>
    %c7_i32_91 = arith.constant 7 : i32
    %276 = arith.subi %c7_i32_91, %c6_i32 : i32
    %277 = arith.index_cast %276 : i32 to index
    %c0_92 = arith.constant 0 : index
    %c0_93 = arith.constant 0 : index
    %278 = vector.load %arg11[%277, %c0_92, %c0_93] : memref<8x2x256xf32, #tpu.memory_space<vmem>>, vector<1x2x256xf32>
    %279 = vector.shape_cast %278 : vector<1x2x256xf32> to vector<2x256xf32>
    %280 = vector.shape_cast %18 : vector<1x256xi1> to vector<1x256xi1>
    %281 = vector.broadcast %280 : vector<1x256xi1> to vector<2x256xi1>
    %282 = arith.select %281, %275, %279 : vector<2x256xi1>, vector<2x256xf32>
    %283 = arith.addf %272, %282 : vector<2x256xf32>
    %284 = vector.extract_strided_slice %283 {offsets = [0, 0], sizes = [2, 192], strides = [1, 1]} : vector<2x256xf32> to vector<2x192xf32>
    %285 = arith.negf %284 : vector<2x192xf32>
    %286 = math.exp %285 : vector<2x192xf32>
    %cst_94 = arith.constant 1.000000e+00 : f32
    %287 = vector.broadcast %cst_94 : f32 to vector<2x192xf32>
    %288 = arith.addf %287, %286 : vector<2x192xf32>
    %289 = arith.divf %287, %288 : vector<2x192xf32>
    %290 = vector.extract_strided_slice %283 {offsets = [0, 192], sizes = [2, 64], strides = [1, 1]} : vector<2x256xf32> to vector<2x64xf32>
    %291 = math.tanh %290 : vector<2x64xf32>
    %292 = vector.extract_strided_slice %289 {offsets = [0, 0], sizes = [2, 64], strides = [1, 1]} : vector<2x192xf32> to vector<2x64xf32>
    %293 = vector.extract_strided_slice %289 {offsets = [0, 64], sizes = [2, 64], strides = [1, 1]} : vector<2x192xf32> to vector<2x64xf32>
    %294 = vector.extract_strided_slice %289 {offsets = [0, 128], sizes = [2, 64], strides = [1, 1]} : vector<2x192xf32> to vector<2x64xf32>
    %295 = arith.mulf %293, %257 : vector<2x64xf32>
    %296 = arith.mulf %292, %291 : vector<2x64xf32>
    %297 = arith.addf %295, %296 : vector<2x64xf32>
    %298 = math.tanh %297 : vector<2x64xf32>
    %299 = arith.mulf %294, %298 : vector<2x64xf32>
    %300 = vector.extract_strided_slice %299 {offsets = [0, 0], sizes = [2, 32], strides = [1, 1]} : vector<2x64xf32> to vector<2x32xf32>
    %301 = arith.index_cast %c6_i32 : i32 to index
    %c0_95 = arith.constant 0 : index
    %c0_96 = arith.constant 0 : index
    %302 = vector.load %arg12[%301, %c0_95, %c0_96] : memref<8x2x32xf32, #tpu.memory_space<vmem>>, vector<1x2x32xf32>
    %303 = vector.shape_cast %302 : vector<1x2x32xf32> to vector<2x32xf32>
    %304 = vector.shape_cast %300 : vector<2x32xf32> to vector<1x2x32xf32>
    tpu.vector_store %arg12[%301, %c0_95, %c0_96], %304 {strides = array<i32>} : memref<8x2x32xf32, #tpu.memory_space<vmem>>, vector<1x2x32xf32>,
    %305 = vector.extract_strided_slice %299 {offsets = [0, 32], sizes = [2, 32], strides = [1, 1]} : vector<2x64xf32> to vector<2x32xf32>
    %c7_i32_97 = arith.constant 7 : i32
    %306 = arith.subi %c7_i32_97, %c6_i32 : i32
    %307 = arith.index_cast %306 : i32 to index
    %c0_98 = arith.constant 0 : index
    %c0_99 = arith.constant 0 : index
    %308 = vector.load %arg13[%307, %c0_98, %c0_99] : memref<8x2x32xf32, #tpu.memory_space<vmem>>, vector<1x2x32xf32>
    %309 = vector.shape_cast %308 : vector<1x2x32xf32> to vector<2x32xf32>
    %310 = vector.shape_cast %305 : vector<2x32xf32> to vector<1x2x32xf32>
    tpu.vector_store %arg13[%307, %c0_98, %c0_99], %310 {strides = array<i32>} : memref<8x2x32xf32, #tpu.memory_space<vmem>>, vector<1x2x32xf32>,
    %c7_i32_100 = arith.constant 7 : i32
    %311 = arith.truncf %299 : vector<2x64xf32> to vector<2x64xbf16>
    %cst_101 = arith.constant dense<0.000000e+00> : vector<2x256xf32>
    %312 = tpu.matmul %311, %29, %cst_101 {dimension_numbers = #tpu.dot_dimension_numbers<[1], [0], [0], [1], [0, 0, 1, 1], [], []>} : vector<2x64xbf16>, vector<64x256xbf16>, vector<2x256xf32> -> vector<2x256xf32>
    %313 = arith.index_cast %c7_i32_100 : i32 to index
    %c0_102 = arith.constant 0 : index
    %c0_103 = arith.constant 0 : index
    %314 = vector.load %arg11[%313, %c0_102, %c0_103] : memref<8x2x256xf32, #tpu.memory_space<vmem>>, vector<1x2x256xf32>
    %315 = vector.shape_cast %314 : vector<1x2x256xf32> to vector<2x256xf32>
    %c7_i32_104 = arith.constant 7 : i32
    %316 = arith.subi %c7_i32_104, %c7_i32_100 : i32
    %317 = arith.index_cast %316 : i32 to index
    %c0_105 = arith.constant 0 : index
    %c0_106 = arith.constant 0 : index
    %318 = vector.load %arg11[%317, %c0_105, %c0_106] : memref<8x2x256xf32, #tpu.memory_space<vmem>>, vector<1x2x256xf32>
    %319 = vector.shape_cast %318 : vector<1x2x256xf32> to vector<2x256xf32>
    %320 = vector.shape_cast %18 : vector<1x256xi1> to vector<1x256xi1>
    %321 = vector.broadcast %320 : vector<1x256xi1> to vector<2x256xi1>
    %322 = arith.select %321, %315, %319 : vector<2x256xi1>, vector<2x256xf32>
    %323 = arith.addf %312, %322 : vector<2x256xf32>
    %324 = vector.extract_strided_slice %323 {offsets = [0, 0], sizes = [2, 192], strides = [1, 1]} : vector<2x256xf32> to vector<2x192xf32>
    %325 = arith.negf %324 : vector<2x192xf32>
    %326 = math.exp %325 : vector<2x192xf32>
    %cst_107 = arith.constant 1.000000e+00 : f32
    %327 = vector.broadcast %cst_107 : f32 to vector<2x192xf32>
    %328 = arith.addf %327, %326 : vector<2x192xf32>
    %329 = arith.divf %327, %328 : vector<2x192xf32>
    %330 = vector.extract_strided_slice %323 {offsets = [0, 192], sizes = [2, 64], strides = [1, 1]} : vector<2x256xf32> to vector<2x64xf32>
    %331 = math.tanh %330 : vector<2x64xf32>
    %332 = vector.extract_strided_slice %329 {offsets = [0, 0], sizes = [2, 64], strides = [1, 1]} : vector<2x192xf32> to vector<2x64xf32>
    %333 = vector.extract_strided_slice %329 {offsets = [0, 64], sizes = [2, 64], strides = [1, 1]} : vector<2x192xf32> to vector<2x64xf32>
    %334 = vector.extract_strided_slice %329 {offsets = [0, 128], sizes = [2, 64], strides = [1, 1]} : vector<2x192xf32> to vector<2x64xf32>
    %335 = arith.mulf %333, %297 : vector<2x64xf32>
    %336 = arith.mulf %332, %331 : vector<2x64xf32>
    %337 = arith.addf %335, %336 : vector<2x64xf32>
    %338 = math.tanh %337 : vector<2x64xf32>
    %339 = arith.mulf %334, %338 : vector<2x64xf32>
    %340 = vector.extract_strided_slice %339 {offsets = [0, 0], sizes = [2, 32], strides = [1, 1]} : vector<2x64xf32> to vector<2x32xf32>
    %341 = arith.index_cast %c7_i32_100 : i32 to index
    %c0_108 = arith.constant 0 : index
    %c0_109 = arith.constant 0 : index
    %342 = vector.load %arg12[%341, %c0_108, %c0_109] : memref<8x2x32xf32, #tpu.memory_space<vmem>>, vector<1x2x32xf32>
    %343 = vector.shape_cast %342 : vector<1x2x32xf32> to vector<2x32xf32>
    %344 = vector.shape_cast %340 : vector<2x32xf32> to vector<1x2x32xf32>
    tpu.vector_store %arg12[%341, %c0_108, %c0_109], %344 {strides = array<i32>} : memref<8x2x32xf32, #tpu.memory_space<vmem>>, vector<1x2x32xf32>,
    %345 = vector.extract_strided_slice %339 {offsets = [0, 32], sizes = [2, 32], strides = [1, 1]} : vector<2x64xf32> to vector<2x32xf32>
    %c7_i32_110 = arith.constant 7 : i32
    %346 = arith.subi %c7_i32_110, %c7_i32_100 : i32
    %347 = arith.index_cast %346 : i32 to index
    %c0_111 = arith.constant 0 : index
    %c0_112 = arith.constant 0 : index
    %348 = vector.load %arg13[%347, %c0_111, %c0_112] : memref<8x2x32xf32, #tpu.memory_space<vmem>>, vector<1x2x32xf32>
    %349 = vector.shape_cast %348 : vector<1x2x32xf32> to vector<2x32xf32>
    %350 = vector.shape_cast %345 : vector<2x32xf32> to vector<1x2x32xf32>
    tpu.vector_store %arg13[%347, %c0_111, %c0_112], %350 {strides = array<i32>} : memref<8x2x32xf32, #tpu.memory_space<vmem>>, vector<1x2x32xf32>,
    %c8_i32 = arith.constant 8 : i32
    %c0_113 = arith.constant 0 : index
    %c0_114 = arith.constant 0 : index
    %351 = vector.load %arg5[%c0_113, %c0_114] : memref<64x256xbf16, #tpu.memory_space<vmem>>, vector<64x256xbf16>
    %c0_115 = arith.constant 0 : index
    %c0_116 = arith.constant 0 : index
    %c0_117 = arith.constant 0 : index
    %352 = vector.load %arg12[%c0_115, %c0_116, %c0_117] : memref<8x2x32xf32, #tpu.memory_space<vmem>>, vector<8x2x32xf32>
    %353 = vector.shape_cast %352 : vector<8x2x32xf32> to vector<16x32xf32>
    %354 = arith.truncf %353 : vector<16x32xf32> to vector<16x32xbf16>
    %355 = vector.extract_strided_slice %351 {offsets = [0, 0], sizes = [32, 256], strides = [1, 1]} : vector<64x256xbf16> to vector<32x256xbf16>
    %cst_118 = arith.constant dense<0.000000e+00> : vector<16x256xf32>
    %356 = tpu.matmul %354, %355, %cst_118 {dimension_numbers = #tpu.dot_dimension_numbers<[1], [0], [0], [1], [0, 0, 1, 1], [], []>} : vector<16x32xbf16>, vector<32x256xbf16>, vector<16x256xf32> -> vector<16x256xf32>
    %c0_119 = arith.constant 0 : index
    %c0_120 = arith.constant 0 : index
    %c0_121 = arith.constant 0 : index
    %357 = vector.load %arg13[%c0_119, %c0_120, %c0_121] : memref<8x2x32xf32, #tpu.memory_space<vmem>>, vector<8x2x32xf32>
    %358 = vector.shape_cast %357 : vector<8x2x32xf32> to vector<16x32xf32>
    %359 = arith.truncf %358 : vector<16x32xf32> to vector<16x32xbf16>
    %360 = vector.extract_strided_slice %351 {offsets = [32, 0], sizes = [32, 256], strides = [1, 1]} : vector<64x256xbf16> to vector<32x256xbf16>
    %cst_122 = arith.constant dense<0.000000e+00> : vector<16x256xf32>
    %361 = tpu.matmul %359, %360, %cst_122 {dimension_numbers = #tpu.dot_dimension_numbers<[1], [0], [0], [1], [0, 0, 1, 1], [], []>} : vector<16x32xbf16>, vector<32x256xbf16>, vector<16x256xf32> -> vector<16x256xf32>
    %362 = arith.addf %356, %361 : vector<16x256xf32>
    %c0_123 = arith.constant 0 : index
    %c0_124 = arith.constant 0 : index
    %363 = vector.load %arg7[%c0_123, %c0_124] : memref<1x256xf32, #tpu.memory_space<vmem>>, vector<1x256xf32>
    %364 = vector.broadcast %363 : vector<1x256xf32> to vector<16x256xf32>
    %365 = arith.addf %362, %364 : vector<16x256xf32>
    %366 = vector.shape_cast %365 : vector<16x256xf32> to vector<8x2x256xf32>
    %c0_125 = arith.constant 0 : index
    %c0_126 = arith.constant 0 : index
    %c0_127 = arith.constant 0 : index
    %367 = vector.load %arg11[%c0_125, %c0_126, %c0_127] : memref<8x2x256xf32, #tpu.memory_space<vmem>>, vector<8x2x256xf32>
    tpu.vector_store %arg11[%c0_125, %c0_126, %c0_127], %366 {strides = array<i32>} : memref<8x2x256xf32, #tpu.memory_space<vmem>>, vector<8x2x256xf32>,
    %c0_128 = arith.constant 0 : index
    %c0_129 = arith.constant 0 : index
    %368 = vector.load %arg6[%c0_128, %c0_129] : memref<64x256xbf16, #tpu.memory_space<vmem>>, vector<64x256xbf16>
    %cst_130 = arith.constant 0.000000e+00 : f32
    %369 = vector.broadcast %cst_130 : f32 to vector<2x64xf32>
    %c0_i32_131 = arith.constant 0 : i32
    %370 = arith.truncf %369 : vector<2x64xf32> to vector<2x64xbf16>
    %cst_132 = arith.constant dense<0.000000e+00> : vector<2x256xf32>
    %371 = tpu.matmul %370, %368, %cst_132 {dimension_numbers = #tpu.dot_dimension_numbers<[1], [0], [0], [1], [0, 0, 1, 1], [], []>} : vector<2x64xbf16>, vector<64x256xbf16>, vector<2x256xf32> -> vector<2x256xf32>
    %372 = arith.index_cast %c0_i32_131 : i32 to index
    %c0_133 = arith.constant 0 : index
    %c0_134 = arith.constant 0 : index
    %373 = vector.load %arg11[%372, %c0_133, %c0_134] : memref<8x2x256xf32, #tpu.memory_space<vmem>>, vector<1x2x256xf32>
    %374 = vector.shape_cast %373 : vector<1x2x256xf32> to vector<2x256xf32>
    %c7_i32_135 = arith.constant 7 : i32
    %375 = arith.subi %c7_i32_135, %c0_i32_131 : i32
    %376 = arith.index_cast %375 : i32 to index
    %c0_136 = arith.constant 0 : index
    %c0_137 = arith.constant 0 : index
    %377 = vector.load %arg11[%376, %c0_136, %c0_137] : memref<8x2x256xf32, #tpu.memory_space<vmem>>, vector<1x2x256xf32>
    %378 = vector.shape_cast %377 : vector<1x2x256xf32> to vector<2x256xf32>
    %379 = vector.shape_cast %18 : vector<1x256xi1> to vector<1x256xi1>
    %380 = vector.broadcast %379 : vector<1x256xi1> to vector<2x256xi1>
    %381 = arith.select %380, %374, %378 : vector<2x256xi1>, vector<2x256xf32>
    %382 = arith.addf %371, %381 : vector<2x256xf32>
    %383 = vector.extract_strided_slice %382 {offsets = [0, 0], sizes = [2, 192], strides = [1, 1]} : vector<2x256xf32> to vector<2x192xf32>
    %384 = arith.negf %383 : vector<2x192xf32>
    %385 = math.exp %384 : vector<2x192xf32>
    %cst_138 = arith.constant 1.000000e+00 : f32
    %386 = vector.broadcast %cst_138 : f32 to vector<2x192xf32>
    %387 = arith.addf %386, %385 : vector<2x192xf32>
    %388 = arith.divf %386, %387 : vector<2x192xf32>
    %389 = vector.extract_strided_slice %382 {offsets = [0, 192], sizes = [2, 64], strides = [1, 1]} : vector<2x256xf32> to vector<2x64xf32>
    %390 = math.tanh %389 : vector<2x64xf32>
    %391 = vector.extract_strided_slice %388 {offsets = [0, 0], sizes = [2, 64], strides = [1, 1]} : vector<2x192xf32> to vector<2x64xf32>
    %392 = vector.extract_strided_slice %388 {offsets = [0, 64], sizes = [2, 64], strides = [1, 1]} : vector<2x192xf32> to vector<2x64xf32>
    %393 = vector.extract_strided_slice %388 {offsets = [0, 128], sizes = [2, 64], strides = [1, 1]} : vector<2x192xf32> to vector<2x64xf32>
    %394 = arith.mulf %392, %369 : vector<2x64xf32>
    %395 = arith.mulf %391, %390 : vector<2x64xf32>
    %396 = arith.addf %394, %395 : vector<2x64xf32>
    %397 = math.tanh %396 : vector<2x64xf32>
    %398 = arith.mulf %393, %397 : vector<2x64xf32>
    %c1_i32_139 = arith.constant 1 : i32
    %399 = arith.truncf %398 : vector<2x64xf32> to vector<2x64xbf16>
    %cst_140 = arith.constant dense<0.000000e+00> : vector<2x256xf32>
    %400 = tpu.matmul %399, %368, %cst_140 {dimension_numbers = #tpu.dot_dimension_numbers<[1], [0], [0], [1], [0, 0, 1, 1], [], []>} : vector<2x64xbf16>, vector<64x256xbf16>, vector<2x256xf32> -> vector<2x256xf32>
    %401 = arith.index_cast %c1_i32_139 : i32 to index
    %c0_141 = arith.constant 0 : index
    %c0_142 = arith.constant 0 : index
    %402 = vector.load %arg11[%401, %c0_141, %c0_142] : memref<8x2x256xf32, #tpu.memory_space<vmem>>, vector<1x2x256xf32>
    %403 = vector.shape_cast %402 : vector<1x2x256xf32> to vector<2x256xf32>
    %c7_i32_143 = arith.constant 7 : i32
    %404 = arith.subi %c7_i32_143, %c1_i32_139 : i32
    %405 = arith.index_cast %404 : i32 to index
    %c0_144 = arith.constant 0 : index
    %c0_145 = arith.constant 0 : index
    %406 = vector.load %arg11[%405, %c0_144, %c0_145] : memref<8x2x256xf32, #tpu.memory_space<vmem>>, vector<1x2x256xf32>
    %407 = vector.shape_cast %406 : vector<1x2x256xf32> to vector<2x256xf32>
    %408 = vector.shape_cast %18 : vector<1x256xi1> to vector<1x256xi1>
    %409 = vector.broadcast %408 : vector<1x256xi1> to vector<2x256xi1>
    %410 = arith.select %409, %403, %407 : vector<2x256xi1>, vector<2x256xf32>
    %411 = arith.addf %400, %410 : vector<2x256xf32>
    %412 = vector.extract_strided_slice %411 {offsets = [0, 0], sizes = [2, 192], strides = [1, 1]} : vector<2x256xf32> to vector<2x192xf32>
    %413 = arith.negf %412 : vector<2x192xf32>
    %414 = math.exp %413 : vector<2x192xf32>
    %cst_146 = arith.constant 1.000000e+00 : f32
    %415 = vector.broadcast %cst_146 : f32 to vector<2x192xf32>
    %416 = arith.addf %415, %414 : vector<2x192xf32>
    %417 = arith.divf %415, %416 : vector<2x192xf32>
    %418 = vector.extract_strided_slice %411 {offsets = [0, 192], sizes = [2, 64], strides = [1, 1]} : vector<2x256xf32> to vector<2x64xf32>
    %419 = math.tanh %418 : vector<2x64xf32>
    %420 = vector.extract_strided_slice %417 {offsets = [0, 0], sizes = [2, 64], strides = [1, 1]} : vector<2x192xf32> to vector<2x64xf32>
    %421 = vector.extract_strided_slice %417 {offsets = [0, 64], sizes = [2, 64], strides = [1, 1]} : vector<2x192xf32> to vector<2x64xf32>
    %422 = vector.extract_strided_slice %417 {offsets = [0, 128], sizes = [2, 64], strides = [1, 1]} : vector<2x192xf32> to vector<2x64xf32>
    %423 = arith.mulf %421, %396 : vector<2x64xf32>
    %424 = arith.mulf %420, %419 : vector<2x64xf32>
    %425 = arith.addf %423, %424 : vector<2x64xf32>
    %426 = math.tanh %425 : vector<2x64xf32>
    %427 = arith.mulf %422, %426 : vector<2x64xf32>
    %c2_i32_147 = arith.constant 2 : i32
    %428 = arith.truncf %427 : vector<2x64xf32> to vector<2x64xbf16>
    %cst_148 = arith.constant dense<0.000000e+00> : vector<2x256xf32>
    %429 = tpu.matmul %428, %368, %cst_148 {dimension_numbers = #tpu.dot_dimension_numbers<[1], [0], [0], [1], [0, 0, 1, 1], [], []>} : vector<2x64xbf16>, vector<64x256xbf16>, vector<2x256xf32> -> vector<2x256xf32>
    %430 = arith.index_cast %c2_i32_147 : i32 to index
    %c0_149 = arith.constant 0 : index
    %c0_150 = arith.constant 0 : index
    %431 = vector.load %arg11[%430, %c0_149, %c0_150] : memref<8x2x256xf32, #tpu.memory_space<vmem>>, vector<1x2x256xf32>
    %432 = vector.shape_cast %431 : vector<1x2x256xf32> to vector<2x256xf32>
    %c7_i32_151 = arith.constant 7 : i32
    %433 = arith.subi %c7_i32_151, %c2_i32_147 : i32
    %434 = arith.index_cast %433 : i32 to index
    %c0_152 = arith.constant 0 : index
    %c0_153 = arith.constant 0 : index
    %435 = vector.load %arg11[%434, %c0_152, %c0_153] : memref<8x2x256xf32, #tpu.memory_space<vmem>>, vector<1x2x256xf32>
    %436 = vector.shape_cast %435 : vector<1x2x256xf32> to vector<2x256xf32>
    %437 = vector.shape_cast %18 : vector<1x256xi1> to vector<1x256xi1>
    %438 = vector.broadcast %437 : vector<1x256xi1> to vector<2x256xi1>
    %439 = arith.select %438, %432, %436 : vector<2x256xi1>, vector<2x256xf32>
    %440 = arith.addf %429, %439 : vector<2x256xf32>
    %441 = vector.extract_strided_slice %440 {offsets = [0, 0], sizes = [2, 192], strides = [1, 1]} : vector<2x256xf32> to vector<2x192xf32>
    %442 = arith.negf %441 : vector<2x192xf32>
    %443 = math.exp %442 : vector<2x192xf32>
    %cst_154 = arith.constant 1.000000e+00 : f32
    %444 = vector.broadcast %cst_154 : f32 to vector<2x192xf32>
    %445 = arith.addf %444, %443 : vector<2x192xf32>
    %446 = arith.divf %444, %445 : vector<2x192xf32>
    %447 = vector.extract_strided_slice %440 {offsets = [0, 192], sizes = [2, 64], strides = [1, 1]} : vector<2x256xf32> to vector<2x64xf32>
    %448 = math.tanh %447 : vector<2x64xf32>
    %449 = vector.extract_strided_slice %446 {offsets = [0, 0], sizes = [2, 64], strides = [1, 1]} : vector<2x192xf32> to vector<2x64xf32>
    %450 = vector.extract_strided_slice %446 {offsets = [0, 64], sizes = [2, 64], strides = [1, 1]} : vector<2x192xf32> to vector<2x64xf32>
    %451 = vector.extract_strided_slice %446 {offsets = [0, 128], sizes = [2, 64], strides = [1, 1]} : vector<2x192xf32> to vector<2x64xf32>
    %452 = arith.mulf %450, %425 : vector<2x64xf32>
    %453 = arith.mulf %449, %448 : vector<2x64xf32>
    %454 = arith.addf %452, %453 : vector<2x64xf32>
    %455 = math.tanh %454 : vector<2x64xf32>
    %456 = arith.mulf %451, %455 : vector<2x64xf32>
    %c3_i32_155 = arith.constant 3 : i32
    %457 = arith.truncf %456 : vector<2x64xf32> to vector<2x64xbf16>
    %cst_156 = arith.constant dense<0.000000e+00> : vector<2x256xf32>
    %458 = tpu.matmul %457, %368, %cst_156 {dimension_numbers = #tpu.dot_dimension_numbers<[1], [0], [0], [1], [0, 0, 1, 1], [], []>} : vector<2x64xbf16>, vector<64x256xbf16>, vector<2x256xf32> -> vector<2x256xf32>
    %459 = arith.index_cast %c3_i32_155 : i32 to index
    %c0_157 = arith.constant 0 : index
    %c0_158 = arith.constant 0 : index
    %460 = vector.load %arg11[%459, %c0_157, %c0_158] : memref<8x2x256xf32, #tpu.memory_space<vmem>>, vector<1x2x256xf32>
    %461 = vector.shape_cast %460 : vector<1x2x256xf32> to vector<2x256xf32>
    %c7_i32_159 = arith.constant 7 : i32
    %462 = arith.subi %c7_i32_159, %c3_i32_155 : i32
    %463 = arith.index_cast %462 : i32 to index
    %c0_160 = arith.constant 0 : index
    %c0_161 = arith.constant 0 : index
    %464 = vector.load %arg11[%463, %c0_160, %c0_161] : memref<8x2x256xf32, #tpu.memory_space<vmem>>, vector<1x2x256xf32>
    %465 = vector.shape_cast %464 : vector<1x2x256xf32> to vector<2x256xf32>
    %466 = vector.shape_cast %18 : vector<1x256xi1> to vector<1x256xi1>
    %467 = vector.broadcast %466 : vector<1x256xi1> to vector<2x256xi1>
    %468 = arith.select %467, %461, %465 : vector<2x256xi1>, vector<2x256xf32>
    %469 = arith.addf %458, %468 : vector<2x256xf32>
    %470 = vector.extract_strided_slice %469 {offsets = [0, 0], sizes = [2, 192], strides = [1, 1]} : vector<2x256xf32> to vector<2x192xf32>
    %471 = arith.negf %470 : vector<2x192xf32>
    %472 = math.exp %471 : vector<2x192xf32>
    %cst_162 = arith.constant 1.000000e+00 : f32
    %473 = vector.broadcast %cst_162 : f32 to vector<2x192xf32>
    %474 = arith.addf %473, %472 : vector<2x192xf32>
    %475 = arith.divf %473, %474 : vector<2x192xf32>
    %476 = vector.extract_strided_slice %469 {offsets = [0, 192], sizes = [2, 64], strides = [1, 1]} : vector<2x256xf32> to vector<2x64xf32>
    %477 = math.tanh %476 : vector<2x64xf32>
    %478 = vector.extract_strided_slice %475 {offsets = [0, 0], sizes = [2, 64], strides = [1, 1]} : vector<2x192xf32> to vector<2x64xf32>
    %479 = vector.extract_strided_slice %475 {offsets = [0, 64], sizes = [2, 64], strides = [1, 1]} : vector<2x192xf32> to vector<2x64xf32>
    %480 = vector.extract_strided_slice %475 {offsets = [0, 128], sizes = [2, 64], strides = [1, 1]} : vector<2x192xf32> to vector<2x64xf32>
    %481 = arith.mulf %479, %454 : vector<2x64xf32>
    %482 = arith.mulf %478, %477 : vector<2x64xf32>
    %483 = arith.addf %481, %482 : vector<2x64xf32>
    %484 = math.tanh %483 : vector<2x64xf32>
    %485 = arith.mulf %480, %484 : vector<2x64xf32>
    %c4_i32_163 = arith.constant 4 : i32
    %486 = arith.truncf %485 : vector<2x64xf32> to vector<2x64xbf16>
    %cst_164 = arith.constant dense<0.000000e+00> : vector<2x256xf32>
    %487 = tpu.matmul %486, %368, %cst_164 {dimension_numbers = #tpu.dot_dimension_numbers<[1], [0], [0], [1], [0, 0, 1, 1], [], []>} : vector<2x64xbf16>, vector<64x256xbf16>, vector<2x256xf32> -> vector<2x256xf32>
    %488 = arith.index_cast %c4_i32_163 : i32 to index
    %c0_165 = arith.constant 0 : index
    %c0_166 = arith.constant 0 : index
    %489 = vector.load %arg11[%488, %c0_165, %c0_166] : memref<8x2x256xf32, #tpu.memory_space<vmem>>, vector<1x2x256xf32>
    %490 = vector.shape_cast %489 : vector<1x2x256xf32> to vector<2x256xf32>
    %c7_i32_167 = arith.constant 7 : i32
    %491 = arith.subi %c7_i32_167, %c4_i32_163 : i32
    %492 = arith.index_cast %491 : i32 to index
    %c0_168 = arith.constant 0 : index
    %c0_169 = arith.constant 0 : index
    %493 = vector.load %arg11[%492, %c0_168, %c0_169] : memref<8x2x256xf32, #tpu.memory_space<vmem>>, vector<1x2x256xf32>
    %494 = vector.shape_cast %493 : vector<1x2x256xf32> to vector<2x256xf32>
    %495 = vector.shape_cast %18 : vector<1x256xi1> to vector<1x256xi1>
    %496 = vector.broadcast %495 : vector<1x256xi1> to vector<2x256xi1>
    %497 = arith.select %496, %490, %494 : vector<2x256xi1>, vector<2x256xf32>
    %498 = arith.addf %487, %497 : vector<2x256xf32>
    %499 = vector.extract_strided_slice %498 {offsets = [0, 0], sizes = [2, 192], strides = [1, 1]} : vector<2x256xf32> to vector<2x192xf32>
    %500 = arith.negf %499 : vector<2x192xf32>
    %501 = math.exp %500 : vector<2x192xf32>
    %cst_170 = arith.constant 1.000000e+00 : f32
    %502 = vector.broadcast %cst_170 : f32 to vector<2x192xf32>
    %503 = arith.addf %502, %501 : vector<2x192xf32>
    %504 = arith.divf %502, %503 : vector<2x192xf32>
    %505 = vector.extract_strided_slice %498 {offsets = [0, 192], sizes = [2, 64], strides = [1, 1]} : vector<2x256xf32> to vector<2x64xf32>
    %506 = math.tanh %505 : vector<2x64xf32>
    %507 = vector.extract_strided_slice %504 {offsets = [0, 0], sizes = [2, 64], strides = [1, 1]} : vector<2x192xf32> to vector<2x64xf32>
    %508 = vector.extract_strided_slice %504 {offsets = [0, 64], sizes = [2, 64], strides = [1, 1]} : vector<2x192xf32> to vector<2x64xf32>
    %509 = vector.extract_strided_slice %504 {offsets = [0, 128], sizes = [2, 64], strides = [1, 1]} : vector<2x192xf32> to vector<2x64xf32>
    %510 = arith.mulf %508, %483 : vector<2x64xf32>
    %511 = arith.mulf %507, %506 : vector<2x64xf32>
    %512 = arith.addf %510, %511 : vector<2x64xf32>
    %513 = math.tanh %512 : vector<2x64xf32>
    %514 = arith.mulf %509, %513 : vector<2x64xf32>
    %c5_i32_171 = arith.constant 5 : i32
    %515 = arith.truncf %514 : vector<2x64xf32> to vector<2x64xbf16>
    %cst_172 = arith.constant dense<0.000000e+00> : vector<2x256xf32>
    %516 = tpu.matmul %515, %368, %cst_172 {dimension_numbers = #tpu.dot_dimension_numbers<[1], [0], [0], [1], [0, 0, 1, 1], [], []>} : vector<2x64xbf16>, vector<64x256xbf16>, vector<2x256xf32> -> vector<2x256xf32>
    %517 = arith.index_cast %c5_i32_171 : i32 to index
    %c0_173 = arith.constant 0 : index
    %c0_174 = arith.constant 0 : index
    %518 = vector.load %arg11[%517, %c0_173, %c0_174] : memref<8x2x256xf32, #tpu.memory_space<vmem>>, vector<1x2x256xf32>
    %519 = vector.shape_cast %518 : vector<1x2x256xf32> to vector<2x256xf32>
    %c7_i32_175 = arith.constant 7 : i32
    %520 = arith.subi %c7_i32_175, %c5_i32_171 : i32
    %521 = arith.index_cast %520 : i32 to index
    %c0_176 = arith.constant 0 : index
    %c0_177 = arith.constant 0 : index
    %522 = vector.load %arg11[%521, %c0_176, %c0_177] : memref<8x2x256xf32, #tpu.memory_space<vmem>>, vector<1x2x256xf32>
    %523 = vector.shape_cast %522 : vector<1x2x256xf32> to vector<2x256xf32>
    %524 = vector.shape_cast %18 : vector<1x256xi1> to vector<1x256xi1>
    %525 = vector.broadcast %524 : vector<1x256xi1> to vector<2x256xi1>
    %526 = arith.select %525, %519, %523 : vector<2x256xi1>, vector<2x256xf32>
    %527 = arith.addf %516, %526 : vector<2x256xf32>
    %528 = vector.extract_strided_slice %527 {offsets = [0, 0], sizes = [2, 192], strides = [1, 1]} : vector<2x256xf32> to vector<2x192xf32>
    %529 = arith.negf %528 : vector<2x192xf32>
    %530 = math.exp %529 : vector<2x192xf32>
    %cst_178 = arith.constant 1.000000e+00 : f32
    %531 = vector.broadcast %cst_178 : f32 to vector<2x192xf32>
    %532 = arith.addf %531, %530 : vector<2x192xf32>
    %533 = arith.divf %531, %532 : vector<2x192xf32>
    %534 = vector.extract_strided_slice %527 {offsets = [0, 192], sizes = [2, 64], strides = [1, 1]} : vector<2x256xf32> to vector<2x64xf32>
    %535 = math.tanh %534 : vector<2x64xf32>
    %536 = vector.extract_strided_slice %533 {offsets = [0, 0], sizes = [2, 64], strides = [1, 1]} : vector<2x192xf32> to vector<2x64xf32>
    %537 = vector.extract_strided_slice %533 {offsets = [0, 64], sizes = [2, 64], strides = [1, 1]} : vector<2x192xf32> to vector<2x64xf32>
    %538 = vector.extract_strided_slice %533 {offsets = [0, 128], sizes = [2, 64], strides = [1, 1]} : vector<2x192xf32> to vector<2x64xf32>
    %539 = arith.mulf %537, %512 : vector<2x64xf32>
    %540 = arith.mulf %536, %535 : vector<2x64xf32>
    %541 = arith.addf %539, %540 : vector<2x64xf32>
    %542 = math.tanh %541 : vector<2x64xf32>
    %543 = arith.mulf %538, %542 : vector<2x64xf32>
    %c6_i32_179 = arith.constant 6 : i32
    %544 = arith.truncf %543 : vector<2x64xf32> to vector<2x64xbf16>
    %cst_180 = arith.constant dense<0.000000e+00> : vector<2x256xf32>
    %545 = tpu.matmul %544, %368, %cst_180 {dimension_numbers = #tpu.dot_dimension_numbers<[1], [0], [0], [1], [0, 0, 1, 1], [], []>} : vector<2x64xbf16>, vector<64x256xbf16>, vector<2x256xf32> -> vector<2x256xf32>
    %546 = arith.index_cast %c6_i32_179 : i32 to index
    %c0_181 = arith.constant 0 : index
    %c0_182 = arith.constant 0 : index
    %547 = vector.load %arg11[%546, %c0_181, %c0_182] : memref<8x2x256xf32, #tpu.memory_space<vmem>>, vector<1x2x256xf32>
    %548 = vector.shape_cast %547 : vector<1x2x256xf32> to vector<2x256xf32>
    %c7_i32_183 = arith.constant 7 : i32
    %549 = arith.subi %c7_i32_183, %c6_i32_179 : i32
    %550 = arith.index_cast %549 : i32 to index
    %c0_184 = arith.constant 0 : index
    %c0_185 = arith.constant 0 : index
    %551 = vector.load %arg11[%550, %c0_184, %c0_185] : memref<8x2x256xf32, #tpu.memory_space<vmem>>, vector<1x2x256xf32>
    %552 = vector.shape_cast %551 : vector<1x2x256xf32> to vector<2x256xf32>
    %553 = vector.shape_cast %18 : vector<1x256xi1> to vector<1x256xi1>
    %554 = vector.broadcast %553 : vector<1x256xi1> to vector<2x256xi1>
    %555 = arith.select %554, %548, %552 : vector<2x256xi1>, vector<2x256xf32>
    %556 = arith.addf %545, %555 : vector<2x256xf32>
    %557 = vector.extract_strided_slice %556 {offsets = [0, 0], sizes = [2, 192], strides = [1, 1]} : vector<2x256xf32> to vector<2x192xf32>
    %558 = arith.negf %557 : vector<2x192xf32>
    %559 = math.exp %558 : vector<2x192xf32>
    %cst_186 = arith.constant 1.000000e+00 : f32
    %560 = vector.broadcast %cst_186 : f32 to vector<2x192xf32>
    %561 = arith.addf %560, %559 : vector<2x192xf32>
    %562 = arith.divf %560, %561 : vector<2x192xf32>
    %563 = vector.extract_strided_slice %556 {offsets = [0, 192], sizes = [2, 64], strides = [1, 1]} : vector<2x256xf32> to vector<2x64xf32>
    %564 = math.tanh %563 : vector<2x64xf32>
    %565 = vector.extract_strided_slice %562 {offsets = [0, 0], sizes = [2, 64], strides = [1, 1]} : vector<2x192xf32> to vector<2x64xf32>
    %566 = vector.extract_strided_slice %562 {offsets = [0, 64], sizes = [2, 64], strides = [1, 1]} : vector<2x192xf32> to vector<2x64xf32>
    %567 = vector.extract_strided_slice %562 {offsets = [0, 128], sizes = [2, 64], strides = [1, 1]} : vector<2x192xf32> to vector<2x64xf32>
    %568 = arith.mulf %566, %541 : vector<2x64xf32>
    %569 = arith.mulf %565, %564 : vector<2x64xf32>
    %570 = arith.addf %568, %569 : vector<2x64xf32>
    %571 = math.tanh %570 : vector<2x64xf32>
    %572 = arith.mulf %567, %571 : vector<2x64xf32>
    %c7_i32_187 = arith.constant 7 : i32
    %573 = arith.truncf %572 : vector<2x64xf32> to vector<2x64xbf16>
    %cst_188 = arith.constant dense<0.000000e+00> : vector<2x256xf32>
    %574 = tpu.matmul %573, %368, %cst_188 {dimension_numbers = #tpu.dot_dimension_numbers<[1], [0], [0], [1], [0, 0, 1, 1], [], []>} : vector<2x64xbf16>, vector<64x256xbf16>, vector<2x256xf32> -> vector<2x256xf32>
    %575 = arith.index_cast %c7_i32_187 : i32 to index
    %c0_189 = arith.constant 0 : index
    %c0_190 = arith.constant 0 : index
    %576 = vector.load %arg11[%575, %c0_189, %c0_190] : memref<8x2x256xf32, #tpu.memory_space<vmem>>, vector<1x2x256xf32>
    %577 = vector.shape_cast %576 : vector<1x2x256xf32> to vector<2x256xf32>
    %c7_i32_191 = arith.constant 7 : i32
    %578 = arith.subi %c7_i32_191, %c7_i32_187 : i32
    %579 = arith.index_cast %578 : i32 to index
    %c0_192 = arith.constant 0 : index
    %c0_193 = arith.constant 0 : index
    %580 = vector.load %arg11[%579, %c0_192, %c0_193] : memref<8x2x256xf32, #tpu.memory_space<vmem>>, vector<1x2x256xf32>
    %581 = vector.shape_cast %580 : vector<1x2x256xf32> to vector<2x256xf32>
    %582 = vector.shape_cast %18 : vector<1x256xi1> to vector<1x256xi1>
    %583 = vector.broadcast %582 : vector<1x256xi1> to vector<2x256xi1>
    %584 = arith.select %583, %577, %581 : vector<2x256xi1>, vector<2x256xf32>
    %585 = arith.addf %574, %584 : vector<2x256xf32>
    %586 = vector.extract_strided_slice %585 {offsets = [0, 0], sizes = [2, 192], strides = [1, 1]} : vector<2x256xf32> to vector<2x192xf32>
    %587 = arith.negf %586 : vector<2x192xf32>
    %588 = math.exp %587 : vector<2x192xf32>
    %cst_194 = arith.constant 1.000000e+00 : f32
    %589 = vector.broadcast %cst_194 : f32 to vector<2x192xf32>
    %590 = arith.addf %589, %588 : vector<2x192xf32>
    %591 = arith.divf %589, %590 : vector<2x192xf32>
    %592 = vector.extract_strided_slice %585 {offsets = [0, 192], sizes = [2, 64], strides = [1, 1]} : vector<2x256xf32> to vector<2x64xf32>
    %593 = math.tanh %592 : vector<2x64xf32>
    %594 = vector.extract_strided_slice %591 {offsets = [0, 0], sizes = [2, 64], strides = [1, 1]} : vector<2x192xf32> to vector<2x64xf32>
    %595 = vector.extract_strided_slice %591 {offsets = [0, 64], sizes = [2, 64], strides = [1, 1]} : vector<2x192xf32> to vector<2x64xf32>
    %596 = vector.extract_strided_slice %591 {offsets = [0, 128], sizes = [2, 64], strides = [1, 1]} : vector<2x192xf32> to vector<2x64xf32>
    %597 = arith.mulf %595, %570 : vector<2x64xf32>
    %598 = arith.mulf %594, %593 : vector<2x64xf32>
    %599 = arith.addf %597, %598 : vector<2x64xf32>
    %600 = math.tanh %599 : vector<2x64xf32>
    %601 = arith.mulf %596, %600 : vector<2x64xf32>
    %c8_i32_195 = arith.constant 8 : i32
    %c0_196 = arith.constant 0 : index
    %c0_197 = arith.constant 0 : index
    %602 = vector.load %arg8[%c0_196, %c0_197] : memref<64x6xf32, #tpu.memory_space<vmem>>, vector<64x6xf32>
    %cst_198 = arith.constant dense<0.000000e+00> : vector<2x6xf32>
    %603 = tpu.matmul %601, %602, %cst_198 {dimension_numbers = #tpu.dot_dimension_numbers<[1], [0], [0], [1], [0, 0, 1, 1], [], []>} : vector<2x64xf32>, vector<64x6xf32>, vector<2x6xf32> -> vector<2x6xf32>
    %c0_199 = arith.constant 0 : index
    %c0_200 = arith.constant 0 : index
    %604 = vector.load %arg9[%c0_199, %c0_200] : memref<1x6xf32, #tpu.memory_space<vmem>>, vector<1x6xf32>
    %605 = vector.broadcast %604 : vector<1x6xf32> to vector<2x6xf32>
    %606 = arith.addf %603, %605 : vector<2x6xf32>
    %c0_201 = arith.constant 0 : index
    %c0_202 = arith.constant 0 : index
    %607 = vector.load %arg10[%c0_201, %c0_202] : memref<2x6xf32, #tpu.memory_space<vmem>>, vector<2x6xf32>
    tpu.vector_store %arg10[%c0_201, %c0_202], %606 {strides = array<i32>} : memref<2x6xf32, #tpu.memory_space<vmem>>, vector<2x6xf32>,
    return
  }
  func.func @transform_0(%arg0: i32) -> (i32, i32, i32) {
    %c0_i32 = arith.constant 0 : i32
    %c0_i32_0 = arith.constant 0 : i32
    %c0_i32_1 = arith.constant 0 : i32
    return %c0_i32, %arg0, %c0_i32_0 : i32, i32, i32
  }
  func.func @transform_1(%arg0: i32) -> (i32, i32) {
    %c0_i32 = arith.constant 0 : i32
    %c0_i32_0 = arith.constant 0 : i32
    %c0_i32_1 = arith.constant 0 : i32
    return %c0_i32, %c0_i32_0 : i32, i32
  }
  func.func @transform_2(%arg0: i32) -> (i32, i32) {
    %c0_i32 = arith.constant 0 : i32
    %c0_i32_0 = arith.constant 0 : i32
    %c0_i32_1 = arith.constant 0 : i32
    return %c0_i32, %c0_i32_0 : i32, i32
  }
  func.func @transform_3(%arg0: i32) -> (i32, i32) {
    %c0_i32 = arith.constant 0 : i32
    %c0_i32_0 = arith.constant 0 : i32
    %c0_i32_1 = arith.constant 0 : i32
    return %c0_i32, %c0_i32_0 : i32, i32
  }
  func.func @transform_4(%arg0: i32) -> (i32, i32) {
    %c0_i32 = arith.constant 0 : i32
    %c0_i32_0 = arith.constant 0 : i32
    %c0_i32_1 = arith.constant 0 : i32
    return %c0_i32, %c0_i32_0 : i32, i32
  }
  func.func @transform_5(%arg0: i32) -> (i32, i32) {
    %c0_i32 = arith.constant 0 : i32
    %c0_i32_0 = arith.constant 0 : i32
    %c0_i32_1 = arith.constant 0 : i32
    return %c0_i32, %c0_i32_0 : i32, i32
  }
  func.func @transform_6(%arg0: i32) -> (i32, i32) {
    %c0_i32 = arith.constant 0 : i32
    %c0_i32_0 = arith.constant 0 : i32
    %c0_i32_1 = arith.constant 0 : i32
    return %c0_i32, %c0_i32_0 : i32, i32
  }
  func.func @transform_7(%arg0: i32) -> (i32, i32) {
    %c0_i32 = arith.constant 0 : i32
    %c0_i32_0 = arith.constant 0 : i32
    %c0_i32_1 = arith.constant 0 : i32
    return %c0_i32, %c0_i32_0 : i32, i32
  }
  func.func @transform_8(%arg0: i32) -> (i32, i32) {
    %c0_i32 = arith.constant 0 : i32
    %c0_i32_0 = arith.constant 0 : i32
    %c0_i32_1 = arith.constant 0 : i32
    return %c0_i32, %c0_i32_0 : i32, i32
  }
  func.func @transform_9(%arg0: i32) -> (i32, i32) {
    %c0_i32 = arith.constant 0 : i32
    %c0_i32_0 = arith.constant 0 : i32
    return %arg0, %c0_i32 : i32, i32
  }
}

</mosaic_0001>

<llo_original>
// kernel: tpu_custom_call.1
$region0: #{tpu_custom_call.1}
  #allocation0 [shape = 'u32[]', space=smem, size = 0x4, offset = 0x4, fixed_abs, tag = 'smem constant byte address 0x4 - core index']
  #allocation1 [shape = 'u32[144,128]{1,0:T(1,128)}', space=vmem, size = 0x12000, scoped, tag = 'internal scratch']
  #allocation2 [shape = 'f32[8,2,256]{2,1,0:T(2,128)}', space=vmem, size = 0x4000, scoped, tag = 'scratch operand']
  #allocation3 [shape = 'f32[8,2,32]{2,1,0:T(2,128)}', space=vmem, size = 0x2000, scoped, tag = 'scratch operand']
  #allocation4 [shape = 'f32[8,2,32]{2,1,0:T(2,128)}', space=vmem, size = 0x2000, scoped, tag = 'scratch operand']
  %s0 = inlined_call_operand.hbm [shape: f32[8,2,16], index: 0, kind: input, shape index: {}]
  %s1 = inlined_call_operand.hbm [shape: bf16[16,256], index: 1, kind: input, shape index: {}]
  %s2 = inlined_call_operand.vmem [shape: bf16[64,256], index: 2, kind: input, shape index: {}]
  %s3 = inlined_call_operand.vmem [shape: f32[1,256], index: 3, kind: input, shape index: {}]
  %s4 = inlined_call_operand.hbm [shape: bf16[64,256], index: 4, kind: input, shape index: {}]
  %s5 = inlined_call_operand.hbm [shape: bf16[64,256], index: 5, kind: input, shape index: {}]
  %s6 = inlined_call_operand.vmem [shape: f32[1,256], index: 6, kind: input, shape index: {}]
  %s7 = inlined_call_operand.vmem [shape: f32[64,6], index: 7, kind: input, shape index: {}]
  %s8 = inlined_call_operand.vmem [shape: f32[1,6], index: 8, kind: input, shape index: {}]
  %s9 = inlined_call_operand.hbm [shape: f32[2,6], index: 9, kind: output, shape index: {}]
  %s10 = sld [smem:[#allocation0]]
  $region62: #{tpu_custom_call.1} parent=0
    _
  %s12 = ssub.s32 1, %s10
  %s13 = scalar_select 0, %s12, %s10
  $region1: #{tpu_custom_call.1} parent=0
    #allocation5 [shape = 'u8[8192]{0}', space=vmem, size = 0x2000, scoped, tag = 'input window, operand 0, single buffered']
    #allocation6 [shape = 's32[1]{0}', space=sflag, size = 0x4, scoped, tag = 'scoped memory for tpu_custom_call.1']
    #allocation7 [shape = 's32[1]{0}', space=sflag, size = 0x4, scoped, tag = 'scoped memory for tpu_custom_call.1']
    #allocation8 [shape = 'u8[8192]{0}', space=vmem, size = 0x2000, scoped, tag = 'input window, operand 1, single buffered']
    #allocation9 [shape = 's32[1]{0}', space=sflag, size = 0x4, scoped, tag = 'scoped memory for tpu_custom_call.1']
    #allocation10 [shape = 'u8[32768]{0}', space=vmem, size = 0x8000, scoped, tag = 'input window, operand 4, single buffered']
    #allocation11 [shape = 'u8[32768]{0}', space=vmem, size = 0x8000, scoped, tag = 'input window, operand 5, single buffered']
    #allocation12 [shape = 's32[1]{0}', space=sflag, size = 0x4, scoped, tag = 'scoped memory for tpu_custom_call.1']
    #allocation13 [shape = 'u8[1024]{0}', space=vmem, size = 0x400, scoped, tag = 'output window, operand 0, single buffered']
    %14 = vsyncpa [#allocation6], 0
    %15 = vsyncpa [#allocation9], 0
    %16 = vsyncpa [#allocation12], 0
    %17 = vsyncpa [#allocation7], 0
    // Predicated region
    $region2: #{tpu_custom_call.1} parent=1 // pred_check
      _
    $region3: #{tpu_custom_call.1} parent=1 // pred_check_branch
      %19 = sbr.rel (0) target = $region5
    $region4: #{tpu_custom_call.1} parent=1 // pred_region
      %s21 = ssub.s32 256, 256
      %22 = vsyncadd [#allocation6], %s21
      %s23 = sshll.u32 [#allocation5], 4
      %s24 = int_to_ptr.vmem [resolvable:$true] %s23
      %29 = dma.hbm_to_vmem [thread:$0]  %s0, 256, %s24, [#allocation6], 32, 32, 2
    $region5: #{tpu_custom_call.1} parent=1 // pred_fallthru
      _
    // Predicated region
    $region6: #{tpu_custom_call.1} parent=1 // pred_check
      _
    $region7: #{tpu_custom_call.1} parent=1 // pred_check_branch
      %31 = sbr.rel (0) target = $region9
    $region8: #{tpu_custom_call.1} parent=1 // pred_region
      %s33 = ssub.s32 256, 256
      %34 = vsyncadd [#allocation9], %s33
      %s35 = sshll.u32 [#allocation8], 4
      %s36 = int_to_ptr.vmem [resolvable:$true] %s35
      %41 = dma.hbm_to_vmem [thread:$0]  %s1, 256, %s36, [#allocation9], 128, 128, 8
    $region9: #{tpu_custom_call.1} parent=1 // pred_fallthru
      _
    // Predicated region
    $region10: #{tpu_custom_call.1} parent=1 // pred_check
      _
    $region11: #{tpu_custom_call.1} parent=1 // pred_check_branch
      %43 = sbr.rel (0) target = $region13
    $region12: #{tpu_custom_call.1} parent=1 // pred_region
      _
    $region13: #{tpu_custom_call.1} parent=1 // pred_fallthru
      _
    // Predicated region
    $region14: #{tpu_custom_call.1} parent=1 // pred_check
      _
    $region15: #{tpu_custom_call.1} parent=1 // pred_check_branch
      %45 = sbr.rel (0) target = $region17
    $region16: #{tpu_custom_call.1} parent=1 // pred_region
      _
    $region17: #{tpu_custom_call.1} parent=1 // pred_fallthru
      _
    // Predicated region
    $region18: #{tpu_custom_call.1} parent=1 // pred_check
      _
    $region19: #{tpu_custom_call.1} parent=1 // pred_check_branch
      %47 = sbr.rel (0) target = $region21
    $region20: #{tpu_custom_call.1} parent=1 // pred_region
      %s49 = ssub.s32 1024, 1024
      %50 = vsyncadd [#allocation9], %s49
      %s51 = sshll.u32 [#allocation10], 4
      %s52 = int_to_ptr.vmem [resolvable:$true] %s51
      %57 = dma.hbm_to_vmem [thread:$0]  %s4, 1024, %s52, [#allocation9], 128, 128, 8
    $region21: #{tpu_custom_call.1} parent=1 // pred_fallthru
      _
    // Predicated region
    $region22: #{tpu_custom_call.1} parent=1 // pred_check
      _
    $region23: #{tpu_custom_call.1} parent=1 // pred_check_branch
      %59 = sbr.rel (0) target = $region25
    $region24: #{tpu_custom_call.1} parent=1 // pred_region
      %s61 = ssub.s32 1024, 1024
      %62 = vsyncadd [#allocation12], %s61
      %s63 = sshll.u32 [#allocation11], 4
      %s64 = int_to_ptr.vmem [resolvable:$true] %s63
      %69 = dma.hbm_to_vmem [thread:$0]  %s5, 1024, %s64, [#allocation12], 128, 128, 8
    $region25: #{tpu_custom_call.1} parent=1 // pred_fallthru
      _
    // Predicated region
    $region26: #{tpu_custom_call.1} parent=1 // pred_check
      _
    $region27: #{tpu_custom_call.1} parent=1 // pred_check_branch
      %71 = sbr.rel (0) target = $region29
    $region28: #{tpu_custom_call.1} parent=1 // pred_region
      _
    $region29: #{tpu_custom_call.1} parent=1 // pred_fallthru
      _
    // Predicated region
    $region30: #{tpu_custom_call.1} parent=1 // pred_check
      _
    $region31: #{tpu_custom_call.1} parent=1 // pred_check_branch
      %73 = sbr.rel (0) target = $region33
    $region32: #{tpu_custom_call.1} parent=1 // pred_region
      _
    $region33: #{tpu_custom_call.1} parent=1 // pred_fallthru
      _
    // Predicated region
    $region34: #{tpu_custom_call.1} parent=1 // pred_check
      _
    $region35: #{tpu_custom_call.1} parent=1 // pred_check_branch
      %75 = sbr.rel (0) target = $region37
    $region36: #{tpu_custom_call.1} parent=1 // pred_region
      _
    $region37: #{tpu_custom_call.1} parent=1 // pred_fallthru
      _
    // Predicated region
    $region38: #{tpu_custom_call.1} parent=1 // pred_check
      _
    $region39: #{tpu_custom_call.1} parent=1 // pred_check_branch
      %77 = sbr.rel (0) target = $region41
    $region40: #{tpu_custom_call.1} parent=1 // pred_region
      %78 = dma.done [#allocation6], 256
    $region41: #{tpu_custom_call.1} parent=1 // pred_fallthru
      _
    // Predicated region
    $region42: #{tpu_custom_call.1} parent=1 // pred_check
      _
    $region43: #{tpu_custom_call.1} parent=1 // pred_check_branch
      %80 = sbr.rel (0) target = $region45
    $region44: #{tpu_custom_call.1} parent=1 // pred_region
      %81 = dma.done [#allocation9], 256
    $region45: #{tpu_custom_call.1} parent=1 // pred_fallthru
      _
    // Predicated region
    $region46: #{tpu_custom_call.1} parent=1 // pred_check
      _
    $region47: #{tpu_custom_call.1} parent=1 // pred_check_branch
      %83 = sbr.rel (0) target = $region49
    $region48: #{tpu_custom_call.1} parent=1 // pred_region
      %84 = dma.done [#allocation9], 1024
    $region49: #{tpu_custom_call.1} parent=1 // pred_fallthru
      _
    // Predicated region
    $region50: #{tpu_custom_call.1} parent=1 // pred_check
      _
    $region51: #{tpu_custom_call.1} parent=1 // pred_check_branch
      %86 = sbr.rel (0) target = $region53
    $region52: #{tpu_custom_call.1} parent=1 // pred_region
      %87 = dma.done [#allocation12], 1024
    $region53: #{tpu_custom_call.1} parent=1 // pred_fallthru
      _
    %v89 = vlaneseq
    %v90 = vand.u32 %v89, 127
    %v91 = vadd.s32 %v90, 128
    %vm92 = vcmp.lt.s32.totalorder %v90, 0
    %v93 = vsub.s32 0, %v90
    %v94 = vsel %vm92, %v93, %v90
    %v95 = vshrl.u32 %v94, 6
    %v96 = vand.u32 %v94, 63
    %v97 = vsub.s32 0, %v96
    %v98 = vsel %vm92, %v97, %v96
    %vm99 = vcmp.lt.s32.totalorder %v91, 0
    %v100 = vsub.s32 0, %v91
    %v101 = vsel %vm99, %v100, %v91
    %v102 = vshrl.u32 %v101, 6
    %v103 = vand.u32 %v101, 63
    %v104 = vsub.s32 0, %v103
    %v105 = vsel %vm99, %v104, %v103
    %vm106 = vcmp.ne.s32.totalorder %v98, 0
    %vm107 = vcmp.ne.s32.totalorder %v105, 0
    %vm108 = vcmp.lt.s32.totalorder %v98, 0
    %vm109 = vcmp.lt.s32.totalorder %v105, 0
    %vm110 = vmand %vm108, %vm106
    %vm111 = vmand %vm109, %vm107
    %v112 = vadd.s32 %v98, 64
    %v113 = vadd.s32 %v105, 64
    %v114 = vsel %vm110, %v112, %v98
    %v115 = vsel %vm111, %v113, %v105
    %vm116 = vcmp.lt.s32.totalorder %v114, 32
    %vm117 = vcmp.lt.s32.totalorder %v115, 32
    %v118 = vld [vmem:[#allocation5] sm:$0x3]
    %v119 = vld [vmem:[#allocation5 + $0x2] sm:$0x3]
    %v120 = vld [vmem:[#allocation5 + $0x4] sm:$0x3]
    %v121 = vld [vmem:[#allocation5 + $0x6] sm:$0x3]
    %v122 = vld [vmem:[#allocation5 + $0x8] sm:$0x3]
    %v123 = vld [vmem:[#allocation5 + $0xa] sm:$0x3]
    %v124 = vld [vmem:[#allocation5 + $0xc] sm:$0x3]
    %v125 = vld [vmem:[#allocation5 + $0xe] sm:$0x3]
    %v134 = vcombine.low %v118, %v119
    %v135 = vcombine.low %v120, %v121
    %v137 = vunpack.c.l.s4 1983009808
    %v138 = vunpack.c.0.s8 %v137
    %v139 = vlaneseq
    %v140 = vshrl.u32 %v139, 7
    %v141 = vsub.s32 %v138, %v140
    %v142 = vrot.slane %v134, %v141
    %v144 = vunpack.c.l.s4 1983009808
    %v145 = vunpack.c.0.s8 %v144
    %v146 = vlaneseq
    %v147 = vshrl.u32 %v146, 7
    %v148 = vsub.s32 %v145, %v147
    %v149 = vrot.slane %v135, %v148
    %v150 = vcombine.low %v142, %v149
    %v151 = vcombine.low %v122, %v123
    %v152 = vcombine.low %v124, %v125
    %v154 = vunpack.c.l.s4 1983009808
    %v155 = vunpack.c.0.s8 %v154
    %v156 = vlaneseq
    %v157 = vshrl.u32 %v156, 7
    %v158 = vsub.s32 %v155, %v157
    %v159 = vrot.slane %v151, %v158
    %v161 = vunpack.c.l.s4 1983009808
    %v162 = vunpack.c.0.s8 %v161
    %v163 = vlaneseq
    %v164 = vshrl.u32 %v163, 7
    %v165 = vsub.s32 %v162, %v164
    %v166 = vrot.slane %v152, %v165
    %v167 = vcombine.low %v159, %v166
    %v170 = vpack.c.bf16 %v167, %v150
    %v171 = vld [vmem:[#allocation8] sm:$0xff]
    %v172 = vld [vmem:[#allocation8 + $0x8] sm:$0xff]
    %v173 = vld [vmem:[%s3] sm:$0x3]
    %v175 = vlaneseq
    %v176 = vshrl.u32 %v175, 7
    %v177 = vsub.s32 0, %v176
    %v178 = vrot.slane %v173, %v177
    %v179 = vlaneseq
    %v180 = vshrl.u32 %v179, 7
    %v181 = vsub.s32 1, %v180
    %v182 = vrot.slane %v173, %v181
    %v187 = vunpack.c.l.b16 %v171
    %v188 = vunpack.c.h.b16 %v171
    %v189 = vunpack.c.l.b16 %v172
    %v190 = vunpack.c.h.b16 %v172
    %v191 = vpack.c.b16 %v189, %v187
    %v192 = vpack.c.b16 %v190, %v188
    %vm195 = vcmask 130048
    %v197 = vsel %vm195, %v170, 0
    %199 = vmatprep.subr.bf16.mxu0 0
    %200 = vmatpush1.bf16.msra.mxu0 0
    %201 = vmatprep.subr.bf16.mxu0 0
    %202 = vmatpush1.bf16.msra.mxu0 0
    %203 = vmatprep.subr.bf16.mxu0 0
    %204 = vmatpush1.bf16.msra.mxu0 0
    %205 = vmatprep.subr.bf16.mxu0 0
    %206 = vmatpush1.bf16.msra.mxu0 0
    %207 = vmatprep.subr.bf16.mxu0 0
    %208 = vmatpush1.bf16.msra.mxu0 0
    %209 = vmatprep.subr.bf16.mxu0 0
    %210 = vmatpush1.bf16.msra.mxu0 0
    %211 = vmatprep.subr.bf16.mxu0 0
    %212 = vmatpush1.bf16.msra.mxu0 0
    %213 = vmatprep.subr.bf16.mxu0 %v192
    %214 = vmatpush1.bf16.msra.mxu0 %v191
    %215 = vmatprep.subr.bf16.mxu0 0
    %216 = vmatpush2.bf16.msra.mxu0 0
    %217 = vmatprep.subr.bf16.mxu0 0
    %218 = vmatpush2.bf16.msra.mxu0 0
    %219 = vmatprep.subr.bf16.mxu0 0
    %220 = vmatpush2.bf16.msra.mxu0 0
    %221 = vmatprep.subr.bf16.mxu0 0
    %222 = vmatpush2.bf16.msra.mxu0 0
    %223 = vmatprep.subr.bf16.mxu0 0
    %224 = vmatpush2.bf16.msra.mxu0 0
    %225 = vmatprep.subr.bf16.mxu0 0
    %226 = vmatpush2.bf16.msra.mxu0 0
    %227 = vmatprep.subr.bf16.mxu0 0
    %228 = vmatpush2.bf16.msra.mxu0 0
    %229 = vmatprep.subr.bf16.mxu0 0
    %230 = vmatpush2.bf16.msra.mxu0 0
    %231 = vmatprep.mubr.bf16.mxu0 0
    %232 = vmatmul.mubr.bf16.gmra.mxu0 %v197
    %v233 = vpop.f32.mrf.mxu0
    %v234 = vadd.f32 %v178, %v233
    %v235 = vpop.f32.mrf.mxu0
    %v236 = vadd.f32 %v182, %v235
    %v237 = vpop.f32.mrf.mxu0
    %v238 = vadd.f32 %v178, %v237
    %v239 = vpop.f32.mrf.mxu0
    %v240 = vadd.f32 %v182, %v239
    %241 = vdwg.mxu0
    %v246 = vcombine.low %v234, %v236
    %v247 = vcombine.high %v234, %v236
    %v249 = vunpack.c.l.s4 1983009808
    %v250 = vunpack.c.0.s8 %v249
    %v251 = vlaneseq
    %v252 = vshrl.u32 %v251, 7
    %v253 = vsub.s32 %v250, %v252
    %v254 = vrot.slane %v246, %v253
    %v256 = vunpack.c.l.s4 1983009808
    %v257 = vunpack.c.0.s8 %v256
    %v258 = vlaneseq
    %v259 = vshrl.u32 %v258, 7
    %v260 = vsub.s32 %v257, %v259
    %v261 = vrot.slane %v247, %v260
    %v262 = vcombine.high %v254, %v254
    %v263 = vcombine.high %v261, %v261
    %v264 = vcombine.low %v238, %v240
    %v265 = vcombine.high %v238, %v240
    %v267 = vunpack.c.l.s4 1983009808
    %v268 = vunpack.c.0.s8 %v267
    %v269 = vlaneseq
    %v270 = vshrl.u32 %v269, 7
    %v271 = vsub.s32 %v268, %v270
    %v272 = vrot.slane %v264, %v271
    %v274 = vunpack.c.l.s4 1983009808
    %v275 = vunpack.c.0.s8 %v274
    %v276 = vlaneseq
    %v277 = vshrl.u32 %v276, 7
    %v278 = vsub.s32 %v275, %v277
    %v279 = vrot.slane %v265, %v278
    %v280 = vcombine.high %v272, %v272
    %v281 = vcombine.high %v279, %v279
    %290 = vst [vmem:[#allocation2] sm:$0xf] %v254
    %291 = vst [vmem:[#allocation2 + $0x4] sm:$0xf] %v262
    %292 = vst [vmem:[#allocation2 + $0x8] sm:$0xf] %v261
    %293 = vst [vmem:[#allocation2 + $0xc] sm:$0xf] %v263
    %294 = vst [vmem:[#allocation2 + $0x10] sm:$0xf] %v272
    %295 = vst [vmem:[#allocation2 + $0x14] sm:$0xf] %v280
    %296 = vst [vmem:[#allocation2 + $0x18] sm:$0xf] %v279
    %297 = vst [vmem:[#allocation2 + $0x1c] sm:$0xf] %v281
    %v298 = vld [vmem:[%s2] sm:$0xff]
    %v299 = vld [vmem:[%s2 + $0x8] sm:$0xff]
    %v300 = vld [vmem:[%s2 + $0x10] sm:$0xff]
    %v301 = vld [vmem:[%s2 + $0x18] sm:$0xff]
    %v302 = vld [vmem:[%s2 + $0x20] sm:$0xff]
    %v303 = vld [vmem:[%s2 + $0x28] sm:$0xff]
    %v304 = vld [vmem:[%s2 + $0x30] sm:$0xff]
    %v305 = vld [vmem:[%s2 + $0x38] sm:$0xff]
    %v306 = vld [vmem:[#allocation2] sm:$0xf]
    %s307 = scalar_lea.vmem [#allocation2], 28
    %v308 = vld [vmem:[%s307] sm:$0xf]
    %v309 = vsel %vm116, 1, 0
    %v310 = vsel %vm117, 1, 0
    %vm311 = vcmp.eq.s32.totalorder %v309, 1
    %vm312 = vcmp.eq.s32.totalorder %v310, 1
    %v315 = vunpack.c.l.s4 1983009808
    %v316 = vunpack.c.0.s8 %v315
    %v317 = vlaneseq
    %v318 = vshrl.u32 %v317, 7
    %v319 = vsub.s32 %v316, %v318
    %v320 = vrot.slane %v306, %v319
    %v321 = vcombine.high %v320, %v320
    %v326 = vunpack.c.l.s4 1983009808
    %v327 = vunpack.c.0.s8 %v326
    %v328 = vlaneseq
    %v329 = vshrl.u32 %v328, 7
    %v330 = vsub.s32 %v327, %v329
    %v331 = vrot.slane %v308, %v330
    %v332 = vcombine.high %v331, %v331
    %v335 = vsel %vm311, %v320, %v331
    %v336 = vsel %vm312, %v321, %v332
    %v345 = vunpack.c.l.b16 %v298
    %v346 = vunpack.c.h.b16 %v298
    %v347 = vunpack.c.l.b16 %v299
    %v348 = vunpack.c.h.b16 %v299
    %v349 = vunpack.c.l.b16 %v300
    %v350 = vunpack.c.h.b16 %v300
    %v351 = vunpack.c.l.b16 %v301
    %v352 = vunpack.c.h.b16 %v301
    %v353 = vunpack.c.l.b16 %v302
    %v354 = vunpack.c.h.b16 %v302
    %v355 = vunpack.c.l.b16 %v303
    %v356 = vunpack.c.h.b16 %v303
    %v357 = vunpack.c.l.b16 %v304
    %v358 = vunpack.c.h.b16 %v304
    %v359 = vunpack.c.l.b16 %v305
    %v360 = vunpack.c.h.b16 %v305
    %v361 = vpack.c.b16 %v347, %v345
    %v362 = vpack.c.b16 %v348, %v346
    %v363 = vpack.c.b16 %v351, %v349
    %v364 = vpack.c.b16 %v352, %v350
    %v365 = vpack.c.b16 %v355, %v353
    %v366 = vpack.c.b16 %v356, %v354
    %v367 = vpack.c.b16 %v359, %v357
    %v368 = vpack.c.b16 %v360, %v358
    %vm377 = vcmask 523264
    %v379 = vsel %vm377, 0, 0
    %381 = vmatprep.subr.bf16.mxu0 0
    %382 = vmatpush1.bf16.msra.mxu0 0
    %383 = vmatprep.subr.bf16.mxu0 0
    %384 = vmatpush1.bf16.msra.mxu0 0
    %385 = vmatprep.subr.bf16.mxu0 0
    %386 = vmatpush1.bf16.msra.mxu0 0
    %387 = vmatprep.subr.bf16.mxu0 0
    %388 = vmatpush1.bf16.msra.mxu0 0
    %389 = vmatprep.subr.bf16.mxu0 %v368
    %390 = vmatpush1.bf16.msra.mxu0 %v367
    %391 = vmatprep.subr.bf16.mxu0 %v366
    %392 = vmatpush1.bf16.msra.mxu0 %v365
    %393 = vmatprep.subr.bf16.mxu0 %v364
    %394 = vmatpush1.bf16.msra.mxu0 %v363
    %395 = vmatprep.subr.bf16.mxu0 %v362
    %396 = vmatpush1.bf16.msra.mxu0 %v361
    %397 = vmatprep.subr.bf16.mxu0 0
    %398 = vmatpush2.bf16.msra.mxu0 0
    %399 = vmatprep.subr.bf16.mxu0 0
    %400 = vmatpush2.bf16.msra.mxu0 0
    %401 = vmatprep.subr.bf16.mxu0 0
    %402 = vmatpush2.bf16.msra.mxu0 0
    %403 = vmatprep.subr.bf16.mxu0 0
    %404 = vmatpush2.bf16.msra.mxu0 0
    %405 = vmatprep.subr.bf16.mxu0 0
    %406 = vmatpush2.bf16.msra.mxu0 0
    %407 = vmatprep.subr.bf16.mxu0 0
    %408 = vmatpush2.bf16.msra.mxu0 0
    %409 = vmatprep.subr.bf16.mxu0 0
    %410 = vmatpush2.bf16.msra.mxu0 0
    %411 = vmatprep.subr.bf16.mxu0 0
    %412 = vmatpush2.bf16.msra.mxu0 0
    %413 = vmatprep.mubr.bf16.mxu0 0
    %414 = vmatmul.mubr.bf16.gmra.mxu0 %v379
    %v415 = vpop.f32.mrf.mxu0
    %v416 = vadd.f32 %v335, %v415
    %v417 = vpop.f32.mrf.mxu0
    %v418 = vadd.f32 %v336, %v417
    %v419 = vpop.f32.mrf.mxu0
    %v420 = vpop.f32.mrf.mxu0
    %421 = vdwg.mxu0
    %v422 = vxor.u32 %v416, 2147483648
    %v423 = vxor.u32 %v418, 2147483648
    %v424 = vmul.f32 %v422, 1.442695
    %v425 = vpow.pop %v424
    %v426 = vmul.f32 %v423, 1.442695
    %v427 = vpow.pop %v426
    %v428 = vadd.f32 %v425, 1.0
    %v429 = vadd.f32 %v427, 1.0
    %v430 = vrcp.pop %v428
    %v431 = vmul.f32 1.0, %v430
    %v432 = vrcp.pop %v429
    %v433 = vmul.f32 1.0, %v432
    %v434 = vtanh.pop %v418
    %v435 = vmul.f32 %v431, 0.0
    %437 = vrot.lane.b32.xlu0 %v434, 64
    %v438 = vpop.permute.xlu0 %437
    %v440 = vmul.f32 %v431, %v438
    %442 = vrot.lane.b32.xlu0 %v440, 64
    %v443 = vpop.permute.xlu0 %442
    %v445 = vadd.f32 %v435, %v443
    %v446 = vtanh.pop %v445
    %448 = vrot.lane.b32.xlu0 %v446, 64
    %v449 = vpop.permute.xlu0 %448
    %v451 = vmul.f32 %v433, %v449
    %vm452 = vcmask 254976
    %453 = vst.msk [vmem:[#allocation3] sm:$0x3] %vm452, %v451
    %455 = vrot.lane.b32.xlu0 %v451, 96
    %v456 = vpop.permute.xlu0 %455
    %s458 = scalar_lea.vmem [#allocation4], 14
    %459 = vst.msk [vmem:[%s458] sm:$0x3] %vm452, %v456
    %v460 = vpack.c.bf16 %v451, %v451
    %s461 = scalar_lea.vmem [#allocation2], 4
    %v462 = vld [vmem:[%s461] sm:$0xf]
    %s463 = scalar_lea.vmem [#allocation2], 24
    %v464 = vld [vmem:[%s463] sm:$0xf]
    %v467 = vunpack.c.l.s4 1983009808
    %v468 = vunpack.c.0.s8 %v467
    %v469 = vlaneseq
    %v470 = vshrl.u32 %v469, 7
    %v471 = vsub.s32 %v468, %v470
    %v472 = vrot.slane %v462, %v471
    %v473 = vcombine.high %v472, %v472
    %v478 = vunpack.c.l.s4 1983009808
    %v479 = vunpack.c.0.s8 %v478
    %v480 = vlaneseq
    %v481 = vshrl.u32 %v480, 7
    %v482 = vsub.s32 %v479, %v481
    %v483 = vrot.slane %v464, %v482
    %v484 = vcombine.high %v483, %v483
    %v487 = vsel %vm311, %v472, %v483
    %v488 = vsel %vm312, %v473, %v484
    %v490 = vsel %vm377, %v460, 0
    %492 = vmatprep.subr.bf16.mxu0 0
    %493 = vmatpush1.bf16.msra.mxu0 0
    %494 = vmatprep.subr.bf16.mxu0 0
    %495 = vmatpush1.bf16.msra.mxu0 0
    %496 = vmatprep.subr.bf16.mxu0 0
    %497 = vmatpush1.bf16.msra.mxu0 0
    %498 = vmatprep.subr.bf16.mxu0 0
    %499 = vmatpush1.bf16.msra.mxu0 0
    %500 = vmatprep.subr.bf16.mxu0 %v368
    %501 = vmatpush1.bf16.msra.mxu0 %v367
    %502 = vmatprep.subr.bf16.mxu0 %v366
    %503 = vmatpush1.bf16.msra.mxu0 %v365
    %504 = vmatprep.subr.bf16.mxu0 %v364
    %505 = vmatpush1.bf16.msra.mxu0 %v363
    %506 = vmatprep.subr.bf16.mxu0 %v362
    %507 = vmatpush1.bf16.msra.mxu0 %v361
    %508 = vmatprep.subr.bf16.mxu0 0
    %509 = vmatpush2.bf16.msra.mxu0 0
    %510 = vmatprep.subr.bf16.mxu0 0
    %511 = vmatpush2.bf16.msra.mxu0 0
    %512 = vmatprep.subr.bf16.mxu0 0
    %513 = vmatpush2.bf16.msra.mxu0 0
    %514 = vmatprep.subr.bf16.mxu0 0
    %515 = vmatpush2.bf16.msra.mxu0 0
    %516 = vmatprep.subr.bf16.mxu0 0
    %517 = vmatpush2.bf16.msra.mxu0 0
    %518 = vmatprep.subr.bf16.mxu0 0
    %519 = vmatpush2.bf16.msra.mxu0 0
    %520 = vmatprep.subr.bf16.mxu0 0
    %521 = vmatpush2.bf16.msra.mxu0 0
    %522 = vmatprep.subr.bf16.mxu0 0
    %523 = vmatpush2.bf16.msra.mxu0 0
    %524 = vmatprep.mubr.bf16.mxu0 0
    %525 = vmatmul.mubr.bf16.gmra.mxu0 %v490
    %v526 = vpop.f32.mrf.mxu0
    %v527 = vadd.f32 %v487, %v526
    %v528 = vpop.f32.mrf.mxu0
    %v529 = vadd.f32 %v488, %v528
    %v530 = vpop.f32.mrf.mxu0
    %v531 = vpop.f32.mrf.mxu0
    %532 = vdwg.mxu0
    %v533 = vxor.u32 %v527, 2147483648
    %v534 = vxor.u32 %v529, 2147483648
    %v535 = vmul.f32 %v533, 1.442695
    %v536 = vpow.pop %v535
    %v537 = vmul.f32 %v534, 1.442695
    %v538 = vpow.pop %v537
    %v539 = vadd.f32 %v536, 1.0
    %v540 = vadd.f32 %v538, 1.0
    %v541 = vrcp.pop %v539
    %v542 = vmul.f32 1.0, %v541
    %v543 = vrcp.pop %v540
    %v544 = vmul.f32 1.0, %v543
    %v545 = vtanh.pop %v529
    %v546 = vmul.f32 %v542, %v445
    %548 = vrot.lane.b32.xlu0 %v545, 64
    %v549 = vpop.permute.xlu0 %548
    %v551 = vmul.f32 %v542, %v549
    %553 = vrot.lane.b32.xlu0 %v551, 64
    %v554 = vpop.permute.xlu0 %553
    %v556 = vadd.f32 %v546, %v554
    %v557 = vtanh.pop %v556
    %559 = vrot.lane.b32.xlu0 %v557, 64
    %v560 = vpop.permute.xlu0 %559
    %v562 = vmul.f32 %v544, %v560
    %s563 = scalar_lea.vmem [#allocation3], 2
    %564 = vst.msk [vmem:[%s563] sm:$0x3] %vm452, %v562
    %566 = vrot.lane.b32.xlu0 %v562, 96
    %v567 = vpop.permute.xlu0 %566
    %s569 = scalar_lea.vmem [#allocation4], 12
    %570 = vst.msk [vmem:[%s569] sm:$0x3] %vm452, %v567
    %v571 = vpack.c.bf16 %v562, %v562
    %s572 = scalar_lea.vmem [#allocation2], 8
    %v573 = vld [vmem:[%s572] sm:$0xf]
    %s574 = scalar_lea.vmem [#allocation2], 20
    %v575 = vld [vmem:[%s574] sm:$0xf]
    %v578 = vunpack.c.l.s4 1983009808
    %v579 = vunpack.c.0.s8 %v578
    %v580 = vlaneseq
    %v581 = vshrl.u32 %v580, 7
    %v582 = vsub.s32 %v579, %v581
    %v583 = vrot.slane %v573, %v582
    %v584 = vcombine.high %v583, %v583
    %v589 = vunpack.c.l.s4 1983009808
    %v590 = vunpack.c.0.s8 %v589
    %v591 = vlaneseq
    %v592 = vshrl.u32 %v591, 7
    %v593 = vsub.s32 %v590, %v592
    %v594 = vrot.slane %v575, %v593
    %v595 = vcombine.high %v594, %v594
    %v598 = vsel %vm311, %v583, %v594
    %v599 = vsel %vm312, %v584, %v595
    %v601 = vsel %vm377, %v571, 0
    %603 = vmatprep.subr.bf16.mxu0 0
    %604 = vmatpush1.bf16.msra.mxu0 0
    %605 = vmatprep.subr.bf16.mxu0 0
    %606 = vmatpush1.bf16.msra.mxu0 0
    %607 = vmatprep.subr.bf16.mxu0 0
    %608 = vmatpush1.bf16.msra.mxu0 0
    %609 = vmatprep.subr.bf16.mxu0 0
    %610 = vmatpush1.bf16.msra.mxu0 0
    %611 = vmatprep.subr.bf16.mxu0 %v368
    %612 = vmatpush1.bf16.msra.mxu0 %v367
    %613 = vmatprep.subr.bf16.mxu0 %v366
    %614 = vmatpush1.bf16.msra.mxu0 %v365
    %615 = vmatprep.subr.bf16.mxu0 %v364
    %616 = vmatpush1.bf16.msra.mxu0 %v363
    %617 = vmatprep.subr.bf16.mxu0 %v362
    %618 = vmatpush1.bf16.msra.mxu0 %v361
    %619 = vmatprep.subr.bf16.mxu0 0
    %620 = vmatpush2.bf16.msra.mxu0 0
    %621 = vmatprep.subr.bf16.mxu0 0
    %622 = vmatpush2.bf16.msra.mxu0 0
    %623 = vmatprep.subr.bf16.mxu0 0
    %624 = vmatpush2.bf16.msra.mxu0 0
    %625 = vmatprep.subr.bf16.mxu0 0
    %626 = vmatpush2.bf16.msra.mxu0 0
    %627 = vmatprep.subr.bf16.mxu0 0
    %628 = vmatpush2.bf16.msra.mxu0 0
    %629 = vmatprep.subr.bf16.mxu0 0
    %630 = vmatpush2.bf16.msra.mxu0 0
    %631 = vmatprep.subr.bf16.mxu0 0
    %632 = vmatpush2.bf16.msra.mxu0 0
    %633 = vmatprep.subr.bf16.mxu0 0
    %634 = vmatpush2.bf16.msra.mxu0 0
    %635 = vmatprep.mubr.bf16.mxu0 0
    %636 = vmatmul.mubr.bf16.gmra.mxu0 %v601
    %v637 = vpop.f32.mrf.mxu0
    %v638 = vadd.f32 %v598, %v637
    %v639 = vpop.f32.mrf.mxu0
    %v640 = vadd.f32 %v599, %v639
    %v641 = vpop.f32.mrf.mxu0
    %v642 = vpop.f32.mrf.mxu0
    %643 = vdwg.mxu0
    %v644 = vxor.u32 %v638, 2147483648
    %v645 = vxor.u32 %v640, 2147483648
    %v646 = vmul.f32 %v644, 1.442695
    %v647 = vpow.pop %v646
    %v648 = vmul.f32 %v645, 1.442695
    %v649 = vpow.pop %v648
    %v650 = vadd.f32 %v647, 1.0
    %v651 = vadd.f32 %v649, 1.0
    %v652 = vrcp.pop %v650
    %v653 = vmul.f32 1.0, %v652
    %v654 = vrcp.pop %v651
    %v655 = vmul.f32 1.0, %v654
    %v656 = vtanh.pop %v640
    %v657 = vmul.f32 %v653, %v556
    %659 = vrot.lane.b32.xlu0 %v656, 64
    %v660 = vpop.permute.xlu0 %659
    %v662 = vmul.f32 %v653, %v660
    %664 = vrot.lane.b32.xlu0 %v662, 64
    %v665 = vpop.permute.xlu0 %664
    %v667 = vadd.f32 %v657, %v665
    %v668 = vtanh.pop %v667
    %670 = vrot.lane.b32.xlu0 %v668, 64
    %v671 = vpop.permute.xlu0 %670
    %v673 = vmul.f32 %v655, %v671
    %s674 = scalar_lea.vmem [#allocation3], 4
    %675 = vst.msk [vmem:[%s674] sm:$0x3] %vm452, %v673
    %677 = vrot.lane.b32.xlu0 %v673, 96
    %v678 = vpop.permute.xlu0 %677
    %s680 = scalar_lea.vmem [#allocation4], 10
    %681 = vst.msk [vmem:[%s680] sm:$0x3] %vm452, %v678
    %v682 = vpack.c.bf16 %v673, %v673
    %s683 = scalar_lea.vmem [#allocation2], 12
    %v684 = vld [vmem:[%s683] sm:$0xf]
    %s685 = scalar_lea.vmem [#allocation2], 16
    %v686 = vld [vmem:[%s685] sm:$0xf]
    %v689 = vunpack.c.l.s4 1983009808
    %v690 = vunpack.c.0.s8 %v689
    %v691 = vlaneseq
    %v692 = vshrl.u32 %v691, 7
    %v693 = vsub.s32 %v690, %v692
    %v694 = vrot.slane %v684, %v693
    %v695 = vcombine.high %v694, %v694
    %v700 = vunpack.c.l.s4 1983009808
    %v701 = vunpack.c.0.s8 %v700
    %v702 = vlaneseq
    %v703 = vshrl.u32 %v702, 7
    %v704 = vsub.s32 %v701, %v703
    %v705 = vrot.slane %v686, %v704
    %v706 = vcombine.high %v705, %v705
    %v709 = vsel %vm311, %v694, %v705
    %v710 = vsel %vm312, %v695, %v706
    %v712 = vsel %vm377, %v682, 0
    %714 = vmatprep.subr.bf16.mxu0 0
    %715 = vmatpush1.bf16.msra.mxu0 0
    %716 = vmatprep.subr.bf16.mxu0 0
    %717 = vmatpush1.bf16.msra.mxu0 0
    %718 = vmatprep.subr.bf16.mxu0 0
    %719 = vmatpush1.bf16.msra.mxu0 0
    %720 = vmatprep.subr.bf16.mxu0 0
    %721 = vmatpush1.bf16.msra.mxu0 0
    %722 = vmatprep.subr.bf16.mxu0 %v368
    %723 = vmatpush1.bf16.msra.mxu0 %v367
    %724 = vmatprep.subr.bf16.mxu0 %v366
    %725 = vmatpush1.bf16.msra.mxu0 %v365
    %726 = vmatprep.subr.bf16.mxu0 %v364
    %727 = vmatpush1.bf16.msra.mxu0 %v363
    %728 = vmatprep.subr.bf16.mxu0 %v362
    %729 = vmatpush1.bf16.msra.mxu0 %v361
    %730 = vmatprep.subr.bf16.mxu0 0
    %731 = vmatpush2.bf16.msra.mxu0 0
    %732 = vmatprep.subr.bf16.mxu0 0
    %733 = vmatpush2.bf16.msra.mxu0 0
    %734 = vmatprep.subr.bf16.mxu0 0
    %735 = vmatpush2.bf16.msra.mxu0 0
    %736 = vmatprep.subr.bf16.mxu0 0
    %737 = vmatpush2.bf16.msra.mxu0 0
    %738 = vmatprep.subr.bf16.mxu0 0
    %739 = vmatpush2.bf16.msra.mxu0 0
    %740 = vmatprep.subr.bf16.mxu0 0
    %741 = vmatpush2.bf16.msra.mxu0 0
    %742 = vmatprep.subr.bf16.mxu0 0
    %743 = vmatpush2.bf16.msra.mxu0 0
    %744 = vmatprep.subr.bf16.mxu0 0
    %745 = vmatpush2.bf16.msra.mxu0 0
    %746 = vmatprep.mubr.bf16.mxu0 0
    %747 = vmatmul.mubr.bf16.gmra.mxu0 %v712
    %v748 = vpop.f32.mrf.mxu0
    %v749 = vadd.f32 %v709, %v748
    %v750 = vpop.f32.mrf.mxu0
    %v751 = vadd.f32 %v710, %v750
    %v752 = vpop.f32.mrf.mxu0
    %v753 = vpop.f32.mrf.mxu0
    %754 = vdwg.mxu0
    %v755 = vxor.u32 %v749, 2147483648
    %v756 = vxor.u32 %v751, 2147483648
    %v757 = vmul.f32 %v755, 1.442695
    %v758 = vpow.pop %v757
    %v759 = vmul.f32 %v756, 1.442695
    %v760 = vpow.pop %v759
    %v761 = vadd.f32 %v758, 1.0
    %v762 = vadd.f32 %v760, 1.0
    %v763 = vrcp.pop %v761
    %v764 = vmul.f32 1.0, %v763
    %v765 = vrcp.pop %v762
    %v766 = vmul.f32 1.0, %v765
    %v767 = vtanh.pop %v751
    %v768 = vmul.f32 %v764, %v667
    %770 = vrot.lane.b32.xlu0 %v767, 64
    %v771 = vpop.permute.xlu0 %770
    %v773 = vmul.f32 %v764, %v771
    %775 = vrot.lane.b32.xlu0 %v773, 64
    %v776 = vpop.permute.xlu0 %775
    %v778 = vadd.f32 %v768, %v776
    %v779 = vtanh.pop %v778
    %781 = vrot.lane.b32.xlu0 %v779, 64
    %v782 = vpop.permute.xlu0 %781
    %v784 = vmul.f32 %v766, %v782
    %s785 = scalar_lea.vmem [#allocation3], 6
    %786 = vst.msk [vmem:[%s785] sm:$0x3] %vm452, %v784
    %788 = vrot.lane.b32.xlu0 %v784, 96
    %v789 = vpop.permute.xlu0 %788
    %s791 = scalar_lea.vmem [#allocation4], 8
    %792 = vst.msk [vmem:[%s791] sm:$0x3] %vm452, %v789
    %v793 = vpack.c.bf16 %v784, %v784
    %v794 = vld [vmem:[%s685] sm:$0xf]
    %v795 = vld [vmem:[%s683] sm:$0xf]
    %v798 = vunpack.c.l.s4 1983009808
    %v799 = vunpack.c.0.s8 %v798
    %v800 = vlaneseq
    %v801 = vshrl.u32 %v800, 7
    %v802 = vsub.s32 %v799, %v801
    %v803 = vrot.slane %v794, %v802
    %v804 = vcombine.high %v803, %v803
    %v809 = vunpack.c.l.s4 1983009808
    %v810 = vunpack.c.0.s8 %v809
    %v811 = vlaneseq
    %v812 = vshrl.u32 %v811, 7
    %v813 = vsub.s32 %v810, %v812
    %v814 = vrot.slane %v795, %v813
    %v815 = vcombine.high %v814, %v814
    %v818 = vsel %vm311, %v803, %v814
    %v819 = vsel %vm312, %v804, %v815
    %v821 = vsel %vm377, %v793, 0
    %823 = vmatprep.subr.bf16.mxu0 0
    %824 = vmatpush1.bf16.msra.mxu0 0
    %825 = vmatprep.subr.bf16.mxu0 0
    %826 = vmatpush1.bf16.msra.mxu0 0
    %827 = vmatprep.subr.bf16.mxu0 0
    %828 = vmatpush1.bf16.msra.mxu0 0
    %829 = vmatprep.subr.bf16.mxu0 0
    %830 = vmatpush1.bf16.msra.mxu0 0
    %831 = vmatprep.subr.bf16.mxu0 %v368
    %832 = vmatpush1.bf16.msra.mxu0 %v367
    %833 = vmatprep.subr.bf16.mxu0 %v366
    %834 = vmatpush1.bf16.msra.mxu0 %v365
    %835 = vmatprep.subr.bf16.mxu0 %v364
    %836 = vmatpush1.bf16.msra.mxu0 %v363
    %837 = vmatprep.subr.bf16.mxu0 %v362
    %838 = vmatpush1.bf16.msra.mxu0 %v361
    %839 = vmatprep.subr.bf16.mxu0 0
    %840 = vmatpush2.bf16.msra.mxu0 0
    %841 = vmatprep.subr.bf16.mxu0 0
    %842 = vmatpush2.bf16.msra.mxu0 0
    %843 = vmatprep.subr.bf16.mxu0 0
    %844 = vmatpush2.bf16.msra.mxu0 0
    %845 = vmatprep.subr.bf16.mxu0 0
    %846 = vmatpush2.bf16.msra.mxu0 0
    %847 = vmatprep.subr.bf16.mxu0 0
    %848 = vmatpush2.bf16.msra.mxu0 0
    %849 = vmatprep.subr.bf16.mxu0 0
    %850 = vmatpush2.bf16.msra.mxu0 0
    %851 = vmatprep.subr.bf16.mxu0 0
    %852 = vmatpush2.bf16.msra.mxu0 0
    %853 = vmatprep.subr.bf16.mxu0 0
    %854 = vmatpush2.bf16.msra.mxu0 0
    %855 = vmatprep.mubr.bf16.mxu0 0
    %856 = vmatmul.mubr.bf16.gmra.mxu0 %v821
    %v857 = vpop.f32.mrf.mxu0
    %v858 = vadd.f32 %v818, %v857
    %v859 = vpop.f32.mrf.mxu0
    %v860 = vadd.f32 %v819, %v859
    %v861 = vpop.f32.mrf.mxu0
    %v862 = vpop.f32.mrf.mxu0
    %863 = vdwg.mxu0
    %v864 = vxor.u32 %v858, 2147483648
    %v865 = vxor.u32 %v860, 2147483648
    %v866 = vmul.f32 %v864, 1.442695
    %v867 = vpow.pop %v866
    %v868 = vmul.f32 %v865, 1.442695
    %v869 = vpow.pop %v868
    %v870 = vadd.f32 %v867, 1.0
    %v871 = vadd.f32 %v869, 1.0
    %v872 = vrcp.pop %v870
    %v873 = vmul.f32 1.0, %v872
    %v874 = vrcp.pop %v871
    %v875 = vmul.f32 1.0, %v874
    %v876 = vtanh.pop %v860
    %v877 = vmul.f32 %v873, %v778
    %879 = vrot.lane.b32.xlu0 %v876, 64
    %v880 = vpop.permute.xlu0 %879
    %v882 = vmul.f32 %v873, %v880
    %884 = vrot.lane.b32.xlu0 %v882, 64
    %v885 = vpop.permute.xlu0 %884
    %v887 = vadd.f32 %v877, %v885
    %v888 = vtanh.pop %v887
    %890 = vrot.lane.b32.xlu0 %v888, 64
    %v891 = vpop.permute.xlu0 %890
    %v893 = vmul.f32 %v875, %v891
    %s894 = scalar_lea.vmem [#allocation3], 8
    %895 = vst.msk [vmem:[%s894] sm:$0x3] %vm452, %v893
    %897 = vrot.lane.b32.xlu0 %v893, 96
    %v898 = vpop.permute.xlu0 %897
    %s900 = scalar_lea.vmem [#allocation4], 6
    %901 = vst.msk [vmem:[%s900] sm:$0x3] %vm452, %v898
    %v902 = vpack.c.bf16 %v893, %v893
    %v903 = vld [vmem:[%s574] sm:$0xf]
    %v904 = vld [vmem:[%s572] sm:$0xf]
    %v907 = vunpack.c.l.s4 1983009808
    %v908 = vunpack.c.0.s8 %v907
    %v909 = vlaneseq
    %v910 = vshrl.u32 %v909, 7
    %v911 = vsub.s32 %v908, %v910
    %v912 = vrot.slane %v903, %v911
    %v913 = vcombine.high %v912, %v912
    %v918 = vunpack.c.l.s4 1983009808
    %v919 = vunpack.c.0.s8 %v918
    %v920 = vlaneseq
    %v921 = vshrl.u32 %v920, 7
    %v922 = vsub.s32 %v919, %v921
    %v923 = vrot.slane %v904, %v922
    %v924 = vcombine.high %v923, %v923
    %v927 = vsel %vm311, %v912, %v923
    %v928 = vsel %vm312, %v913, %v924
    %v930 = vsel %vm377, %v902, 0
    %932 = vmatprep.subr.bf16.mxu0 0
    %933 = vmatpush1.bf16.msra.mxu0 0
    %934 = vmatprep.subr.bf16.mxu0 0
    %935 = vmatpush1.bf16.msra.mxu0 0
    %936 = vmatprep.subr.bf16.mxu0 0
    %937 = vmatpush1.bf16.msra.mxu0 0
    %938 = vmatprep.subr.bf16.mxu0 0
    %939 = vmatpush1.bf16.msra.mxu0 0
    %940 = vmatprep.subr.bf16.mxu0 %v368
    %941 = vmatpush1.bf16.msra.mxu0 %v367
    %942 = vmatprep.subr.bf16.mxu0 %v366
    %943 = vmatpush1.bf16.msra.mxu0 %v365
    %944 = vmatprep.subr.bf16.mxu0 %v364
    %945 = vmatpush1.bf16.msra.mxu0 %v363
    %946 = vmatprep.subr.bf16.mxu0 %v362
    %947 = vmatpush1.bf16.msra.mxu0 %v361
    %948 = vmatprep.subr.bf16.mxu0 0
    %949 = vmatpush2.bf16.msra.mxu0 0
    %950 = vmatprep.subr.bf16.mxu0 0
    %951 = vmatpush2.bf16.msra.mxu0 0
    %952 = vmatprep.subr.bf16.mxu0 0
    %953 = vmatpush2.bf16.msra.mxu0 0
    %954 = vmatprep.subr.bf16.mxu0 0
    %955 = vmatpush2.bf16.msra.mxu0 0
    %956 = vmatprep.subr.bf16.mxu0 0
    %957 = vmatpush2.bf16.msra.mxu0 0
    %958 = vmatprep.subr.bf16.mxu0 0
    %959 = vmatpush2.bf16.msra.mxu0 0
    %960 = vmatprep.subr.bf16.mxu0 0
    %961 = vmatpush2.bf16.msra.mxu0 0
    %962 = vmatprep.subr.bf16.mxu0 0
    %963 = vmatpush2.bf16.msra.mxu0 0
    %964 = vmatprep.mubr.bf16.mxu0 0
    %965 = vmatmul.mubr.bf16.gmra.mxu0 %v930
    %v966 = vpop.f32.mrf.mxu0
    %v967 = vadd.f32 %v927, %v966
    %v968 = vpop.f32.mrf.mxu0
    %v969 = vadd.f32 %v928, %v968
    %v970 = vpop.f32.mrf.mxu0
    %v971 = vpop.f32.mrf.mxu0
    %972 = vdwg.mxu0
    %v973 = vxor.u32 %v967, 2147483648
    %v974 = vxor.u32 %v969, 2147483648
    %v975 = vmul.f32 %v973, 1.442695
    %v976 = vpow.pop %v975
    %v977 = vmul.f32 %v974, 1.442695
    %v978 = vpow.pop %v977
    %v979 = vadd.f32 %v976, 1.0
    %v980 = vadd.f32 %v978, 1.0
    %v981 = vrcp.pop %v979
    %v982 = vmul.f32 1.0, %v981
    %v983 = vrcp.pop %v980
    %v984 = vmul.f32 1.0, %v983
    %v985 = vtanh.pop %v969
    %v986 = vmul.f32 %v982, %v887
    %988 = vrot.lane.b32.xlu0 %v985, 64
    %v989 = vpop.permute.xlu0 %988
    %v991 = vmul.f32 %v982, %v989
    %993 = vrot.lane.b32.xlu0 %v991, 64
    %v994 = vpop.permute.xlu0 %993
    %v996 = vadd.f32 %v986, %v994
    %v997 = vtanh.pop %v996
    %999 = vrot.lane.b32.xlu0 %v997, 64
    %v1000 = vpop.permute.xlu0 %999
    %v1002 = vmul.f32 %v984, %v1000
    %s1003 = scalar_lea.vmem [#allocation3], 10
    %1004 = vst.msk [vmem:[%s1003] sm:$0x3] %vm452, %v1002
    %1006 = vrot.lane.b32.xlu0 %v1002, 96
    %v1007 = vpop.permute.xlu0 %1006
    %s1009 = scalar_lea.vmem [#allocation4], 4
    %1010 = vst.msk [vmem:[%s1009] sm:$0x3] %vm452, %v1007
    %v1011 = vpack.c.bf16 %v1002, %v1002
    %v1012 = vld [vmem:[%s463] sm:$0xf]
    %v1013 = vld [vmem:[%s461] sm:$0xf]
    %v1016 = vunpack.c.l.s4 1983009808
    %v1017 = vunpack.c.0.s8 %v1016
    %v1018 = vlaneseq
    %v1019 = vshrl.u32 %v1018, 7
    %v1020 = vsub.s32 %v1017, %v1019
    %v1021 = vrot.slane %v1012, %v1020
    %v1022 = vcombine.high %v1021, %v1021
    %v1027 = vunpack.c.l.s4 1983009808
    %v1028 = vunpack.c.0.s8 %v1027
    %v1029 = vlaneseq
    %v1030 = vshrl.u32 %v1029, 7
    %v1031 = vsub.s32 %v1028, %v1030
    %v1032 = vrot.slane %v1013, %v1031
    %v1033 = vcombine.high %v1032, %v1032
    %v1036 = vsel %vm311, %v1021, %v1032
    %v1037 = vsel %vm312, %v1022, %v1033
    %v1039 = vsel %vm377, %v1011, 0
    %1041 = vmatprep.subr.bf16.mxu0 0
    %1042 = vmatpush1.bf16.msra.mxu0 0
    %1043 = vmatprep.subr.bf16.mxu0 0
    %1044 = vmatpush1.bf16.msra.mxu0 0
    %1045 = vmatprep.subr.bf16.mxu0 0
    %1046 = vmatpush1.bf16.msra.mxu0 0
    %1047 = vmatprep.subr.bf16.mxu0 0
    %1048 = vmatpush1.bf16.msra.mxu0 0
    %1049 = vmatprep.subr.bf16.mxu0 %v368
    %1050 = vmatpush1.bf16.msra.mxu0 %v367
    %1051 = vmatprep.subr.bf16.mxu0 %v366
    %1052 = vmatpush1.bf16.msra.mxu0 %v365
    %1053 = vmatprep.subr.bf16.mxu0 %v364
    %1054 = vmatpush1.bf16.msra.mxu0 %v363
    %1055 = vmatprep.subr.bf16.mxu0 %v362
    %1056 = vmatpush1.bf16.msra.mxu0 %v361
    %1057 = vmatprep.subr.bf16.mxu0 0
    %1058 = vmatpush2.bf16.msra.mxu0 0
    %1059 = vmatprep.subr.bf16.mxu0 0
    %1060 = vmatpush2.bf16.msra.mxu0 0
    %1061 = vmatprep.subr.bf16.mxu0 0
    %1062 = vmatpush2.bf16.msra.mxu0 0
    %1063 = vmatprep.subr.bf16.mxu0 0
    %1064 = vmatpush2.bf16.msra.mxu0 0
    %1065 = vmatprep.subr.bf16.mxu0 0
    %1066 = vmatpush2.bf16.msra.mxu0 0
    %1067 = vmatprep.subr.bf16.mxu0 0
    %1068 = vmatpush2.bf16.msra.mxu0 0
    %1069 = vmatprep.subr.bf16.mxu0 0
    %1070 = vmatpush2.bf16.msra.mxu0 0
    %1071 = vmatprep.subr.bf16.mxu0 0
    %1072 = vmatpush2.bf16.msra.mxu0 0
    %1073 = vmatprep.mubr.bf16.mxu0 0
    %1074 = vmatmul.mubr.bf16.gmra.mxu0 %v1039
    %v1075 = vpop.f32.mrf.mxu0
    %v1076 = vadd.f32 %v1036, %v1075
    %v1077 = vpop.f32.mrf.mxu0
    %v1078 = vadd.f32 %v1037, %v1077
    %v1079 = vpop.f32.mrf.mxu0
    %v1080 = vpop.f32.mrf.mxu0
    %1081 = vdwg.mxu0
    %v1082 = vxor.u32 %v1076, 2147483648
    %v1083 = vxor.u32 %v1078, 2147483648
    %v1084 = vmul.f32 %v1082, 1.442695
    %v1085 = vpow.pop %v1084
    %v1086 = vmul.f32 %v1083, 1.442695
    %v1087 = vpow.pop %v1086
    %v1088 = vadd.f32 %v1085, 1.0
    %v1089 = vadd.f32 %v1087, 1.0
    %v1090 = vrcp.pop %v1088
    %v1091 = vmul.f32 1.0, %v1090
    %v1092 = vrcp.pop %v1089
    %v1093 = vmul.f32 1.0, %v1092
    %v1094 = vtanh.pop %v1078
    %v1095 = vmul.f32 %v1091, %v996
    %1097 = vrot.lane.b32.xlu0 %v1094, 64
    %v1098 = vpop.permute.xlu0 %1097
    %v1100 = vmul.f32 %v1091, %v1098
    %1102 = vrot.lane.b32.xlu0 %v1100, 64
    %v1103 = vpop.permute.xlu0 %1102
    %v1105 = vadd.f32 %v1095, %v1103
    %v1106 = vtanh.pop %v1105
    %1108 = vrot.lane.b32.xlu0 %v1106, 64
    %v1109 = vpop.permute.xlu0 %1108
    %v1111 = vmul.f32 %v1093, %v1109
    %s1112 = scalar_lea.vmem [#allocation3], 12
    %1113 = vst.msk [vmem:[%s1112] sm:$0x3] %vm452, %v1111
    %1115 = vrot.lane.b32.xlu0 %v1111, 96
    %v1116 = vpop.permute.xlu0 %1115
    %s1118 = scalar_lea.vmem [#allocation4], 2
    %1119 = vst.msk [vmem:[%s1118] sm:$0x3] %vm452, %v1116
    %v1120 = vpack.c.bf16 %v1111, %v1111
    %v1121 = vld [vmem:[%s307] sm:$0xf]
    %v1122 = vld [vmem:[#allocation2] sm:$0xf]
    %v1125 = vunpack.c.l.s4 1983009808
    %v1126 = vunpack.c.0.s8 %v1125
    %v1127 = vlaneseq
    %v1128 = vshrl.u32 %v1127, 7
    %v1129 = vsub.s32 %v1126, %v1128
    %v1130 = vrot.slane %v1121, %v1129
    %v1131 = vcombine.high %v1130, %v1130
    %v1136 = vunpack.c.l.s4 1983009808
    %v1137 = vunpack.c.0.s8 %v1136
    %v1138 = vlaneseq
    %v1139 = vshrl.u32 %v1138, 7
    %v1140 = vsub.s32 %v1137, %v1139
    %v1141 = vrot.slane %v1122, %v1140
    %v1142 = vcombine.high %v1141, %v1141
    %v1145 = vsel %vm311, %v1130, %v1141
    %v1146 = vsel %vm312, %v1131, %v1142
    %v1148 = vsel %vm377, %v1120, 0
    %1150 = vmatprep.subr.bf16.mxu0 0
    %1151 = vmatpush1.bf16.msra.mxu0 0
    %1152 = vmatprep.subr.bf16.mxu0 0
    %1153 = vmatpush1.bf16.msra.mxu0 0
    %1154 = vmatprep.subr.bf16.mxu0 0
    %1155 = vmatpush1.bf16.msra.mxu0 0
    %1156 = vmatprep.subr.bf16.mxu0 0
    %1157 = vmatpush1.bf16.msra.mxu0 0
    %1158 = vmatprep.subr.bf16.mxu0 %v368
    %1159 = vmatpush1.bf16.msra.mxu0 %v367
    %1160 = vmatprep.subr.bf16.mxu0 %v366
    %1161 = vmatpush1.bf16.msra.mxu0 %v365
    %1162 = vmatprep.subr.bf16.mxu0 %v364
    %1163 = vmatpush1.bf16.msra.mxu0 %v363
    %1164 = vmatprep.subr.bf16.mxu0 %v362
    %1165 = vmatpush1.bf16.msra.mxu0 %v361
    %1166 = vmatprep.subr.bf16.mxu0 0
    %1167 = vmatpush2.bf16.msra.mxu0 0
    %1168 = vmatprep.subr.bf16.mxu0 0
    %1169 = vmatpush2.bf16.msra.mxu0 0
    %1170 = vmatprep.subr.bf16.mxu0 0
    %1171 = vmatpush2.bf16.msra.mxu0 0
    %1172 = vmatprep.subr.bf16.mxu0 0
    %1173 = vmatpush2.bf16.msra.mxu0 0
    %1174 = vmatprep.subr.bf16.mxu0 0
    %1175 = vmatpush2.bf16.msra.mxu0 0
    %1176 = vmatprep.subr.bf16.mxu0 0
    %1177 = vmatpush2.bf16.msra.mxu0 0
    %1178 = vmatprep.subr.bf16.mxu0 0
    %1179 = vmatpush2.bf16.msra.mxu0 0
    %1180 = vmatprep.subr.bf16.mxu0 0
    %1181 = vmatpush2.bf16.msra.mxu0 0
    %1182 = vmatprep.mubr.bf16.mxu0 0
    %1183 = vmatmul.mubr.bf16.gmra.mxu0 %v1148
    %v1184 = vpop.f32.mrf.mxu0
    %v1185 = vadd.f32 %v1145, %v1184
    %v1186 = vpop.f32.mrf.mxu0
    %v1187 = vadd.f32 %v1146, %v1186
    %v1188 = vpop.f32.mrf.mxu0
    %v1189 = vpop.f32.mrf.mxu0
    %1190 = vdwg.mxu0
    %v1191 = vxor.u32 %v1185, 2147483648
    %v1192 = vxor.u32 %v1187, 2147483648
    %v1193 = vmul.f32 %v1191, 1.442695
    %v1194 = vpow.pop %v1193
    %v1195 = vmul.f32 %v1192, 1.442695
    %v1196 = vpow.pop %v1195
    %v1197 = vadd.f32 %v1194, 1.0
    %v1198 = vadd.f32 %v1196, 1.0
    %v1199 = vrcp.pop %v1197
    %v1200 = vmul.f32 1.0, %v1199
    %v1201 = vrcp.pop %v1198
    %v1202 = vmul.f32 1.0, %v1201
    %v1203 = vtanh.pop %v1187
    %v1204 = vmul.f32 %v1200, %v1105
    %1206 = vrot.lane.b32.xlu0 %v1203, 64
    %v1207 = vpop.permute.xlu0 %1206
    %v1209 = vmul.f32 %v1200, %v1207
    %1211 = vrot.lane.b32.xlu0 %v1209, 64
    %v1212 = vpop.permute.xlu0 %1211
    %v1214 = vadd.f32 %v1204, %v1212
    %v1215 = vtanh.pop %v1214
    %1217 = vrot.lane.b32.xlu0 %v1215, 64
    %v1218 = vpop.permute.xlu0 %1217
    %v1220 = vmul.f32 %v1202, %v1218
    %s1221 = scalar_lea.vmem [#allocation3], 14
    %1222 = vst.msk [vmem:[%s1221] sm:$0x3] %vm452, %v1220
    %1224 = vrot.lane.b32.xlu0 %v1220, 96
    %v1225 = vpop.permute.xlu0 %1224
    %1227 = vst.msk [vmem:[#allocation4] sm:$0x3] %vm452, %v1225
    %v1228 = vld [vmem:[#allocation10] sm:$0xff]
    %v1229 = vld [vmem:[#allocation10 + $0x8] sm:$0xff]
    %v1230 = vld [vmem:[#allocation10 + $0x10] sm:$0xff]
    %v1231 = vld [vmem:[#allocation10 + $0x18] sm:$0xff]
    %v1232 = vld [vmem:[#allocation10 + $0x20] sm:$0xff]
    %v1233 = vld [vmem:[#allocation10 + $0x28] sm:$0xff]
    %v1234 = vld [vmem:[#allocation10 + $0x30] sm:$0xff]
    %v1235 = vld [vmem:[#allocation10 + $0x38] sm:$0xff]
    %v1236 = vld [vmem:[#allocation3] sm:$0x3]
    %v1237 = vld [vmem:[#allocation3 + $0x2] sm:$0x3]
    %v1238 = vld [vmem:[#allocation3 + $0x4] sm:$0x3]
    %v1239 = vld [vmem:[#allocation3 + $0x6] sm:$0x3]
    %v1240 = vld [vmem:[#allocation3 + $0x8] sm:$0x3]
    %v1241 = vld [vmem:[#allocation3 + $0xa] sm:$0x3]
    %v1242 = vld [vmem:[#allocation3 + $0xc] sm:$0x3]
    %v1243 = vld [vmem:[#allocation3 + $0xe] sm:$0x3]
    %v1252 = vcombine.low %v1236, %v1237
    %v1253 = vcombine.low %v1238, %v1239
    %v1255 = vunpack.c.l.s4 1983009808
    %v1256 = vunpack.c.0.s8 %v1255
    %v1257 = vlaneseq
    %v1258 = vshrl.u32 %v1257, 7
    %v1259 = vsub.s32 %v1256, %v1258
    %v1260 = vrot.slane %v1252, %v1259
    %v1262 = vunpack.c.l.s4 1983009808
    %v1263 = vunpack.c.0.s8 %v1262
    %v1264 = vlaneseq
    %v1265 = vshrl.u32 %v1264, 7
    %v1266 = vsub.s32 %v1263, %v1265
    %v1267 = vrot.slane %v1253, %v1266
    %v1268 = vcombine.low %v1260, %v1267
    %v1269 = vcombine.low %v1240, %v1241
    %v1270 = vcombine.low %v1242, %v1243
    %v1272 = vunpack.c.l.s4 1983009808
    %v1273 = vunpack.c.0.s8 %v1272
    %v1274 = vlaneseq
    %v1275 = vshrl.u32 %v1274, 7
    %v1276 = vsub.s32 %v1273, %v1275
    %v1277 = vrot.slane %v1269, %v1276
    %v1279 = vunpack.c.l.s4 1983009808
    %v1280 = vunpack.c.0.s8 %v1279
    %v1281 = vlaneseq
    %v1282 = vshrl.u32 %v1281, 7
    %v1283 = vsub.s32 %v1280, %v1282
    %v1284 = vrot.slane %v1270, %v1283
    %v1285 = vcombine.low %v1277, %v1284
    %v1288 = vpack.c.bf16 %v1285, %v1268
    %v1289 = vld [vmem:[#allocation4] sm:$0x3]
    %v1290 = vld [vmem:[#allocation4 + $0x2] sm:$0x3]
    %v1291 = vld [vmem:[#allocation4 + $0x4] sm:$0x3]
    %v1292 = vld [vmem:[#allocation4 + $0x6] sm:$0x3]
    %v1293 = vld [vmem:[#allocation4 + $0x8] sm:$0x3]
    %v1294 = vld [vmem:[#allocation4 + $0xa] sm:$0x3]
    %v1295 = vld [vmem:[#allocation4 + $0xc] sm:$0x3]
    %v1296 = vld [vmem:[#allocation4 + $0xe] sm:$0x3]
    %v1305 = vcombine.low %v1289, %v1290
    %v1306 = vcombine.low %v1291, %v1292
    %v1308 = vunpack.c.l.s4 1983009808
    %v1309 = vunpack.c.0.s8 %v1308
    %v1310 = vlaneseq
    %v1311 = vshrl.u32 %v1310, 7
    %v1312 = vsub.s32 %v1309, %v1311
    %v1313 = vrot.slane %v1305, %v1312
    %v1315 = vunpack.c.l.s4 1983009808
    %v1316 = vunpack.c.0.s8 %v1315
    %v1317 = vlaneseq
    %v1318 = vshrl.u32 %v1317, 7
    %v1319 = vsub.s32 %v1316, %v1318
    %v1320 = vrot.slane %v1306, %v1319
    %v1321 = vcombine.low %v1313, %v1320
    %v1322 = vcombine.low %v1293, %v1294
    %v1323 = vcombine.low %v1295, %v1296
    %v1325 = vunpack.c.l.s4 1983009808
    %v1326 = vunpack.c.0.s8 %v1325
    %v1327 = vlaneseq
    %v1328 = vshrl.u32 %v1327, 7
    %v1329 = vsub.s32 %v1326, %v1328
    %v1330 = vrot.slane %v1322, %v1329
    %v1332 = vunpack.c.l.s4 1983009808
    %v1333 = vunpack.c.0.s8 %v1332
    %v1334 = vlaneseq
    %v1335 = vshrl.u32 %v1334, 7
    %v1336 = vsub.s32 %v1333, %v1335
    %v1337 = vrot.slane %v1323, %v1336
    %v1338 = vcombine.low %v1330, %v1337
    %v1341 = vpack.c.bf16 %v1338, %v1321
    %v1346 = vunpack.c.l.b16 %v1232
    %v1347 = vunpack.c.h.b16 %v1232
    %v1348 = vunpack.c.l.b16 %v1233
    %v1349 = vunpack.c.h.b16 %v1233
    %v1350 = vunpack.c.l.b16 %v1234
    %v1351 = vunpack.c.h.b16 %v1234
    %v1352 = vunpack.c.l.b16 %v1235
    %v1353 = vunpack.c.h.b16 %v1235
    %v1354 = vpack.c.b16 %v1348, %v1346
    %v1355 = vpack.c.b16 %v1349, %v1347
    %v1356 = vpack.c.b16 %v1352, %v1350
    %v1357 = vpack.c.b16 %v1353, %v1351
    %vm1362 = vcmask 261120
    %v1364 = vsel %vm1362, %v1341, 0
    %1366 = vmatprep.subr.bf16.mxu0 0
    %1367 = vmatpush1.bf16.msra.mxu0 0
    %1368 = vmatprep.subr.bf16.mxu0 0
    %1369 = vmatpush1.bf16.msra.mxu0 0
    %1370 = vmatprep.subr.bf16.mxu0 0
    %1371 = vmatpush1.bf16.msra.mxu0 0
    %1372 = vmatprep.subr.bf16.mxu0 0
    %1373 = vmatpush1.bf16.msra.mxu0 0
    %1374 = vmatprep.subr.bf16.mxu0 0
    %1375 = vmatpush1.bf16.msra.mxu0 0
    %1376 = vmatprep.subr.bf16.mxu0 0
    %1377 = vmatpush1.bf16.msra.mxu0 0
    %1378 = vmatprep.subr.bf16.mxu0 %v1357
    %1379 = vmatpush1.bf16.msra.mxu0 %v1356
    %1380 = vmatprep.subr.bf16.mxu0 %v1355
    %1381 = vmatpush1.bf16.msra.mxu0 %v1354
    %1382 = vmatprep.subr.bf16.mxu0 0
    %1383 = vmatpush2.bf16.msra.mxu0 0
    %1384 = vmatprep.subr.bf16.mxu0 0
    %1385 = vmatpush2.bf16.msra.mxu0 0
    %1386 = vmatprep.subr.bf16.mxu0 0
    %1387 = vmatpush2.bf16.msra.mxu0 0
    %1388 = vmatprep.subr.bf16.mxu0 0
    %1389 = vmatpush2.bf16.msra.mxu0 0
    %1390 = vmatprep.subr.bf16.mxu0 0
    %1391 = vmatpush2.bf16.msra.mxu0 0
    %1392 = vmatprep.subr.bf16.mxu0 0
    %1393 = vmatpush2.bf16.msra.mxu0 0
    %1394 = vmatprep.subr.bf16.mxu0 0
    %1395 = vmatpush2.bf16.msra.mxu0 0
    %1396 = vmatprep.subr.bf16.mxu0 0
    %1397 = vmatpush2.bf16.msra.mxu0 0
    %1398 = vmatprep.mubr.bf16.mxu0 0
    %1399 = vmatmul.mubr.bf16.gmra.mxu0 %v1364
    %v1400 = vpop.f32.mrf.mxu0
    %v1401 = vadd.f32 0.0, %v1400
    %v1402 = vpop.f32.mrf.mxu0
    %v1403 = vadd.f32 0.0, %v1402
    %v1404 = vpop.f32.mrf.mxu0
    %v1405 = vadd.f32 0.0, %v1404
    %v1406 = vpop.f32.mrf.mxu0
    %v1407 = vadd.f32 0.0, %v1406
    %1408 = vdwg.mxu0
    %v1413 = vunpack.c.l.b16 %v1228
    %v1414 = vunpack.c.h.b16 %v1228
    %v1415 = vunpack.c.l.b16 %v1229
    %v1416 = vunpack.c.h.b16 %v1229
    %v1417 = vunpack.c.l.b16 %v1230
    %v1418 = vunpack.c.h.b16 %v1230
    %v1419 = vunpack.c.l.b16 %v1231
    %v1420 = vunpack.c.h.b16 %v1231
    %v1421 = vpack.c.b16 %v1415, %v1413
    %v1422 = vpack.c.b16 %v1416, %v1414
    %v1423 = vpack.c.b16 %v1419, %v1417
    %v1424 = vpack.c.b16 %v1420, %v1418
    %v1430 = vsel %vm1362, %v1288, 0
    %1432 = vmatprep.subr.bf16.mxu0 0
    %1433 = vmatpush1.bf16.msra.mxu0 0
    %1434 = vmatprep.subr.bf16.mxu0 0
    %1435 = vmatpush1.bf16.msra.mxu0 0
    %1436 = vmatprep.subr.bf16.mxu0 0
    %1437 = vmatpush1.bf16.msra.mxu0 0
    %1438 = vmatprep.subr.bf16.mxu0 0
    %1439 = vmatpush1.bf16.msra.mxu0 0
    %1440 = vmatprep.subr.bf16.mxu0 0
    %1441 = vmatpush1.bf16.msra.mxu0 0
    %1442 = vmatprep.subr.bf16.mxu0 0
    %1443 = vmatpush1.bf16.msra.mxu0 0
    %1444 = vmatprep.subr.bf16.mxu0 %v1424
    %1445 = vmatpush1.bf16.msra.mxu0 %v1423
    %1446 = vmatprep.subr.bf16.mxu0 %v1422
    %1447 = vmatpush1.bf16.msra.mxu0 %v1421
    %1448 = vmatprep.subr.bf16.mxu0 0
    %1449 = vmatpush2.bf16.msra.mxu0 0
    %1450 = vmatprep.subr.bf16.mxu0 0
    %1451 = vmatpush2.bf16.msra.mxu0 0
    %1452 = vmatprep.subr.bf16.mxu0 0
    %1453 = vmatpush2.bf16.msra.mxu0 0
    %1454 = vmatprep.subr.bf16.mxu0 0
    %1455 = vmatpush2.bf16.msra.mxu0 0
    %1456 = vmatprep.subr.bf16.mxu0 0
    %1457 = vmatpush2.bf16.msra.mxu0 0
    %1458 = vmatprep.subr.bf16.mxu0 0
    %1459 = vmatpush2.bf16.msra.mxu0 0
    %1460 = vmatprep.subr.bf16.mxu0 0
    %1461 = vmatpush2.bf16.msra.mxu0 0
    %1462 = vmatprep.subr.bf16.mxu0 0
    %1463 = vmatpush2.bf16.msra.mxu0 0
    %1464 = vmatprep.mubr.bf16.mxu0 0
    %1465 = vmatmul.mubr.bf16.gmra.mxu0 %v1430
    %v1466 = vpop.f32.mrf.mxu0
    %v1467 = vadd.f32 %v1401, %v1466
    %v1468 = vpop.f32.mrf.mxu0
    %v1469 = vadd.f32 %v1403, %v1468
    %v1470 = vpop.f32.mrf.mxu0
    %v1471 = vadd.f32 %v1405, %v1470
    %v1472 = vpop.f32.mrf.mxu0
    %v1473 = vadd.f32 %v1407, %v1472
    %1474 = vdwg.mxu0
    %v1475 = vld [vmem:[%s6] sm:$0x3]
    %v1477 = vlaneseq
    %v1478 = vshrl.u32 %v1477, 7
    %v1479 = vsub.s32 0, %v1478
    %v1480 = vrot.slane %v1475, %v1479
    %v1481 = vlaneseq
    %v1482 = vshrl.u32 %v1481, 7
    %v1483 = vsub.s32 1, %v1482
    %v1484 = vrot.slane %v1475, %v1483
    %v1487 = vadd.f32 %v1467, %v1480
    %v1488 = vadd.f32 %v1469, %v1484
    %v1489 = vadd.f32 %v1471, %v1480
    %v1490 = vadd.f32 %v1473, %v1484
    %v1495 = vcombine.low %v1487, %v1488
    %v1496 = vcombine.high %v1487, %v1488
    %v1498 = vunpack.c.l.s4 1983009808
    %v1499 = vunpack.c.0.s8 %v1498
    %v1500 = vlaneseq
    %v1501 = vshrl.u32 %v1500, 7
    %v1502 = vsub.s32 %v1499, %v1501
    %v1503 = vrot.slane %v1495, %v1502
    %v1505 = vunpack.c.l.s4 1983009808
    %v1506 = vunpack.c.0.s8 %v1505
    %v1507 = vlaneseq
    %v1508 = vshrl.u32 %v1507, 7
    %v1509 = vsub.s32 %v1506, %v1508
    %v1510 = vrot.slane %v1496, %v1509
    %v1511 = vcombine.high %v1503, %v1503
    %v1512 = vcombine.high %v1510, %v1510
    %v1513 = vcombine.low %v1489, %v1490
    %v1514 = vcombine.high %v1489, %v1490
    %v1516 = vunpack.c.l.s4 1983009808
    %v1517 = vunpack.c.0.s8 %v1516
    %v1518 = vlaneseq
    %v1519 = vshrl.u32 %v1518, 7
    %v1520 = vsub.s32 %v1517, %v1519
    %v1521 = vrot.slane %v1513, %v1520
    %v1523 = vunpack.c.l.s4 1983009808
    %v1524 = vunpack.c.0.s8 %v1523
    %v1525 = vlaneseq
    %v1526 = vshrl.u32 %v1525, 7
    %v1527 = vsub.s32 %v1524, %v1526
    %v1528 = vrot.slane %v1514, %v1527
    %v1529 = vcombine.high %v1521, %v1521
    %v1530 = vcombine.high %v1528, %v1528
    %1539 = vst [vmem:[#allocation2] sm:$0xf] %v1503
    %1540 = vst [vmem:[#allocation2 + $0x4] sm:$0xf] %v1511
    %1541 = vst [vmem:[#allocation2 + $0x8] sm:$0xf] %v1510
    %1542 = vst [vmem:[#allocation2 + $0xc] sm:$0xf] %v1512
    %1543 = vst [vmem:[#allocation2 + $0x10] sm:$0xf] %v1521
    %1544 = vst [vmem:[#allocation2 + $0x14] sm:$0xf] %v1529
    %1545 = vst [vmem:[#allocation2 + $0x18] sm:$0xf] %v1528
    %1546 = vst [vmem:[#allocation2 + $0x1c] sm:$0xf] %v1530
    %v1547 = vld [vmem:[#allocation11] sm:$0xff]
    %v1548 = vld [vmem:[#allocation11 + $0x8] sm:$0xff]
    %v1549 = vld [vmem:[#allocation11 + $0x10] sm:$0xff]
    %v1550 = vld [vmem:[#allocation11 + $0x18] sm:$0xff]
    %v1551 = vld [vmem:[#allocation11 + $0x20] sm:$0xff]
    %v1552 = vld [vmem:[#allocation11 + $0x28] sm:$0xff]
    %v1553 = vld [vmem:[#allocation11 + $0x30] sm:$0xff]
    %v1554 = vld [vmem:[#allocation11 + $0x38] sm:$0xff]
    %v1555 = vld [vmem:[#allocation2] sm:$0xf]
    %v1556 = vld [vmem:[%s307] sm:$0xf]
    %v1559 = vunpack.c.l.s4 1983009808
    %v1560 = vunpack.c.0.s8 %v1559
    %v1561 = vlaneseq
    %v1562 = vshrl.u32 %v1561, 7
    %v1563 = vsub.s32 %v1560, %v1562
    %v1564 = vrot.slane %v1555, %v1563
    %v1565 = vcombine.high %v1564, %v1564
    %v1570 = vunpack.c.l.s4 1983009808
    %v1571 = vunpack.c.0.s8 %v1570
    %v1572 = vlaneseq
    %v1573 = vshrl.u32 %v1572, 7
    %v1574 = vsub.s32 %v1571, %v1573
    %v1575 = vrot.slane %v1556, %v1574
    %v1576 = vcombine.high %v1575, %v1575
    %v1579 = vsel %vm311, %v1564, %v1575
    %v1580 = vsel %vm312, %v1565, %v1576
    %v1589 = vunpack.c.l.b16 %v1547
    %v1590 = vunpack.c.h.b16 %v1547
    %v1591 = vunpack.c.l.b16 %v1548
    %v1592 = vunpack.c.h.b16 %v1548
    %v1593 = vunpack.c.l.b16 %v1549
    %v1594 = vunpack.c.h.b16 %v1549
    %v1595 = vunpack.c.l.b16 %v1550
    %v1596 = vunpack.c.h.b16 %v1550
    %v1597 = vunpack.c.l.b16 %v1551
    %v1598 = vunpack.c.h.b16 %v1551
    %v1599 = vunpack.c.l.b16 %v1552
    %v1600 = vunpack.c.h.b16 %v1552
    %v1601 = vunpack.c.l.b16 %v1553
    %v1602 = vunpack.c.h.b16 %v1553
    %v1603 = vunpack.c.l.b16 %v1554
    %v1604 = vunpack.c.h.b16 %v1554
    %v1605 = vpack.c.b16 %v1591, %v1589
    %v1606 = vpack.c.b16 %v1592, %v1590
    %v1607 = vpack.c.b16 %v1595, %v1593
    %v1608 = vpack.c.b16 %v1596, %v1594
    %v1609 = vpack.c.b16 %v1599, %v1597
    %v1610 = vpack.c.b16 %v1600, %v1598
    %v1611 = vpack.c.b16 %v1603, %v1601
    %v1612 = vpack.c.b16 %v1604, %v1602
    %1621 = vmatprep.subr.bf16.mxu0 0
    %1622 = vmatpush1.bf16.msra.mxu0 0
    %1623 = vmatprep.subr.bf16.mxu0 0
    %1624 = vmatpush1.bf16.msra.mxu0 0
    %1625 = vmatprep.subr.bf16.mxu0 0
    %1626 = vmatpush1.bf16.msra.mxu0 0
    %1627 = vmatprep.subr.bf16.mxu0 0
    %1628 = vmatpush1.bf16.msra.mxu0 0
    %1629 = vmatprep.subr.bf16.mxu0 %v1612
    %1630 = vmatpush1.bf16.msra.mxu0 %v1611
    %1631 = vmatprep.subr.bf16.mxu0 %v1610
    %1632 = vmatpush1.bf16.msra.mxu0 %v1609
    %1633 = vmatprep.subr.bf16.mxu0 %v1608
    %1634 = vmatpush1.bf16.msra.mxu0 %v1607
    %1635 = vmatprep.subr.bf16.mxu0 %v1606
    %1636 = vmatpush1.bf16.msra.mxu0 %v1605
    %1637 = vmatprep.subr.bf16.mxu0 0
    %1638 = vmatpush2.bf16.msra.mxu0 0
    %1639 = vmatprep.subr.bf16.mxu0 0
    %1640 = vmatpush2.bf16.msra.mxu0 0
    %1641 = vmatprep.subr.bf16.mxu0 0
    %1642 = vmatpush2.bf16.msra.mxu0 0
    %1643 = vmatprep.subr.bf16.mxu0 0
    %1644 = vmatpush2.bf16.msra.mxu0 0
    %1645 = vmatprep.subr.bf16.mxu0 0
    %1646 = vmatpush2.bf16.msra.mxu0 0
    %1647 = vmatprep.subr.bf16.mxu0 0
    %1648 = vmatpush2.bf16.msra.mxu0 0
    %1649 = vmatprep.subr.bf16.mxu0 0
    %1650 = vmatpush2.bf16.msra.mxu0 0
    %1651 = vmatprep.subr.bf16.mxu0 0
    %1652 = vmatpush2.bf16.msra.mxu0 0
    %1653 = vmatprep.mubr.bf16.mxu0 0
    %1654 = vmatmul.mubr.bf16.gmra.mxu0 %v379
    %v1655 = vpop.f32.mrf.mxu0
    %v1656 = vadd.f32 %v1579, %v1655
    %v1657 = vpop.f32.mrf.mxu0
    %v1658 = vadd.f32 %v1580, %v1657
    %v1659 = vpop.f32.mrf.mxu0
    %v1660 = vpop.f32.mrf.mxu0
    %1661 = vdwg.mxu0
    %v1662 = vxor.u32 %v1656, 2147483648
    %v1663 = vxor.u32 %v1658, 2147483648
    %v1664 = vmul.f32 %v1662, 1.442695
    %v1665 = vpow.pop %v1664
    %v1666 = vmul.f32 %v1663, 1.442695
    %v1667 = vpow.pop %v1666
    %v1668 = vadd.f32 %v1665, 1.0
    %v1669 = vadd.f32 %v1667, 1.0
    %v1670 = vrcp.pop %v1668
    %v1671 = vmul.f32 1.0, %v1670
    %v1672 = vrcp.pop %v1669
    %v1673 = vmul.f32 1.0, %v1672
    %v1674 = vtanh.pop %v1658
    %v1675 = vmul.f32 %v1671, 0.0
    %1677 = vrot.lane.b32.xlu0 %v1674, 64
    %v1678 = vpop.permute.xlu0 %1677
    %v1680 = vmul.f32 %v1671, %v1678
    %1682 = vrot.lane.b32.xlu0 %v1680, 64
    %v1683 = vpop.permute.xlu0 %1682
    %v1685 = vadd.f32 %v1675, %v1683
    %v1686 = vtanh.pop %v1685
    %1688 = vrot.lane.b32.xlu0 %v1686, 64
    %v1689 = vpop.permute.xlu0 %1688
    %v1691 = vmul.f32 %v1673, %v1689
    %v1692 = vpack.c.bf16 %v1691, %v1691
    %v1693 = vld [vmem:[%s461] sm:$0xf]
    %v1694 = vld [vmem:[%s463] sm:$0xf]
    %v1697 = vunpack.c.l.s4 1983009808
    %v1698 = vunpack.c.0.s8 %v1697
    %v1699 = vlaneseq
    %v1700 = vshrl.u32 %v1699, 7
    %v1701 = vsub.s32 %v1698, %v1700
    %v1702 = vrot.slane %v1693, %v1701
    %v1703 = vcombine.high %v1702, %v1702
    %v1708 = vunpack.c.l.s4 1983009808
    %v1709 = vunpack.c.0.s8 %v1708
    %v1710 = vlaneseq
    %v1711 = vshrl.u32 %v1710, 7
    %v1712 = vsub.s32 %v1709, %v1711
    %v1713 = vrot.slane %v1694, %v1712
    %v1714 = vcombine.high %v1713, %v1713
    %v1717 = vsel %vm311, %v1702, %v1713
    %v1718 = vsel %vm312, %v1703, %v1714
    %v1720 = vsel %vm377, %v1692, 0
    %1722 = vmatprep.subr.bf16.mxu0 0
    %1723 = vmatpush1.bf16.msra.mxu0 0
    %1724 = vmatprep.subr.bf16.mxu0 0
    %1725 = vmatpush1.bf16.msra.mxu0 0
    %1726 = vmatprep.subr.bf16.mxu0 0
    %1727 = vmatpush1.bf16.msra.mxu0 0
    %1728 = vmatprep.subr.bf16.mxu0 0
    %1729 = vmatpush1.bf16.msra.mxu0 0
    %1730 = vmatprep.subr.bf16.mxu0 %v1612
    %1731 = vmatpush1.bf16.msra.mxu0 %v1611
    %1732 = vmatprep.subr.bf16.mxu0 %v1610
    %1733 = vmatpush1.bf16.msra.mxu0 %v1609
    %1734 = vmatprep.subr.bf16.mxu0 %v1608
    %1735 = vmatpush1.bf16.msra.mxu0 %v1607
    %1736 = vmatprep.subr.bf16.mxu0 %v1606
    %1737 = vmatpush1.bf16.msra.mxu0 %v1605
    %1738 = vmatprep.subr.bf16.mxu0 0
    %1739 = vmatpush2.bf16.msra.mxu0 0
    %1740 = vmatprep.subr.bf16.mxu0 0
    %1741 = vmatpush2.bf16.msra.mxu0 0
    %1742 = vmatprep.subr.bf16.mxu0 0
    %1743 = vmatpush2.bf16.msra.mxu0 0
    %1744 = vmatprep.subr.bf16.mxu0 0
    %1745 = vmatpush2.bf16.msra.mxu0 0
    %1746 = vmatprep.subr.bf16.mxu0 0
    %1747 = vmatpush2.bf16.msra.mxu0 0
    %1748 = vmatprep.subr.bf16.mxu0 0
    %1749 = vmatpush2.bf16.msra.mxu0 0
    %1750 = vmatprep.subr.bf16.mxu0 0
    %1751 = vmatpush2.bf16.msra.mxu0 0
    %1752 = vmatprep.subr.bf16.mxu0 0
    %1753 = vmatpush2.bf16.msra.mxu0 0
    %1754 = vmatprep.mubr.bf16.mxu0 0
    %1755 = vmatmul.mubr.bf16.gmra.mxu0 %v1720
    %v1756 = vpop.f32.mrf.mxu0
    %v1757 = vadd.f32 %v1717, %v1756
    %v1758 = vpop.f32.mrf.mxu0
    %v1759 = vadd.f32 %v1718, %v1758
    %v1760 = vpop.f32.mrf.mxu0
    %v1761 = vpop.f32.mrf.mxu0
    %1762 = vdwg.mxu0
    %v1763 = vxor.u32 %v1757, 2147483648
    %v1764 = vxor.u32 %v1759, 2147483648
    %v1765 = vmul.f32 %v1763, 1.442695
    %v1766 = vpow.pop %v1765
    %v1767 = vmul.f32 %v1764, 1.442695
    %v1768 = vpow.pop %v1767
    %v1769 = vadd.f32 %v1766, 1.0
    %v1770 = vadd.f32 %v1768, 1.0
    %v1771 = vrcp.pop %v1769
    %v1772 = vmul.f32 1.0, %v1771
    %v1773 = vrcp.pop %v1770
    %v1774 = vmul.f32 1.0, %v1773
    %v1775 = vtanh.pop %v1759
    %v1776 = vmul.f32 %v1772, %v1685
    %1778 = vrot.lane.b32.xlu0 %v1775, 64
    %v1779 = vpop.permute.xlu0 %1778
    %v1781 = vmul.f32 %v1772, %v1779
    %1783 = vrot.lane.b32.xlu0 %v1781, 64
    %v1784 = vpop.permute.xlu0 %1783
    %v1786 = vadd.f32 %v1776, %v1784
    %v1787 = vtanh.pop %v1786
    %1789 = vrot.lane.b32.xlu0 %v1787, 64
    %v1790 = vpop.permute.xlu0 %1789
    %v1792 = vmul.f32 %v1774, %v1790
    %v1793 = vpack.c.bf16 %v1792, %v1792
    %v1794 = vld [vmem:[%s572] sm:$0xf]
    %v1795 = vld [vmem:[%s574] sm:$0xf]
    %v1798 = vunpack.c.l.s4 1983009808
    %v1799 = vunpack.c.0.s8 %v1798
    %v1800 = vlaneseq
    %v1801 = vshrl.u32 %v1800, 7
    %v1802 = vsub.s32 %v1799, %v1801
    %v1803 = vrot.slane %v1794, %v1802
    %v1804 = vcombine.high %v1803, %v1803
    %v1809 = vunpack.c.l.s4 1983009808
    %v1810 = vunpack.c.0.s8 %v1809
    %v1811 = vlaneseq
    %v1812 = vshrl.u32 %v1811, 7
    %v1813 = vsub.s32 %v1810, %v1812
    %v1814 = vrot.slane %v1795, %v1813
    %v1815 = vcombine.high %v1814, %v1814
    %v1818 = vsel %vm311, %v1803, %v1814
    %v1819 = vsel %vm312, %v1804, %v1815
    %v1821 = vsel %vm377, %v1793, 0
    %1823 = vmatprep.subr.bf16.mxu0 0
    %1824 = vmatpush1.bf16.msra.mxu0 0
    %1825 = vmatprep.subr.bf16.mxu0 0
    %1826 = vmatpush1.bf16.msra.mxu0 0
    %1827 = vmatprep.subr.bf16.mxu0 0
    %1828 = vmatpush1.bf16.msra.mxu0 0
    %1829 = vmatprep.subr.bf16.mxu0 0
    %1830 = vmatpush1.bf16.msra.mxu0 0
    %1831 = vmatprep.subr.bf16.mxu0 %v1612
    %1832 = vmatpush1.bf16.msra.mxu0 %v1611
    %1833 = vmatprep.subr.bf16.mxu0 %v1610
    %1834 = vmatpush1.bf16.msra.mxu0 %v1609
    %1835 = vmatprep.subr.bf16.mxu0 %v1608
    %1836 = vmatpush1.bf16.msra.mxu0 %v1607
    %1837 = vmatprep.subr.bf16.mxu0 %v1606
    %1838 = vmatpush1.bf16.msra.mxu0 %v1605
    %1839 = vmatprep.subr.bf16.mxu0 0
    %1840 = vmatpush2.bf16.msra.mxu0 0
    %1841 = vmatprep.subr.bf16.mxu0 0
    %1842 = vmatpush2.bf16.msra.mxu0 0
    %1843 = vmatprep.subr.bf16.mxu0 0
    %1844 = vmatpush2.bf16.msra.mxu0 0
    %1845 = vmatprep.subr.bf16.mxu0 0
    %1846 = vmatpush2.bf16.msra.mxu0 0
    %1847 = vmatprep.subr.bf16.mxu0 0
    %1848 = vmatpush2.bf16.msra.mxu0 0
    %1849 = vmatprep.subr.bf16.mxu0 0
    %1850 = vmatpush2.bf16.msra.mxu0 0
    %1851 = vmatprep.subr.bf16.mxu0 0
    %1852 = vmatpush2.bf16.msra.mxu0 0
    %1853 = vmatprep.subr.bf16.mxu0 0
    %1854 = vmatpush2.bf16.msra.mxu0 0
    %1855 = vmatprep.mubr.bf16.mxu0 0
    %1856 = vmatmul.mubr.bf16.gmra.mxu0 %v1821
    %v1857 = vpop.f32.mrf.mxu0
    %v1858 = vadd.f32 %v1818, %v1857
    %v1859 = vpop.f32.mrf.mxu0
    %v1860 = vadd.f32 %v1819, %v1859
    %v1861 = vpop.f32.mrf.mxu0
    %v1862 = vpop.f32.mrf.mxu0
    %1863 = vdwg.mxu0
    %v1864 = vxor.u32 %v1858, 2147483648
    %v1865 = vxor.u32 %v1860, 2147483648
    %v1866 = vmul.f32 %v1864, 1.442695
    %v1867 = vpow.pop %v1866
    %v1868 = vmul.f32 %v1865, 1.442695
    %v1869 = vpow.pop %v1868
    %v1870 = vadd.f32 %v1867, 1.0
    %v1871 = vadd.f32 %v1869, 1.0
    %v1872 = vrcp.pop %v1870
    %v1873 = vmul.f32 1.0, %v1872
    %v1874 = vrcp.pop %v1871
    %v1875 = vmul.f32 1.0, %v1874
    %v1876 = vtanh.pop %v1860
    %v1877 = vmul.f32 %v1873, %v1786
    %1879 = vrot.lane.b32.xlu0 %v1876, 64
    %v1880 = vpop.permute.xlu0 %1879
    %v1882 = vmul.f32 %v1873, %v1880
    %1884 = vrot.lane.b32.xlu0 %v1882, 64
    %v1885 = vpop.permute.xlu0 %1884
    %v1887 = vadd.f32 %v1877, %v1885
    %v1888 = vtanh.pop %v1887
    %1890 = vrot.lane.b32.xlu0 %v1888, 64
    %v1891 = vpop.permute.xlu0 %1890
    %v1893 = vmul.f32 %v1875, %v1891
    %v1894 = vpack.c.bf16 %v1893, %v1893
    %v1895 = vld [vmem:[%s683] sm:$0xf]
    %v1896 = vld [vmem:[%s685] sm:$0xf]
    %v1899 = vunpack.c.l.s4 1983009808
    %v1900 = vunpack.c.0.s8 %v1899
    %v1901 = vlaneseq
    %v1902 = vshrl.u32 %v1901, 7
    %v1903 = vsub.s32 %v1900, %v1902
    %v1904 = vrot.slane %v1895, %v1903
    %v1905 = vcombine.high %v1904, %v1904
    %v1910 = vunpack.c.l.s4 1983009808
    %v1911 = vunpack.c.0.s8 %v1910
    %v1912 = vlaneseq
    %v1913 = vshrl.u32 %v1912, 7
    %v1914 = vsub.s32 %v1911, %v1913
    %v1915 = vrot.slane %v1896, %v1914
    %v1916 = vcombine.high %v1915, %v1915
    %v1919 = vsel %vm311, %v1904, %v1915
    %v1920 = vsel %vm312, %v1905, %v1916
    %v1922 = vsel %vm377, %v1894, 0
    %1924 = vmatprep.subr.bf16.mxu0 0
    %1925 = vmatpush1.bf16.msra.mxu0 0
    %1926 = vmatprep.subr.bf16.mxu0 0
    %1927 = vmatpush1.bf16.msra.mxu0 0
    %1928 = vmatprep.subr.bf16.mxu0 0
    %1929 = vmatpush1.bf16.msra.mxu0 0
    %1930 = vmatprep.subr.bf16.mxu0 0
    %1931 = vmatpush1.bf16.msra.mxu0 0
    %1932 = vmatprep.subr.bf16.mxu0 %v1612
    %1933 = vmatpush1.bf16.msra.mxu0 %v1611
    %1934 = vmatprep.subr.bf16.mxu0 %v1610
    %1935 = vmatpush1.bf16.msra.mxu0 %v1609
    %1936 = vmatprep.subr.bf16.mxu0 %v1608
    %1937 = vmatpush1.bf16.msra.mxu0 %v1607
    %1938 = vmatprep.subr.bf16.mxu0 %v1606
    %1939 = vmatpush1.bf16.msra.mxu0 %v1605
    %1940 = vmatprep.subr.bf16.mxu0 0
    %1941 = vmatpush2.bf16.msra.mxu0 0
    %1942 = vmatprep.subr.bf16.mxu0 0
    %1943 = vmatpush2.bf16.msra.mxu0 0
    %1944 = vmatprep.subr.bf16.mxu0 0
    %1945 = vmatpush2.bf16.msra.mxu0 0
    %1946 = vmatprep.subr.bf16.mxu0 0
    %1947 = vmatpush2.bf16.msra.mxu0 0
    %1948 = vmatprep.subr.bf16.mxu0 0
    %1949 = vmatpush2.bf16.msra.mxu0 0
    %1950 = vmatprep.subr.bf16.mxu0 0
    %1951 = vmatpush2.bf16.msra.mxu0 0
    %1952 = vmatprep.subr.bf16.mxu0 0
    %1953 = vmatpush2.bf16.msra.mxu0 0
    %1954 = vmatprep.subr.bf16.mxu0 0
    %1955 = vmatpush2.bf16.msra.mxu0 0
    %1956 = vmatprep.mubr.bf16.mxu0 0
    %1957 = vmatmul.mubr.bf16.gmra.mxu0 %v1922
    %v1958 = vpop.f32.mrf.mxu0
    %v1959 = vadd.f32 %v1919, %v1958
    %v1960 = vpop.f32.mrf.mxu0
    %v1961 = vadd.f32 %v1920, %v1960
    %v1962 = vpop.f32.mrf.mxu0
    %v1963 = vpop.f32.mrf.mxu0
    %1964 = vdwg.mxu0
    %v1965 = vxor.u32 %v1959, 2147483648
    %v1966 = vxor.u32 %v1961, 2147483648
    %v1967 = vmul.f32 %v1965, 1.442695
    %v1968 = vpow.pop %v1967
    %v1969 = vmul.f32 %v1966, 1.442695
    %v1970 = vpow.pop %v1969
    %v1971 = vadd.f32 %v1968, 1.0
    %v1972 = vadd.f32 %v1970, 1.0
    %v1973 = vrcp.pop %v1971
    %v1974 = vmul.f32 1.0, %v1973
    %v1975 = vrcp.pop %v1972
    %v1976 = vmul.f32 1.0, %v1975
    %v1977 = vtanh.pop %v1961
    %v1978 = vmul.f32 %v1974, %v1887
    %1980 = vrot.lane.b32.xlu0 %v1977, 64
    %v1981 = vpop.permute.xlu0 %1980
    %v1983 = vmul.f32 %v1974, %v1981
    %1985 = vrot.lane.b32.xlu0 %v1983, 64
    %v1986 = vpop.permute.xlu0 %1985
    %v1988 = vadd.f32 %v1978, %v1986
    %v1989 = vtanh.pop %v1988
    %1991 = vrot.lane.b32.xlu0 %v1989, 64
    %v1992 = vpop.permute.xlu0 %1991
    %v1994 = vmul.f32 %v1976, %v1992
    %v1995 = vpack.c.bf16 %v1994, %v1994
    %v1996 = vsel %vm311, %v1915, %v1904
    %v1997 = vsel %vm312, %v1916, %v1905
    %v1999 = vsel %vm377, %v1995, 0
    %2001 = vmatprep.subr.bf16.mxu0 0
    %2002 = vmatpush1.bf16.msra.mxu0 0
    %2003 = vmatprep.subr.bf16.mxu0 0
    %2004 = vmatpush1.bf16.msra.mxu0 0
    %2005 = vmatprep.subr.bf16.mxu0 0
    %2006 = vmatpush1.bf16.msra.mxu0 0
    %2007 = vmatprep.subr.bf16.mxu0 0
    %2008 = vmatpush1.bf16.msra.mxu0 0
    %2009 = vmatprep.subr.bf16.mxu0 %v1612
    %2010 = vmatpush1.bf16.msra.mxu0 %v1611
    %2011 = vmatprep.subr.bf16.mxu0 %v1610
    %2012 = vmatpush1.bf16.msra.mxu0 %v1609
    %2013 = vmatprep.subr.bf16.mxu0 %v1608
    %2014 = vmatpush1.bf16.msra.mxu0 %v1607
    %2015 = vmatprep.subr.bf16.mxu0 %v1606
    %2016 = vmatpush1.bf16.msra.mxu0 %v1605
    %2017 = vmatprep.subr.bf16.mxu0 0
    %2018 = vmatpush2.bf16.msra.mxu0 0
    %2019 = vmatprep.subr.bf16.mxu0 0
    %2020 = vmatpush2.bf16.msra.mxu0 0
    %2021 = vmatprep.subr.bf16.mxu0 0
    %2022 = vmatpush2.bf16.msra.mxu0 0
    %2023 = vmatprep.subr.bf16.mxu0 0
    %2024 = vmatpush2.bf16.msra.mxu0 0
    %2025 = vmatprep.subr.bf16.mxu0 0
    %2026 = vmatpush2.bf16.msra.mxu0 0
    %2027 = vmatprep.subr.bf16.mxu0 0
    %2028 = vmatpush2.bf16.msra.mxu0 0
    %2029 = vmatprep.subr.bf16.mxu0 0
    %2030 = vmatpush2.bf16.msra.mxu0 0
    %2031 = vmatprep.subr.bf16.mxu0 0
    %2032 = vmatpush2.bf16.msra.mxu0 0
    %2033 = vmatprep.mubr.bf16.mxu0 0
    %2034 = vmatmul.mubr.bf16.gmra.mxu0 %v1999
    %v2035 = vpop.f32.mrf.mxu0
    %v2036 = vadd.f32 %v1996, %v2035
    %v2037 = vpop.f32.mrf.mxu0
    %v2038 = vadd.f32 %v1997, %v2037
    %v2039 = vpop.f32.mrf.mxu0
    %v2040 = vpop.f32.mrf.mxu0
    %2041 = vdwg.mxu0
    %v2042 = vxor.u32 %v2036, 2147483648
    %v2043 = vxor.u32 %v2038, 2147483648
    %v2044 = vmul.f32 %v2042, 1.442695
    %v2045 = vpow.pop %v2044
    %v2046 = vmul.f32 %v2043, 1.442695
    %v2047 = vpow.pop %v2046
    %v2048 = vadd.f32 %v2045, 1.0
    %v2049 = vadd.f32 %v2047, 1.0
    %v2050 = vrcp.pop %v2048
    %v2051 = vmul.f32 1.0, %v2050
    %v2052 = vrcp.pop %v2049
    %v2053 = vmul.f32 1.0, %v2052
    %v2054 = vtanh.pop %v2038
    %v2055 = vmul.f32 %v2051, %v1988
    %2057 = vrot.lane.b32.xlu0 %v2054, 64
    %v2058 = vpop.permute.xlu0 %2057
    %v2060 = vmul.f32 %v2051, %v2058
    %2062 = vrot.lane.b32.xlu0 %v2060, 64
    %v2063 = vpop.permute.xlu0 %2062
    %v2065 = vadd.f32 %v2055, %v2063
    %v2066 = vtanh.pop %v2065
    %2068 = vrot.lane.b32.xlu0 %v2066, 64
    %v2069 = vpop.permute.xlu0 %2068
    %v2071 = vmul.f32 %v2053, %v2069
    %v2072 = vpack.c.bf16 %v2071, %v2071
    %v2073 = vsel %vm311, %v1814, %v1803
    %v2074 = vsel %vm312, %v1815, %v1804
    %v2076 = vsel %vm377, %v2072, 0
    %2078 = vmatprep.subr.bf16.mxu0 0
    %2079 = vmatpush1.bf16.msra.mxu0 0
    %2080 = vmatprep.subr.bf16.mxu0 0
    %2081 = vmatpush1.bf16.msra.mxu0 0
    %2082 = vmatprep.subr.bf16.mxu0 0
    %2083 = vmatpush1.bf16.msra.mxu0 0
    %2084 = vmatprep.subr.bf16.mxu0 0
    %2085 = vmatpush1.bf16.msra.mxu0 0
    %2086 = vmatprep.subr.bf16.mxu0 %v1612
    %2087 = vmatpush1.bf16.msra.mxu0 %v1611
    %2088 = vmatprep.subr.bf16.mxu0 %v1610
    %2089 = vmatpush1.bf16.msra.mxu0 %v1609
    %2090 = vmatprep.subr.bf16.mxu0 %v1608
    %2091 = vmatpush1.bf16.msra.mxu0 %v1607
    %2092 = vmatprep.subr.bf16.mxu0 %v1606
    %2093 = vmatpush1.bf16.msra.mxu0 %v1605
    %2094 = vmatprep.subr.bf16.mxu0 0
    %2095 = vmatpush2.bf16.msra.mxu0 0
    %2096 = vmatprep.subr.bf16.mxu0 0
    %2097 = vmatpush2.bf16.msra.mxu0 0
    %2098 = vmatprep.subr.bf16.mxu0 0
    %2099 = vmatpush2.bf16.msra.mxu0 0
    %2100 = vmatprep.subr.bf16.mxu0 0
    %2101 = vmatpush2.bf16.msra.mxu0 0
    %2102 = vmatprep.subr.bf16.mxu0 0
    %2103 = vmatpush2.bf16.msra.mxu0 0
    %2104 = vmatprep.subr.bf16.mxu0 0
    %2105 = vmatpush2.bf16.msra.mxu0 0
    %2106 = vmatprep.subr.bf16.mxu0 0
    %2107 = vmatpush2.bf16.msra.mxu0 0
    %2108 = vmatprep.subr.bf16.mxu0 0
    %2109 = vmatpush2.bf16.msra.mxu0 0
    %2110 = vmatprep.mubr.bf16.mxu0 0
    %2111 = vmatmul.mubr.bf16.gmra.mxu0 %v2076
    %v2112 = vpop.f32.mrf.mxu0
    %v2113 = vadd.f32 %v2073, %v2112
    %v2114 = vpop.f32.mrf.mxu0
    %v2115 = vadd.f32 %v2074, %v2114
    %v2116 = vpop.f32.mrf.mxu0
    %v2117 = vpop.f32.mrf.mxu0
    %2118 = vdwg.mxu0
    %v2119 = vxor.u32 %v2113, 2147483648
    %v2120 = vxor.u32 %v2115, 2147483648
    %v2121 = vmul.f32 %v2119, 1.442695
    %v2122 = vpow.pop %v2121
    %v2123 = vmul.f32 %v2120, 1.442695
    %v2124 = vpow.pop %v2123
    %v2125 = vadd.f32 %v2122, 1.0
    %v2126 = vadd.f32 %v2124, 1.0
    %v2127 = vrcp.pop %v2125
    %v2128 = vmul.f32 1.0, %v2127
    %v2129 = vrcp.pop %v2126
    %v2130 = vmul.f32 1.0, %v2129
    %v2131 = vtanh.pop %v2115
    %v2132 = vmul.f32 %v2128, %v2065
    %2134 = vrot.lane.b32.xlu0 %v2131, 64
    %v2135 = vpop.permute.xlu0 %2134
    %v2137 = vmul.f32 %v2128, %v2135
    %2139 = vrot.lane.b32.xlu0 %v2137, 64
    %v2140 = vpop.permute.xlu0 %2139
    %v2142 = vadd.f32 %v2132, %v2140
    %v2143 = vtanh.pop %v2142
    %2145 = vrot.lane.b32.xlu0 %v2143, 64
    %v2146 = vpop.permute.xlu0 %2145
    %v2148 = vmul.f32 %v2130, %v2146
    %v2149 = vpack.c.bf16 %v2148, %v2148
    %v2150 = vsel %vm311, %v1713, %v1702
    %v2151 = vsel %vm312, %v1714, %v1703
    %v2153 = vsel %vm377, %v2149, 0
    %2155 = vmatprep.subr.bf16.mxu0 0
    %2156 = vmatpush1.bf16.msra.mxu0 0
    %2157 = vmatprep.subr.bf16.mxu0 0
    %2158 = vmatpush1.bf16.msra.mxu0 0
    %2159 = vmatprep.subr.bf16.mxu0 0
    %2160 = vmatpush1.bf16.msra.mxu0 0
    %2161 = vmatprep.subr.bf16.mxu0 0
    %2162 = vmatpush1.bf16.msra.mxu0 0
    %2163 = vmatprep.subr.bf16.mxu0 %v1612
    %2164 = vmatpush1.bf16.msra.mxu0 %v1611
    %2165 = vmatprep.subr.bf16.mxu0 %v1610
    %2166 = vmatpush1.bf16.msra.mxu0 %v1609
    %2167 = vmatprep.subr.bf16.mxu0 %v1608
    %2168 = vmatpush1.bf16.msra.mxu0 %v1607
    %2169 = vmatprep.subr.bf16.mxu0 %v1606
    %2170 = vmatpush1.bf16.msra.mxu0 %v1605
    %2171 = vmatprep.subr.bf16.mxu0 0
    %2172 = vmatpush2.bf16.msra.mxu0 0
    %2173 = vmatprep.subr.bf16.mxu0 0
    %2174 = vmatpush2.bf16.msra.mxu0 0
    %2175 = vmatprep.subr.bf16.mxu0 0
    %2176 = vmatpush2.bf16.msra.mxu0 0
    %2177 = vmatprep.subr.bf16.mxu0 0
    %2178 = vmatpush2.bf16.msra.mxu0 0
    %2179 = vmatprep.subr.bf16.mxu0 0
    %2180 = vmatpush2.bf16.msra.mxu0 0
    %2181 = vmatprep.subr.bf16.mxu0 0
    %2182 = vmatpush2.bf16.msra.mxu0 0
    %2183 = vmatprep.subr.bf16.mxu0 0
    %2184 = vmatpush2.bf16.msra.mxu0 0
    %2185 = vmatprep.subr.bf16.mxu0 0
    %2186 = vmatpush2.bf16.msra.mxu0 0
    %2187 = vmatprep.mubr.bf16.mxu0 0
    %2188 = vmatmul.mubr.bf16.gmra.mxu0 %v2153
    %v2189 = vpop.f32.mrf.mxu0
    %v2190 = vadd.f32 %v2150, %v2189
    %v2191 = vpop.f32.mrf.mxu0
    %v2192 = vadd.f32 %v2151, %v2191
    %v2193 = vpop.f32.mrf.mxu0
    %v2194 = vpop.f32.mrf.mxu0
    %2195 = vdwg.mxu0
    %v2196 = vxor.u32 %v2190, 2147483648
    %v2197 = vxor.u32 %v2192, 2147483648
    %v2198 = vmul.f32 %v2196, 1.442695
    %v2199 = vpow.pop %v2198
    %v2200 = vmul.f32 %v2197, 1.442695
    %v2201 = vpow.pop %v2200
    %v2202 = vadd.f32 %v2199, 1.0
    %v2203 = vadd.f32 %v2201, 1.0
    %v2204 = vrcp.pop %v2202
    %v2205 = vmul.f32 1.0, %v2204
    %v2206 = vrcp.pop %v2203
    %v2207 = vmul.f32 1.0, %v2206
    %v2208 = vtanh.pop %v2192
    %v2209 = vmul.f32 %v2205, %v2142
    %2211 = vrot.lane.b32.xlu0 %v2208, 64
    %v2212 = vpop.permute.xlu0 %2211
    %v2214 = vmul.f32 %v2205, %v2212
    %2216 = vrot.lane.b32.xlu0 %v2214, 64
    %v2217 = vpop.permute.xlu0 %2216
    %v2219 = vadd.f32 %v2209, %v2217
    %v2220 = vtanh.pop %v2219
    %2222 = vrot.lane.b32.xlu0 %v2220, 64
    %v2223 = vpop.permute.xlu0 %2222
    %v2225 = vmul.f32 %v2207, %v2223
    %v2226 = vpack.c.bf16 %v2225, %v2225
    %v2227 = vsel %vm311, %v1575, %v1564
    %v2228 = vsel %vm312, %v1576, %v1565
    %v2230 = vsel %vm377, %v2226, 0
    %2232 = vmatprep.subr.bf16.mxu0 0
    %2233 = vmatpush1.bf16.msra.mxu0 0
    %2234 = vmatprep.subr.bf16.mxu0 0
    %2235 = vmatpush1.bf16.msra.mxu0 0
    %2236 = vmatprep.subr.bf16.mxu0 0
    %2237 = vmatpush1.bf16.msra.mxu0 0
    %2238 = vmatprep.subr.bf16.mxu0 0
    %2239 = vmatpush1.bf16.msra.mxu0 0
    %2240 = vmatprep.subr.bf16.mxu0 %v1612
    %2241 = vmatpush1.bf16.msra.mxu0 %v1611
    %2242 = vmatprep.subr.bf16.mxu0 %v1610
    %2243 = vmatpush1.bf16.msra.mxu0 %v1609
    %2244 = vmatprep.subr.bf16.mxu0 %v1608
    %2245 = vmatpush1.bf16.msra.mxu0 %v1607
    %2246 = vmatprep.subr.bf16.mxu0 %v1606
    %2247 = vmatpush1.bf16.msra.mxu0 %v1605
    %2248 = vmatprep.subr.bf16.mxu0 0
    %2249 = vmatpush2.bf16.msra.mxu0 0
    %2250 = vmatprep.subr.bf16.mxu0 0
    %2251 = vmatpush2.bf16.msra.mxu0 0
    %2252 = vmatprep.subr.bf16.mxu0 0
    %2253 = vmatpush2.bf16.msra.mxu0 0
    %2254 = vmatprep.subr.bf16.mxu0 0
    %2255 = vmatpush2.bf16.msra.mxu0 0
    %2256 = vmatprep.subr.bf16.mxu0 0
    %2257 = vmatpush2.bf16.msra.mxu0 0
    %2258 = vmatprep.subr.bf16.mxu0 0
    %2259 = vmatpush2.bf16.msra.mxu0 0
    %2260 = vmatprep.subr.bf16.mxu0 0
    %2261 = vmatpush2.bf16.msra.mxu0 0
    %2262 = vmatprep.subr.bf16.mxu0 0
    %2263 = vmatpush2.bf16.msra.mxu0 0
    %2264 = vmatprep.mubr.bf16.mxu0 0
    %2265 = vmatmul.mubr.bf16.gmra.mxu0 %v2230
    %v2266 = vpop.f32.mrf.mxu0
    %v2267 = vadd.f32 %v2227, %v2266
    %v2268 = vpop.f32.mrf.mxu0
    %v2269 = vadd.f32 %v2228, %v2268
    %v2270 = vpop.f32.mrf.mxu0
    %v2271 = vpop.f32.mrf.mxu0
    %2272 = vdwg.mxu0
    %v2273 = vxor.u32 %v2267, 2147483648
    %v2274 = vxor.u32 %v2269, 2147483648
    %v2275 = vmul.f32 %v2273, 1.442695
    %v2276 = vpow.pop %v2275
    %v2277 = vmul.f32 %v2274, 1.442695
    %v2278 = vpow.pop %v2277
    %v2279 = vadd.f32 %v2276, 1.0
    %v2280 = vadd.f32 %v2278, 1.0
    %v2281 = vrcp.pop %v2279
    %v2282 = vmul.f32 1.0, %v2281
    %v2283 = vrcp.pop %v2280
    %v2284 = vmul.f32 1.0, %v2283
    %v2285 = vtanh.pop %v2269
    %v2286 = vmul.f32 %v2282, %v2219
    %2288 = vrot.lane.b32.xlu0 %v2285, 64
    %v2289 = vpop.permute.xlu0 %2288
    %v2291 = vmul.f32 %v2282, %v2289
    %2293 = vrot.lane.b32.xlu0 %v2291, 64
    %v2294 = vpop.permute.xlu0 %2293
    %v2296 = vadd.f32 %v2286, %v2294
    %v2297 = vtanh.pop %v2296
    %2299 = vrot.lane.b32.xlu0 %v2297, 64
    %v2300 = vpop.permute.xlu0 %2299
    %v2302 = vmul.f32 %v2284, %v2300
    %v2303 = vld [vmem:[%s7] sm:$0xff]
    %v2304 = vld [vmem:[%s7 + $0x8] sm:$0xff]
    %v2305 = vld [vmem:[%s7 + $0x10] sm:$0xff]
    %v2306 = vld [vmem:[%s7 + $0x18] sm:$0xff]
    %v2307 = vld [vmem:[%s7 + $0x20] sm:$0xff]
    %v2308 = vld [vmem:[%s7 + $0x28] sm:$0xff]
    %v2309 = vld [vmem:[%s7 + $0x30] sm:$0xff]
    %v2310 = vld [vmem:[%s7 + $0x38] sm:$0xff]
    %v2311 = vld [vmem:[%s8] sm:$0x1]
    %v2313 = vlaneseq
    %v2314 = vshrl.u32 %v2313, 7
    %v2315 = vsub.s32 0, %v2314
    %v2316 = vrot.slane %v2311, %v2315
    %v2319 = vsel %vm377, %v2302, 0
    %2321 = vmatprep.subr.mxu0 0.0
    %2322 = vmatpush1.msra.mxu0 0.0
    %2323 = vmatprep.subr.mxu0 0.0
    %2324 = vmatpush1.msra.mxu0 0.0
    %2325 = vmatprep.subr.mxu0 0.0
    %2326 = vmatpush1.msra.mxu0 0.0
    %2327 = vmatprep.subr.mxu0 0.0
    %2328 = vmatpush1.msra.mxu0 0.0
    %2329 = vmatprep.subr.mxu0 0.0
    %2330 = vmatpush1.msra.mxu0 0.0
    %2331 = vmatprep.subr.mxu0 0.0
    %2332 = vmatpush1.msra.mxu0 0.0
    %2333 = vmatprep.subr.mxu0 0.0
    %2334 = vmatpush1.msra.mxu0 0.0
    %2335 = vmatprep.subr.mxu0 0.0
    %2336 = vmatpush1.msra.mxu0 0.0
    %2337 = vmatprep.subr.mxu0 0.0
    %2338 = vmatpush1.msra.mxu0 %v2310
    %2339 = vmatprep.subr.mxu0 0.0
    %2340 = vmatpush1.msra.mxu0 %v2309
    %2341 = vmatprep.subr.mxu0 0.0
    %2342 = vmatpush1.msra.mxu0 %v2308
    %2343 = vmatprep.subr.mxu0 0.0
    %2344 = vmatpush1.msra.mxu0 %v2307
    %2345 = vmatprep.subr.mxu0 0.0
    %2346 = vmatpush1.msra.mxu0 %v2306
    %2347 = vmatprep.subr.mxu0 0.0
    %2348 = vmatpush1.msra.mxu0 %v2305
    %2349 = vmatprep.subr.mxu0 0.0
    %2350 = vmatpush1.msra.mxu0 %v2304
    %2351 = vmatprep.subr.mxu0 0.0
    %2352 = vmatpush1.msra.mxu0 %v2303
    %2353 = vmatprep.subr.mxu0 0.0
    %2354 = vmatpush2.msra.mxu0 0.0
    %2355 = vmatprep.subr.mxu0 0.0
    %2356 = vmatpush2.msra.mxu0 0.0
    %2357 = vmatprep.subr.mxu0 0.0
    %2358 = vmatpush2.msra.mxu0 0.0
    %2359 = vmatprep.subr.mxu0 0.0
    %2360 = vmatpush2.msra.mxu0 0.0
    %2361 = vmatprep.subr.mxu0 0.0
    %2362 = vmatpush2.msra.mxu0 0.0
    %2363 = vmatprep.subr.mxu0 0.0
    %2364 = vmatpush2.msra.mxu0 0.0
    %2365 = vmatprep.subr.mxu0 0.0
    %2366 = vmatpush2.msra.mxu0 0.0
    %2367 = vmatprep.subr.mxu0 0.0
    %2368 = vmatpush2.msra.mxu0 0.0
    %2369 = vmatprep.subr.mxu0 0.0
    %2370 = vmatpush2.msra.mxu0 0.0
    %2371 = vmatprep.subr.mxu0 0.0
    %2372 = vmatpush2.msra.mxu0 0.0
    %2373 = vmatprep.subr.mxu0 0.0
    %2374 = vmatpush2.msra.mxu0 0.0
    %2375 = vmatprep.subr.mxu0 0.0
    %2376 = vmatpush2.msra.mxu0 0.0
    %2377 = vmatprep.subr.mxu0 0.0
    %2378 = vmatpush2.msra.mxu0 0.0
    %2379 = vmatprep.subr.mxu0 0.0
    %2380 = vmatpush2.msra.mxu0 0.0
    %2381 = vmatprep.subr.mxu0 0.0
    %2382 = vmatpush2.msra.mxu0 0.0
    %2383 = vmatprep.subr.mxu0 0.0
    %2384 = vmatpush2.msra.mxu0 0.0
    %2385 = vmatprep.mubr.f32.mxu0 0.0
    %2386 = vmatmul.mubr.f32.gmra.mxu0 %v2319
    %v2387 = vpop.f32.mrf.mxu0
    %v2388 = vadd.f32 %v2316, %v2387
    %v2389 = vpop.f32.mrf.mxu0
    %2390 = vdwg.mxu0
    %vm2391 = vcmask 41984
    %2392 = vst.msk [vmem:[#allocation13] sm:$0x3] %vm2391, %v2388
    // Predicated region
    $region54: #{tpu_custom_call.1} parent=1 // pred_check
      _
    $region55: #{tpu_custom_call.1} parent=1 // pred_check_branch
      %2394 = sbr.rel (0) target = $region57
    $region56: #{tpu_custom_call.1} parent=1 // pred_region
      %s2396 = ssub.s32 32, 32
      %2397 = vsyncadd [#allocation7], %s2396
      %s2399 = sshll.u32 [#allocation13], 4
      %s2400 = int_to_ptr.vmem [resolvable:$true] %s2399
      %2402 = dma.vmem_to_hbm [thread:$0]  %s2400, 32, %s9, [#allocation7]
    $region57: #{tpu_custom_call.1} parent=1 // pred_fallthru
      _
    // Predicated region
    $region58: #{tpu_custom_call.1} parent=1 // pred_check
      _
    $region59: #{tpu_custom_call.1} parent=1 // pred_check_branch
      %2404 = sbr.rel (0) target = $region61
    $region60: #{tpu_custom_call.1} parent=1 // pred_region
      %2405 = dma.done [#allocation7], 32
    $region61: #{tpu_custom_call.1} parent=1 // pred_fallthru
      _
    %2406 = vsyncpa [#allocation6], 1
    %2407 = vsyncpa [#allocation9], 1
    %2408 = vsyncpa [#allocation12], 1
    %2409 = vsyncpa [#allocation7], 1

</llo_original>
